<compile_context>
chip_gen: v7x
topology: tpu7x:2x2x1
jax: 0.10.0
libtpu: 0.0.40
codegen_flags: <defaults>
</compile_context>

<pallas_src>
import functools
import math

import jax
import jax.numpy as jnp
from jax.experimental import pallas as pl
from jax.experimental.pallas import tpu as pltpu


def _round_up(n, m):
    return ((n + m - 1) // m) * m


def _layernorm(v, w, b, eps=1e-5):
    mu = jnp.mean(v, axis=-1, keepdims=True)
    var = jnp.mean((v - mu) ** 2, axis=-1, keepdims=True)
    return (v - mu) * jax.lax.rsqrt(var + eps) * w + b


def _clip_layer_kernel(x_ref, mask_ref,
                       ln1_w_ref, ln1_b_ref,
                       wqkv_ref, bqkv_ref,
                       wo_ref, bo_ref,
                       ln2_w_ref, ln2_b_ref,
                       w1_ref, b1_ref, w2_ref, b2_ref,
                       out_ref, ctx_ref, *, num_heads, dff_chunk):
    Bt, Lp, D = x_ref.shape
    H = num_heads
    Dh = D // H
    N = Bt * Lp
    Dff = w1_ref.shape[1]
    n_chunks = Dff // dff_chunk

    x = x_ref[...].astype(jnp.float32).reshape(N, D)
    # key_padding_mask: padded keys -> large negative additive bias (kept f32; the
    # -1e30 bias is only safe because the score path stays f32).
    key_bias = jnp.where(mask_ref[...] > 0.5, 0.0, -1e30)     # (Bt, 1, Lp) f32

    # ---- pre-LN + fused QKV projection (single MXU pass, output width 3D) ----
    h1 = _layernorm(x, ln1_w_ref[0], ln1_b_ref[0]).astype(jnp.bfloat16)
    qkv = jnp.dot(h1, wqkv_ref[...],
                  preferred_element_type=jnp.float32)         # (N, 3D) f32
    bqkv = bqkv_ref[0]                                        # (3D,) f32, q part pre-scaled
    # NOTE: 1/sqrt(Dh) is already folded into the packed q weight & bias.

    # ---- multi-head self-attention ----
    # Per-head bias-add + bf16 downcast happen on the slice as it is consumed.  Each
    # head's context is stored head-major into a bf16 VMEM scratch so the output
    # projection runs as ONE full-K (K = D) MXU matmul after the head loop.
    for h in range(H):                                        # static unroll over heads
        q0, k0, v0 = h * Dh, D + h * Dh, 2 * D + h * Dh
        q_h = (qkv[:, q0:q0 + Dh] + bqkv[q0:q0 + Dh]).astype(jnp.bfloat16).reshape(Bt, Lp, Dh)
        k_h = (qkv[:, k0:k0 + Dh] + bqkv[k0:k0 + Dh]).astype(jnp.bfloat16).reshape(Bt, Lp, Dh)
        v_h = (qkv[:, v0:v0 + Dh] + bqkv[v0:v0 + Dh]).astype(jnp.bfloat16).reshape(Bt, Lp, Dh)
        s = jnp.einsum('bqd,bkd->bqk', q_h, k_h,
                       preferred_element_type=jnp.float32)    # (Bt, Lp, Lp) f32
        s = s + key_bias
        s = s - jnp.max(s, axis=-1, keepdims=True)
        p = jnp.exp(s)
        p = p * pl.reciprocal(jnp.sum(p, axis=-1, keepdims=True), approx=True)
        ctx = jnp.einsum('bqk,bkd->bqd', p.astype(jnp.bfloat16), v_h,
                         preferred_element_type=jnp.float32)  # (Bt, Lp, Dh) f32
        ctx_ref[:, h * Dh:(h + 1) * Dh] = ctx.reshape(N, Dh).astype(jnp.bfloat16)

    attn = jnp.dot(ctx_ref[...], wo_ref[...],                 # single K=D Wo matmul
                   preferred_element_type=jnp.float32)
    x = x + attn + bo_ref[0]                                  # residual (drop_path = Identity)

    # ---- pre-LN + MLP (c_fc -> QuickGELU -> c_proj), tiled over Dff ----
    # Static chunking bounds the live (N, chunk) intermediate to a few MiB (v7x fit);
    # chunk boundaries are multiples of 128 lanes / 8 sublanes so slices don't copy.
    h2 = _layernorm(x, ln2_w_ref[0], ln2_b_ref[0]).astype(jnp.bfloat16)
    mlp = jnp.zeros((N, D), jnp.float32)
    for c in range(n_chunks):
        cs = c * dff_chunk
        m = jnp.dot(h2, w1_ref[:, cs:cs + dff_chunk],
                    preferred_element_type=jnp.float32) + b1_ref[:, cs:cs + dff_chunk]
        m = m * jax.nn.sigmoid(1.702 * m)                     # QuickGELU (f32, EUP)
        mlp = mlp + jnp.dot(m.astype(jnp.bfloat16), w2_ref[cs:cs + dff_chunk, :],
                            preferred_element_type=jnp.float32)
    x = x + mlp + b2_ref[0]                                   # residual

    out_ref[...] = x.reshape(Bt, Lp, D).astype(out_ref.dtype)


def clip_transformer_layer(x, mask, params, *, num_heads):
    """x: (B, L, D), mask: (B, L) with 1=valid / 0=pad.  Returns (B, L, D) in x.dtype."""
    B, L, D = x.shape
    assert D % num_heads == 0
    Dh = D // num_heads
    Dff = params["w1"].shape[1]

    # --- chip query (VMEM capacity drives tile sizing + the scoped-vmem clamp) -----
    try:
        vmem_cap = int(pltpu.get_tpu_info().vmem_capacity_bytes)
    except Exception:
        vmem_cap = 64 * 1024 * 1024            # conservative (v7x per-TC)

    # --- batch folding + sequence padding ------------------------------------------
    # Aim for >= 4 grid steps when B permits (>= 2 per TensorCore on megacore parts);
    # cap the fold at 4 on 64 MiB-VMEM chips (v7x), 8 on 128 MiB chips (v5e/v6e).
    max_bb = 4 if vmem_cap <= 64 * 1024 * 1024 else 8
    block_b = 1 if B < 4 else min(max_bb, pl.cdiv(B, 4))
    Bp = _round_up(B, block_b)
    # Lp is the lane (last) dim of the score tensor and the softmax reduction axis:
    # pad to a full 128-lane tile for production sequence lengths (min 16).
    Lp = _round_up(L, 128) if L > 16 else _round_up(L, 16)

    xp = jnp.pad(x, ((0, Bp - B), (0, Lp - L), (0, 0)))       # keep caller's dtype in HBM
    maskp = jnp.pad(mask.astype(jnp.float32), ((0, Bp - B), (0, Lp - L)))
    maskp = maskp.at[B:].set(1.0)              # dummy batch rows: fully valid, discarded
    mask3 = maskp.reshape(Bp, 1, Lp)

    # --- pack / pre-scale / downcast weights ----------------------------------------
    scale = 1.0 / math.sqrt(Dh)
    wqkv = jnp.concatenate([params["wq"] * scale, params["wk"], params["wv"]],
                           axis=1).astype(jnp.bfloat16)                 # (D, 3D)
    bqkv = jnp.concatenate([params["bq"] * scale, params["bk"], params["bv"]],
                           axis=1).astype(jnp.float32)                  # (1, 3D)
    wo = params["wo"].astype(jnp.bfloat16)
    w1 = params["w1"].astype(jnp.bfloat16)
    w2 = params["w2"].astype(jnp.bfloat16)

    # Dff chunk = largest divisor of Dff <= 1024.
    if Dff <= 1024:
        dff_chunk = Dff
    else:
        dff_chunk = next((c for c in (1024, 768, 512, 384, 256, 128) if Dff % c == 0), Dff)

    grid = (Bp // block_b,)
    N = block_b * Lp
    itemsize = jnp.dtype(x.dtype).itemsize

    # --- compiler hints ---------------------------------------------------------------
    tokens = Bp * Lp
    flops = int(tokens * (6 * D * D + 2 * D * D + 4 * D * Dff)
                + Bp * num_heads * 4 * Lp * Lp * Dh)
    transcendentals = int(tokens * (num_heads * (Lp + 1) + Dff + 2))
    bytes_accessed = int(2 * Bp * Lp * D * itemsize + mask3.size * 4
                         + (wqkv.size + wo.size + w1.size + w2.size) * 2
                         + (bqkv.size + 6 * D + Dff) * 4)
    est_vmem = int(
        2 * (D * 3 * D + D * D + 2 * D * Dff)       # bf16 weights (single-buffered)
        + 2 * 2 * N * D * itemsize                  # double-buffered x / out tiles
        + 4 * N * (3 * D + 2 * D)                   # qkv f32, x f32, mlp acc f32
        + 2 * N * 3 * D                             # h1/h2 bf16 + ctx scratch bf16
        + 4 * 2 * block_b * Lp * Lp                 # scores + probs f32 (one head live)
        + 6 * N * dff_chunk                         # mlp chunk f32 + bf16 copy
        + (2 << 20))                                # slack
    vmem_limit = int(min(max(est_vmem, 32 * 1024 * 1024), int(0.85 * vmem_cap)))

    kernel = functools.partial(_clip_layer_kernel, num_heads=num_heads,
                               dff_chunk=dff_chunk)

    def build(single_buffer_weights):
        # Grid-invariant weights/biases/LN params: single-buffer them (constant
        # index_map -> no "next block" prefetch is ever needed) to halve weight VMEM.
        wkw = {"pipeline_mode": pl.Buffered(1)} if single_buffer_weights else {}
        full = lambda shape: pl.BlockSpec(shape, lambda b: (0,) * len(shape), **wkw)
        return pl.pallas_call(
            kernel,
            out_shape=jax.ShapeDtypeStruct((Bp, Lp, D), x.dtype),
            grid_spec=pltpu.PrefetchScalarGridSpec(
                num_scalar_prefetch=0,
                grid=grid,
                in_specs=[
                    pl.BlockSpec((block_b, Lp, D), lambda b: (b, 0, 0)),   # x
                    pl.BlockSpec((block_b, 1, Lp), lambda b: (b, 0, 0)),   # mask
                    full((1, D)), full((1, D)),                            # ln_1 w, b
                    full((D, 3 * D)), full((1, 3 * D)),                    # fused Wqkv, bqkv
                    full((D, D)), full((1, D)),                            # Wo, bo
                    full((1, D)), full((1, D)),                            # ln_2 w, b
                    full((D, Dff)), full((1, Dff)),                        # c_fc
                    full((Dff, D)), full((1, D)),                          # c_proj
                ],
                out_specs=pl.BlockSpec((block_b, Lp, D), lambda b: (b, 0, 0)),
                scratch_shapes=[pltpu.VMEM((N, D), jnp.bfloat16)],         # per-head ctx
            ),
            compiler_params=pltpu.CompilerParams(
                dimension_semantics=("parallel",),
                vmem_limit_bytes=vmem_limit),
            cost_estimate=pl.CostEstimate(flops=flops,
                                          transcendentals=transcendentals,
                                          bytes_accessed=bytes_accessed),
        )

    args = (xp, mask3,
            params["ln1_w"], params["ln1_b"],
            wqkv, bqkv,
            wo, params["bo"],
            params["ln2_w"], params["ln2_b"],
            w1, params["b1"],
            w2, params["b2"])

    try:
        out = build(True)(*args)
    except Exception:
        # Fallback if this JAX/Mosaic build rejects pl.Buffered(1): default (double-
        # buffered) weight specs -- identical results, just ~2x weight VMEM.
        out = build(False)(*args)

    return out[:B, :L, :]


def init_params(key, d_model, num_heads):
    """Deterministic synthetic init (trunc_normal(std=0.02) ~ normal*0.02, biases/LN-bias = 0)."""
    dff = 4 * d_model
    ks = jax.random.split(key, 6)
    n = lambda k, shape: (0.02 * jax.random.normal(k, shape)).astype(jnp.float32)
    return {
        "ln1_w": jnp.ones((1, d_model), jnp.float32),
        "ln1_b": jnp.zeros((1, d_model), jnp.float32),
        # q/k/v/out projection weights stored transposed: (in, out), so y = x @ W + b
        "wq": n(ks[0], (d_model, d_model)),
        "wk": n(ks[1], (d_model, d_model)),
        "wv": n(ks[2], (d_model, d_model)),
        "bq": jnp.zeros((1, d_model), jnp.float32),
        "bk": jnp.zeros((1, d_model), jnp.float32),
        "bv": jnp.zeros((1, d_model), jnp.float32),
        "wo": n(ks[3], (d_model, d_model)),
        "bo": jnp.zeros((1, d_model), jnp.float32),
        "ln2_w": jnp.ones((1, d_model), jnp.float32),
        "ln2_b": jnp.zeros((1, d_model), jnp.float32),
        "w1": n(ks[4], (d_model, dff)),
        "b1": jnp.zeros((1, dff), jnp.float32),
        "w2": n(ks[5], (dff, d_model)),
        "b2": jnp.zeros((1, d_model), jnp.float32),
    }


def _reference(x, mask, p, num_heads):
    """Pure-JAX f32 reference of the same forward pass (for a sanity check)."""
    B, L, D = x.shape
    Dh = D // num_heads

    def ln(v, w, b):
        mu = jnp.mean(v, -1, keepdims=True)
        var = jnp.mean((v - mu) ** 2, -1, keepdims=True)
        return (v - mu) / jnp.sqrt(var + 1e-5) * w + b

    h1 = ln(x, p["ln1_w"][0], p["ln1_b"][0])
    q = h1 @ p["wq"] + p["bq"][0]
    k = h1 @ p["wk"] + p["bk"][0]
    v = h1 @ p["wv"] + p["bv"][0]
    q = q.reshape(B, L, num_heads, Dh).transpose(0, 2, 1, 3)
    k = k.reshape(B, L, num_heads, Dh).transpose(0, 2, 1, 3)
    v = v.reshape(B, L, num_heads, Dh).transpose(0, 2, 1, 3)
    s = jnp.einsum("bhqd,bhkd->bhqk", q, k) / math.sqrt(Dh)
    bias = jnp.where(mask[:, None, None, :] > 0.5, 0.0, -1e30)
    a = jax.nn.softmax(s + bias, axis=-1)
    o = jnp.einsum("bhqk,bhkd->bhqd", a, v).transpose(0, 2, 1, 3).reshape(B, L, D)
    x = x + (o @ p["wo"] + p["bo"][0])
    h2 = ln(x, p["ln2_w"][0], p["ln2_b"][0])
    m = h2 @ p["w1"] + p["b1"][0]
    m = m * jax.nn.sigmoid(1.702 * m)
    m = m @ p["w2"] + p["b2"][0]
    return x + m


if __name__ == "__main__":
    # small shapes: batch=2, context_length (seq)=8, width (d_model)=32, heads=4
    B, L, D, H = 2, 8, 32, 4
    key = jax.random.PRNGKey(0)
    k_x, k_p = jax.random.split(key)

    hidden = jax.random.normal(k_x, (B, L, D), jnp.float32)
    masks = jnp.array([[1, 1, 1, 1, 1, 1, 0, 0],
                       [1, 1, 1, 1, 0, 0, 0, 0]], jnp.float32)   # 1=valid, 0=pad
    params = init_params(k_p, D, H)

    # mimic the module's dict-in / dict-out interface
    inputs = {"visual": jnp.zeros((B, 4, 16, 16), jnp.float32),
              "lang": {"hidden": hidden, "masks": masks}}

    new_hidden = clip_transformer_layer(inputs["lang"]["hidden"],
                                        inputs["lang"]["masks"],
                                        params, num_heads=H)
    new_hidden = jax.block_until_ready(new_hidden)

    features_dict = {"visual": inputs["visual"],
                     "lang": {"hidden": new_hidden, "masks": masks}}

    ref = _reference(hidden, masks, params, H)
    assert new_hidden.shape == (B, L, D)
    # kernel runs its matmuls in bf16 (f32 accumulation) -> compare loosely vs f32 ref
    assert jnp.allclose(new_hidden, ref, atol=2e-2, rtol=2e-2)
    print("KERNEL_OK")
</pallas_src>

<mosaic_0001>
module attributes {stable_mosaic.version = 11 : i64} {
  func.func @_clip_layer_kernel(%arg0: i32, %arg1: memref<1x16x32xf32, #tpu.memory_space<vmem>>, %arg2: memref<1x1x16xf32, #tpu.memory_space<vmem>>, %arg3: memref<1x32xf32, #tpu.memory_space<vmem>>, %arg4: memref<1x32xf32, #tpu.memory_space<vmem>>, %arg5: memref<32x96xbf16, #tpu.memory_space<vmem>>, %arg6: memref<1x96xf32, #tpu.memory_space<vmem>>, %arg7: memref<32x32xbf16, #tpu.memory_space<vmem>>, %arg8: memref<1x32xf32, #tpu.memory_space<vmem>>, %arg9: memref<1x32xf32, #tpu.memory_space<vmem>>, %arg10: memref<1x32xf32, #tpu.memory_space<vmem>>, %arg11: memref<32x128xbf16, #tpu.memory_space<vmem>>, %arg12: memref<1x128xf32, #tpu.memory_space<vmem>>, %arg13: memref<128x32xbf16, #tpu.memory_space<vmem>>, %arg14: memref<1x32xf32, #tpu.memory_space<vmem>>, %arg15: memref<1x16x32xf32, #tpu.memory_space<vmem>>, %arg16: memref<16x32xbf16, #tpu.memory_space<vmem>>) attributes {dimension_semantics = [#tpu.dimension_semantics<parallel>], iteration_bounds = array<i64: 2>, scalar_prefetch = 0 : i64, scratch_operands = 1 : i64, tpu.core_type = #tpu.core_type<tc>, window_params = [{transform_indices = @transform_0, window_bounds = array<i64: 1, 16, 32>}, {transform_indices = @transform_1, window_bounds = array<i64: 1, 1, 16>}, {pipeline_mode = #tpu.pipeline_mode<synchronous>, transform_indices = @transform_2, window_bounds = array<i64: 1, 32>}, {pipeline_mode = #tpu.pipeline_mode<synchronous>, transform_indices = @transform_3, window_bounds = array<i64: 1, 32>}, {pipeline_mode = #tpu.pipeline_mode<synchronous>, transform_indices = @transform_4, window_bounds = array<i64: 32, 96>}, {pipeline_mode = #tpu.pipeline_mode<synchronous>, transform_indices = @transform_5, window_bounds = array<i64: 1, 96>}, {pipeline_mode = #tpu.pipeline_mode<synchronous>, transform_indices = @transform_6, window_bounds = array<i64: 32, 32>}, {pipeline_mode = #tpu.pipeline_mode<synchronous>, transform_indices = @transform_7, window_bounds = array<i64: 1, 32>}, {pipeline_mode = #tpu.pipeline_mode<synchronous>, transform_indices = @transform_8, window_bounds = array<i64: 1, 32>}, {pipeline_mode = #tpu.pipeline_mode<synchronous>, transform_indices = @transform_9, window_bounds = array<i64: 1, 32>}, {pipeline_mode = #tpu.pipeline_mode<synchronous>, transform_indices = @transform_10, window_bounds = array<i64: 32, 128>}, {pipeline_mode = #tpu.pipeline_mode<synchronous>, transform_indices = @transform_11, window_bounds = array<i64: 1, 128>}, {pipeline_mode = #tpu.pipeline_mode<synchronous>, transform_indices = @transform_12, window_bounds = array<i64: 128, 32>}, {pipeline_mode = #tpu.pipeline_mode<synchronous>, transform_indices = @transform_13, window_bounds = array<i64: 1, 32>}, {transform_indices = @transform_14, window_bounds = array<i64: 1, 16, 32>}]} {
    %c0 = arith.constant 0 : index
    %c0_0 = arith.constant 0 : index
    %c0_1 = arith.constant 0 : index
    %0 = vector.load %arg1[%c0, %c0_0, %c0_1] : memref<1x16x32xf32, #tpu.memory_space<vmem>>, vector<1x16x32xf32>
    %1 = vector.shape_cast %0 : vector<1x16x32xf32> to vector<16x32xf32>
    %c0_2 = arith.constant 0 : index
    %c0_3 = arith.constant 0 : index
    %c0_4 = arith.constant 0 : index
    %2 = vector.load %arg2[%c0_2, %c0_3, %c0_4] : memref<1x1x16xf32, #tpu.memory_space<vmem>>, vector<1x1x16xf32>
    %cst = arith.constant 5.000000e-01 : f32
    %3 = vector.broadcast %cst : f32 to vector<1x1x16xf32>
    %4 = arith.cmpf ogt, %2, %3 : vector<1x1x16xf32>
    %cst_5 = arith.constant 0.000000e+00 : f32
    %cst_6 = arith.constant -1.000000e+30 : f32
    %5 = vector.broadcast %cst_5 : f32 to vector<1x1x16xf32>
    %6 = vector.broadcast %cst_6 : f32 to vector<1x1x16xf32>
    %7 = arith.select %4, %5, %6 : vector<1x1x16xi1>, vector<1x1x16xf32>
    %c0_7 = arith.constant 0 : index
    %c0_8 = arith.constant 0 : index
    %8 = vector.load %arg3[%c0_7, %c0_8] : memref<1x32xf32, #tpu.memory_space<vmem>>, vector<1x32xf32>
    %9 = vector.shape_cast %8 : vector<1x32xf32> to vector<32xf32>
    %c0_9 = arith.constant 0 : index
    %c0_10 = arith.constant 0 : index
    %10 = vector.load %arg4[%c0_9, %c0_10] : memref<1x32xf32, #tpu.memory_space<vmem>>, vector<1x32xf32>
    %11 = vector.shape_cast %10 : vector<1x32xf32> to vector<32xf32>
    %cst_11 = arith.constant dense<0.000000e+00> : vector<16xf32>
    %12 = vector.multi_reduction <add>, %1, %cst_11 [1] : vector<16x32xf32> to vector<16xf32>
    %13 = vector.shape_cast %12 : vector<16xf32> to vector<16x1xf32>
    %cst_12 = arith.constant 3.200000e+01 : f32
    %14 = vector.broadcast %cst_12 : f32 to vector<16x1xf32>
    %15 = arith.divf %13, %14 : vector<16x1xf32>
    %16 = vector.broadcast %15 : vector<16x1xf32> to vector<16x32xf32>
    %17 = arith.subf %1, %16 : vector<16x32xf32>
    %18 = arith.mulf %17, %17 : vector<16x32xf32>
    %cst_13 = arith.constant dense<0.000000e+00> : vector<16xf32>
    %19 = vector.multi_reduction <add>, %18, %cst_13 [1] : vector<16x32xf32> to vector<16xf32>
    %20 = vector.shape_cast %19 : vector<16xf32> to vector<16x1xf32>
    %cst_14 = arith.constant 3.200000e+01 : f32
    %21 = vector.broadcast %cst_14 : f32 to vector<16x1xf32>
    %22 = arith.divf %20, %21 : vector<16x1xf32>
    %23 = vector.broadcast %15 : vector<16x1xf32> to vector<16x32xf32>
    %24 = arith.subf %1, %23 : vector<16x32xf32>
    %cst_15 = arith.constant 9.99999974E-6 : f32
    %25 = vector.broadcast %cst_15 : f32 to vector<16x1xf32>
    %26 = arith.addf %22, %25 : vector<16x1xf32>
    %27 = math.rsqrt %26 : vector<16x1xf32>
    %28 = vector.broadcast %27 : vector<16x1xf32> to vector<16x32xf32>
    %29 = arith.mulf %24, %28 : vector<16x32xf32>
    %30 = vector.shape_cast %9 : vector<32xf32> to vector<1x32xf32>
    %31 = vector.broadcast %30 : vector<1x32xf32> to vector<16x32xf32>
    %32 = arith.mulf %29, %31 : vector<16x32xf32>
    %33 = vector.shape_cast %11 : vector<32xf32> to vector<1x32xf32>
    %34 = vector.broadcast %33 : vector<1x32xf32> to vector<16x32xf32>
    %35 = arith.addf %32, %34 : vector<16x32xf32>
    %36 = arith.truncf %35 : vector<16x32xf32> to vector<16x32xbf16>
    %c0_16 = arith.constant 0 : index
    %c0_17 = arith.constant 0 : index
    %37 = vector.load %arg5[%c0_16, %c0_17] : memref<32x96xbf16, #tpu.memory_space<vmem>>, vector<32x96xbf16>
    %cst_18 = arith.constant dense<0.000000e+00> : vector<16x96xf32>
    %38 = tpu.matmul %36, %37, %cst_18 {dimension_numbers = #tpu.dot_dimension_numbers<[1], [0], [0], [1], [0, 0, 1, 1], [], []>} : vector<16x32xbf16>, vector<32x96xbf16>, vector<16x96xf32> -> vector<16x96xf32>
    %c0_19 = arith.constant 0 : index
    %c0_20 = arith.constant 0 : index
    %39 = vector.load %arg6[%c0_19, %c0_20] : memref<1x96xf32, #tpu.memory_space<vmem>>, vector<1x96xf32>
    %40 = vector.shape_cast %39 : vector<1x96xf32> to vector<96xf32>
    %41 = vector.extract_strided_slice %38 {offsets = [0, 0], sizes = [16, 8], strides = [1, 1]} : vector<16x96xf32> to vector<16x8xf32>
    %42 = vector.extract_strided_slice %40 {offsets = [0], sizes = [8], strides = [1]} : vector<96xf32> to vector<8xf32>
    %43 = vector.shape_cast %42 : vector<8xf32> to vector<1x8xf32>
    %44 = vector.broadcast %43 : vector<1x8xf32> to vector<16x8xf32>
    %45 = arith.addf %41, %44 : vector<16x8xf32>
    %46 = arith.truncf %45 : vector<16x8xf32> to vector<16x8xbf16>
    %47 = vector.shape_cast %46 : vector<16x8xbf16> to vector<1x16x8xbf16>
    %48 = vector.extract_strided_slice %38 {offsets = [0, 32], sizes = [16, 8], strides = [1, 1]} : vector<16x96xf32> to vector<16x8xf32>
    %49 = vector.extract_strided_slice %40 {offsets = [32], sizes = [8], strides = [1]} : vector<96xf32> to vector<8xf32>
    %50 = vector.shape_cast %49 : vector<8xf32> to vector<1x8xf32>
    %51 = vector.broadcast %50 : vector<1x8xf32> to vector<16x8xf32>
    %52 = arith.addf %48, %51 : vector<16x8xf32>
    %53 = arith.truncf %52 : vector<16x8xf32> to vector<16x8xbf16>
    %54 = vector.shape_cast %53 : vector<16x8xbf16> to vector<1x16x8xbf16>
    %55 = vector.extract_strided_slice %38 {offsets = [0, 64], sizes = [16, 8], strides = [1, 1]} : vector<16x96xf32> to vector<16x8xf32>
    %56 = vector.extract_strided_slice %40 {offsets = [64], sizes = [8], strides = [1]} : vector<96xf32> to vector<8xf32>
    %57 = vector.shape_cast %56 : vector<8xf32> to vector<1x8xf32>
    %58 = vector.broadcast %57 : vector<1x8xf32> to vector<16x8xf32>
    %59 = arith.addf %55, %58 : vector<16x8xf32>
    %60 = arith.truncf %59 : vector<16x8xf32> to vector<16x8xbf16>
    %61 = vector.shape_cast %60 : vector<16x8xbf16> to vector<1x16x8xbf16>
    "tpu.trace_start"() <{level = 10 : i32, message = "bqd,bkd->bqk"}> : () -> ()
    %cst_21 = arith.constant dense<0.000000e+00> : vector<1x16x16xf32>
    %62 = tpu.matmul %47, %54, %cst_21 {dimension_numbers = #tpu.dot_dimension_numbers<[2], [2], [1], [1], [0, 0, 0, 1, 1, 1], [0], [0]>} : vector<1x16x8xbf16>, vector<1x16x8xbf16>, vector<1x16x16xf32> -> vector<1x16x16xf32>
    "tpu.trace_stop"() : () -> ()
    %63 = vector.broadcast %7 : vector<1x1x16xf32> to vector<1x16x16xf32>
    %64 = arith.addf %62, %63 : vector<1x16x16xf32>
    %cst_22 = arith.constant dense<0xFF800000> : vector<1x16xf32>
    %65 = vector.multi_reduction <maximumf>, %64, %cst_22 [2] : vector<1x16x16xf32> to vector<1x16xf32>
    %66 = vector.shape_cast %65 : vector<1x16xf32> to vector<1x16x1xf32>
    %67 = vector.broadcast %66 : vector<1x16x1xf32> to vector<1x16x16xf32>
    %68 = arith.subf %64, %67 : vector<1x16x16xf32>
    %69 = math.exp %68 : vector<1x16x16xf32>
    %cst_23 = arith.constant dense<0.000000e+00> : vector<1x16xf32>
    %70 = vector.multi_reduction <add>, %69, %cst_23 [2] : vector<1x16x16xf32> to vector<1x16xf32>
    %71 = vector.shape_cast %70 : vector<1x16xf32> to vector<1x16x1xf32>
    %72 = tpu.reciprocal %71 {approx = true} : vector<1x16x1xf32> -> vector<1x16x1xf32>
    %73 = vector.broadcast %72 : vector<1x16x1xf32> to vector<1x16x16xf32>
    %74 = arith.mulf %69, %73 : vector<1x16x16xf32>
    %75 = arith.truncf %74 : vector<1x16x16xf32> to vector<1x16x16xbf16>
    "tpu.trace_start"() <{level = 10 : i32, message = "bqk,bkd->bqd"}> : () -> ()
    %cst_24 = arith.constant dense<0.000000e+00> : vector<1x16x8xf32>
    %76 = tpu.matmul %75, %61, %cst_24 {dimension_numbers = #tpu.dot_dimension_numbers<[2], [1], [1], [2], [0, 0, 0, 1, 1, 2], [0], [0]>} : vector<1x16x16xbf16>, vector<1x16x8xbf16>, vector<1x16x8xf32> -> vector<1x16x8xf32>
    "tpu.trace_stop"() : () -> ()
    %77 = vector.shape_cast %76 : vector<1x16x8xf32> to vector<16x8xf32>
    %78 = arith.truncf %77 : vector<16x8xf32> to vector<16x8xbf16>
    %c0_25 = arith.constant 0 : index
    %c0_26 = arith.constant 0 : index
    %79 = vector.load %arg16[%c0_25, %c0_26] : memref<16x32xbf16, #tpu.memory_space<vmem>>, vector<16x8xbf16>
    tpu.vector_store %arg16[%c0_25, %c0_26], %78 {strides = array<i32>} : memref<16x32xbf16, #tpu.memory_space<vmem>>, vector<16x8xbf16>,
    %80 = vector.extract_strided_slice %38 {offsets = [0, 8], sizes = [16, 8], strides = [1, 1]} : vector<16x96xf32> to vector<16x8xf32>
    %81 = vector.extract_strided_slice %40 {offsets = [8], sizes = [8], strides = [1]} : vector<96xf32> to vector<8xf32>
    %82 = vector.shape_cast %81 : vector<8xf32> to vector<1x8xf32>
    %83 = vector.broadcast %82 : vector<1x8xf32> to vector<16x8xf32>
    %84 = arith.addf %80, %83 : vector<16x8xf32>
    %85 = arith.truncf %84 : vector<16x8xf32> to vector<16x8xbf16>
    %86 = vector.shape_cast %85 : vector<16x8xbf16> to vector<1x16x8xbf16>
    %87 = vector.extract_strided_slice %38 {offsets = [0, 40], sizes = [16, 8], strides = [1, 1]} : vector<16x96xf32> to vector<16x8xf32>
    %88 = vector.extract_strided_slice %40 {offsets = [40], sizes = [8], strides = [1]} : vector<96xf32> to vector<8xf32>
    %89 = vector.shape_cast %88 : vector<8xf32> to vector<1x8xf32>
    %90 = vector.broadcast %89 : vector<1x8xf32> to vector<16x8xf32>
    %91 = arith.addf %87, %90 : vector<16x8xf32>
    %92 = arith.truncf %91 : vector<16x8xf32> to vector<16x8xbf16>
    %93 = vector.shape_cast %92 : vector<16x8xbf16> to vector<1x16x8xbf16>
    %94 = vector.extract_strided_slice %38 {offsets = [0, 72], sizes = [16, 8], strides = [1, 1]} : vector<16x96xf32> to vector<16x8xf32>
    %95 = vector.extract_strided_slice %40 {offsets = [72], sizes = [8], strides = [1]} : vector<96xf32> to vector<8xf32>
    %96 = vector.shape_cast %95 : vector<8xf32> to vector<1x8xf32>
    %97 = vector.broadcast %96 : vector<1x8xf32> to vector<16x8xf32>
    %98 = arith.addf %94, %97 : vector<16x8xf32>
    %99 = arith.truncf %98 : vector<16x8xf32> to vector<16x8xbf16>
    %100 = vector.shape_cast %99 : vector<16x8xbf16> to vector<1x16x8xbf16>
    "tpu.trace_start"() <{level = 10 : i32, message = "bqd,bkd->bqk"}> : () -> ()
    %cst_27 = arith.constant dense<0.000000e+00> : vector<1x16x16xf32>
    %101 = tpu.matmul %86, %93, %cst_27 {dimension_numbers = #tpu.dot_dimension_numbers<[2], [2], [1], [1], [0, 0, 0, 1, 1, 1], [0], [0]>} : vector<1x16x8xbf16>, vector<1x16x8xbf16>, vector<1x16x16xf32> -> vector<1x16x16xf32>
    "tpu.trace_stop"() : () -> ()
    %102 = vector.broadcast %7 : vector<1x1x16xf32> to vector<1x16x16xf32>
    %103 = arith.addf %101, %102 : vector<1x16x16xf32>
    %cst_28 = arith.constant dense<0xFF800000> : vector<1x16xf32>
    %104 = vector.multi_reduction <maximumf>, %103, %cst_28 [2] : vector<1x16x16xf32> to vector<1x16xf32>
    %105 = vector.shape_cast %104 : vector<1x16xf32> to vector<1x16x1xf32>
    %106 = vector.broadcast %105 : vector<1x16x1xf32> to vector<1x16x16xf32>
    %107 = arith.subf %103, %106 : vector<1x16x16xf32>
    %108 = math.exp %107 : vector<1x16x16xf32>
    %cst_29 = arith.constant dense<0.000000e+00> : vector<1x16xf32>
    %109 = vector.multi_reduction <add>, %108, %cst_29 [2] : vector<1x16x16xf32> to vector<1x16xf32>
    %110 = vector.shape_cast %109 : vector<1x16xf32> to vector<1x16x1xf32>
    %111 = tpu.reciprocal %110 {approx = true} : vector<1x16x1xf32> -> vector<1x16x1xf32>
    %112 = vector.broadcast %111 : vector<1x16x1xf32> to vector<1x16x16xf32>
    %113 = arith.mulf %108, %112 : vector<1x16x16xf32>
    %114 = arith.truncf %113 : vector<1x16x16xf32> to vector<1x16x16xbf16>
    "tpu.trace_start"() <{level = 10 : i32, message = "bqk,bkd->bqd"}> : () -> ()
    %cst_30 = arith.constant dense<0.000000e+00> : vector<1x16x8xf32>
    %115 = tpu.matmul %114, %100, %cst_30 {dimension_numbers = #tpu.dot_dimension_numbers<[2], [1], [1], [2], [0, 0, 0, 1, 1, 2], [0], [0]>} : vector<1x16x16xbf16>, vector<1x16x8xbf16>, vector<1x16x8xf32> -> vector<1x16x8xf32>
    "tpu.trace_stop"() : () -> ()
    %116 = vector.shape_cast %115 : vector<1x16x8xf32> to vector<16x8xf32>
    %117 = arith.truncf %116 : vector<16x8xf32> to vector<16x8xbf16>
    %c0_31 = arith.constant 0 : index
    %c8 = arith.constant 8 : index
    %118 = vector.load %arg16[%c0_31, %c8] : memref<16x32xbf16, #tpu.memory_space<vmem>>, vector<16x8xbf16>
    tpu.vector_store %arg16[%c0_31, %c8], %117 {strides = array<i32>} : memref<16x32xbf16, #tpu.memory_space<vmem>>, vector<16x8xbf16>,
    %119 = vector.extract_strided_slice %38 {offsets = [0, 16], sizes = [16, 8], strides = [1, 1]} : vector<16x96xf32> to vector<16x8xf32>
    %120 = vector.extract_strided_slice %40 {offsets = [16], sizes = [8], strides = [1]} : vector<96xf32> to vector<8xf32>
    %121 = vector.shape_cast %120 : vector<8xf32> to vector<1x8xf32>
    %122 = vector.broadcast %121 : vector<1x8xf32> to vector<16x8xf32>
    %123 = arith.addf %119, %122 : vector<16x8xf32>
    %124 = arith.truncf %123 : vector<16x8xf32> to vector<16x8xbf16>
    %125 = vector.shape_cast %124 : vector<16x8xbf16> to vector<1x16x8xbf16>
    %126 = vector.extract_strided_slice %38 {offsets = [0, 48], sizes = [16, 8], strides = [1, 1]} : vector<16x96xf32> to vector<16x8xf32>
    %127 = vector.extract_strided_slice %40 {offsets = [48], sizes = [8], strides = [1]} : vector<96xf32> to vector<8xf32>
    %128 = vector.shape_cast %127 : vector<8xf32> to vector<1x8xf32>
    %129 = vector.broadcast %128 : vector<1x8xf32> to vector<16x8xf32>
    %130 = arith.addf %126, %129 : vector<16x8xf32>
    %131 = arith.truncf %130 : vector<16x8xf32> to vector<16x8xbf16>
    %132 = vector.shape_cast %131 : vector<16x8xbf16> to vector<1x16x8xbf16>
    %133 = vector.extract_strided_slice %38 {offsets = [0, 80], sizes = [16, 8], strides = [1, 1]} : vector<16x96xf32> to vector<16x8xf32>
    %134 = vector.extract_strided_slice %40 {offsets = [80], sizes = [8], strides = [1]} : vector<96xf32> to vector<8xf32>
    %135 = vector.shape_cast %134 : vector<8xf32> to vector<1x8xf32>
    %136 = vector.broadcast %135 : vector<1x8xf32> to vector<16x8xf32>
    %137 = arith.addf %133, %136 : vector<16x8xf32>
    %138 = arith.truncf %137 : vector<16x8xf32> to vector<16x8xbf16>
    %139 = vector.shape_cast %138 : vector<16x8xbf16> to vector<1x16x8xbf16>
    "tpu.trace_start"() <{level = 10 : i32, message = "bqd,bkd->bqk"}> : () -> ()
    %cst_32 = arith.constant dense<0.000000e+00> : vector<1x16x16xf32>
    %140 = tpu.matmul %125, %132, %cst_32 {dimension_numbers = #tpu.dot_dimension_numbers<[2], [2], [1], [1], [0, 0, 0, 1, 1, 1], [0], [0]>} : vector<1x16x8xbf16>, vector<1x16x8xbf16>, vector<1x16x16xf32> -> vector<1x16x16xf32>
    "tpu.trace_stop"() : () -> ()
    %141 = vector.broadcast %7 : vector<1x1x16xf32> to vector<1x16x16xf32>
    %142 = arith.addf %140, %141 : vector<1x16x16xf32>
    %cst_33 = arith.constant dense<0xFF800000> : vector<1x16xf32>
    %143 = vector.multi_reduction <maximumf>, %142, %cst_33 [2] : vector<1x16x16xf32> to vector<1x16xf32>
    %144 = vector.shape_cast %143 : vector<1x16xf32> to vector<1x16x1xf32>
    %145 = vector.broadcast %144 : vector<1x16x1xf32> to vector<1x16x16xf32>
    %146 = arith.subf %142, %145 : vector<1x16x16xf32>
    %147 = math.exp %146 : vector<1x16x16xf32>
    %cst_34 = arith.constant dense<0.000000e+00> : vector<1x16xf32>
    %148 = vector.multi_reduction <add>, %147, %cst_34 [2] : vector<1x16x16xf32> to vector<1x16xf32>
    %149 = vector.shape_cast %148 : vector<1x16xf32> to vector<1x16x1xf32>
    %150 = tpu.reciprocal %149 {approx = true} : vector<1x16x1xf32> -> vector<1x16x1xf32>
    %151 = vector.broadcast %150 : vector<1x16x1xf32> to vector<1x16x16xf32>
    %152 = arith.mulf %147, %151 : vector<1x16x16xf32>
    %153 = arith.truncf %152 : vector<1x16x16xf32> to vector<1x16x16xbf16>
    "tpu.trace_start"() <{level = 10 : i32, message = "bqk,bkd->bqd"}> : () -> ()
    %cst_35 = arith.constant dense<0.000000e+00> : vector<1x16x8xf32>
    %154 = tpu.matmul %153, %139, %cst_35 {dimension_numbers = #tpu.dot_dimension_numbers<[2], [1], [1], [2], [0, 0, 0, 1, 1, 2], [0], [0]>} : vector<1x16x16xbf16>, vector<1x16x8xbf16>, vector<1x16x8xf32> -> vector<1x16x8xf32>
    "tpu.trace_stop"() : () -> ()
    %155 = vector.shape_cast %154 : vector<1x16x8xf32> to vector<16x8xf32>
    %156 = arith.truncf %155 : vector<16x8xf32> to vector<16x8xbf16>
    %c0_36 = arith.constant 0 : index
    %c16 = arith.constant 16 : index
    %157 = vector.load %arg16[%c0_36, %c16] : memref<16x32xbf16, #tpu.memory_space<vmem>>, vector<16x8xbf16>
    tpu.vector_store %arg16[%c0_36, %c16], %156 {strides = array<i32>} : memref<16x32xbf16, #tpu.memory_space<vmem>>, vector<16x8xbf16>,
    %158 = vector.extract_strided_slice %38 {offsets = [0, 24], sizes = [16, 8], strides = [1, 1]} : vector<16x96xf32> to vector<16x8xf32>
    %159 = vector.extract_strided_slice %40 {offsets = [24], sizes = [8], strides = [1]} : vector<96xf32> to vector<8xf32>
    %160 = vector.shape_cast %159 : vector<8xf32> to vector<1x8xf32>
    %161 = vector.broadcast %160 : vector<1x8xf32> to vector<16x8xf32>
    %162 = arith.addf %158, %161 : vector<16x8xf32>
    %163 = arith.truncf %162 : vector<16x8xf32> to vector<16x8xbf16>
    %164 = vector.shape_cast %163 : vector<16x8xbf16> to vector<1x16x8xbf16>
    %165 = vector.extract_strided_slice %38 {offsets = [0, 56], sizes = [16, 8], strides = [1, 1]} : vector<16x96xf32> to vector<16x8xf32>
    %166 = vector.extract_strided_slice %40 {offsets = [56], sizes = [8], strides = [1]} : vector<96xf32> to vector<8xf32>
    %167 = vector.shape_cast %166 : vector<8xf32> to vector<1x8xf32>
    %168 = vector.broadcast %167 : vector<1x8xf32> to vector<16x8xf32>
    %169 = arith.addf %165, %168 : vector<16x8xf32>
    %170 = arith.truncf %169 : vector<16x8xf32> to vector<16x8xbf16>
    %171 = vector.shape_cast %170 : vector<16x8xbf16> to vector<1x16x8xbf16>
    %172 = vector.extract_strided_slice %38 {offsets = [0, 88], sizes = [16, 8], strides = [1, 1]} : vector<16x96xf32> to vector<16x8xf32>
    %173 = vector.extract_strided_slice %40 {offsets = [88], sizes = [8], strides = [1]} : vector<96xf32> to vector<8xf32>
    %174 = vector.shape_cast %173 : vector<8xf32> to vector<1x8xf32>
    %175 = vector.broadcast %174 : vector<1x8xf32> to vector<16x8xf32>
    %176 = arith.addf %172, %175 : vector<16x8xf32>
    %177 = arith.truncf %176 : vector<16x8xf32> to vector<16x8xbf16>
    %178 = vector.shape_cast %177 : vector<16x8xbf16> to vector<1x16x8xbf16>
    "tpu.trace_start"() <{level = 10 : i32, message = "bqd,bkd->bqk"}> : () -> ()
    %cst_37 = arith.constant dense<0.000000e+00> : vector<1x16x16xf32>
    %179 = tpu.matmul %164, %171, %cst_37 {dimension_numbers = #tpu.dot_dimension_numbers<[2], [2], [1], [1], [0, 0, 0, 1, 1, 1], [0], [0]>} : vector<1x16x8xbf16>, vector<1x16x8xbf16>, vector<1x16x16xf32> -> vector<1x16x16xf32>
    "tpu.trace_stop"() : () -> ()
    %180 = vector.broadcast %7 : vector<1x1x16xf32> to vector<1x16x16xf32>
    %181 = arith.addf %179, %180 : vector<1x16x16xf32>
    %cst_38 = arith.constant dense<0xFF800000> : vector<1x16xf32>
    %182 = vector.multi_reduction <maximumf>, %181, %cst_38 [2] : vector<1x16x16xf32> to vector<1x16xf32>
    %183 = vector.shape_cast %182 : vector<1x16xf32> to vector<1x16x1xf32>
    %184 = vector.broadcast %183 : vector<1x16x1xf32> to vector<1x16x16xf32>
    %185 = arith.subf %181, %184 : vector<1x16x16xf32>
    %186 = math.exp %185 : vector<1x16x16xf32>
    %cst_39 = arith.constant dense<0.000000e+00> : vector<1x16xf32>
    %187 = vector.multi_reduction <add>, %186, %cst_39 [2] : vector<1x16x16xf32> to vector<1x16xf32>
    %188 = vector.shape_cast %187 : vector<1x16xf32> to vector<1x16x1xf32>
    %189 = tpu.reciprocal %188 {approx = true} : vector<1x16x1xf32> -> vector<1x16x1xf32>
    %190 = vector.broadcast %189 : vector<1x16x1xf32> to vector<1x16x16xf32>
    %191 = arith.mulf %186, %190 : vector<1x16x16xf32>
    %192 = arith.truncf %191 : vector<1x16x16xf32> to vector<1x16x16xbf16>
    "tpu.trace_start"() <{level = 10 : i32, message = "bqk,bkd->bqd"}> : () -> ()
    %cst_40 = arith.constant dense<0.000000e+00> : vector<1x16x8xf32>
    %193 = tpu.matmul %192, %178, %cst_40 {dimension_numbers = #tpu.dot_dimension_numbers<[2], [1], [1], [2], [0, 0, 0, 1, 1, 2], [0], [0]>} : vector<1x16x16xbf16>, vector<1x16x8xbf16>, vector<1x16x8xf32> -> vector<1x16x8xf32>
    "tpu.trace_stop"() : () -> ()
    %194 = vector.shape_cast %193 : vector<1x16x8xf32> to vector<16x8xf32>
    %195 = arith.truncf %194 : vector<16x8xf32> to vector<16x8xbf16>
    %c0_41 = arith.constant 0 : index
    %c24 = arith.constant 24 : index
    %196 = vector.load %arg16[%c0_41, %c24] : memref<16x32xbf16, #tpu.memory_space<vmem>>, vector<16x8xbf16>
    tpu.vector_store %arg16[%c0_41, %c24], %195 {strides = array<i32>} : memref<16x32xbf16, #tpu.memory_space<vmem>>, vector<16x8xbf16>,
    %c0_42 = arith.constant 0 : index
    %c0_43 = arith.constant 0 : index
    %197 = vector.load %arg16[%c0_42, %c0_43] : memref<16x32xbf16, #tpu.memory_space<vmem>>, vector<16x32xbf16>
    %c0_44 = arith.constant 0 : index
    %c0_45 = arith.constant 0 : index
    %198 = vector.load %arg7[%c0_44, %c0_45] : memref<32x32xbf16, #tpu.memory_space<vmem>>, vector<32x32xbf16>
    %cst_46 = arith.constant dense<0.000000e+00> : vector<16x32xf32>
    %199 = tpu.matmul %197, %198, %cst_46 {dimension_numbers = #tpu.dot_dimension_numbers<[1], [0], [0], [1], [0, 0, 1, 1], [], []>} : vector<16x32xbf16>, vector<32x32xbf16>, vector<16x32xf32> -> vector<16x32xf32>
    %200 = arith.addf %1, %199 : vector<16x32xf32>
    %c0_47 = arith.constant 0 : index
    %c0_48 = arith.constant 0 : index
    %201 = vector.load %arg8[%c0_47, %c0_48] : memref<1x32xf32, #tpu.memory_space<vmem>>, vector<1x32xf32>
    %202 = vector.shape_cast %201 : vector<1x32xf32> to vector<32xf32>
    %203 = vector.shape_cast %202 : vector<32xf32> to vector<1x32xf32>
    %204 = vector.broadcast %203 : vector<1x32xf32> to vector<16x32xf32>
    %205 = arith.addf %200, %204 : vector<16x32xf32>
    %c0_49 = arith.constant 0 : index
    %c0_50 = arith.constant 0 : index
    %206 = vector.load %arg9[%c0_49, %c0_50] : memref<1x32xf32, #tpu.memory_space<vmem>>, vector<1x32xf32>
    %207 = vector.shape_cast %206 : vector<1x32xf32> to vector<32xf32>
    %c0_51 = arith.constant 0 : index
    %c0_52 = arith.constant 0 : index
    %208 = vector.load %arg10[%c0_51, %c0_52] : memref<1x32xf32, #tpu.memory_space<vmem>>, vector<1x32xf32>
    %209 = vector.shape_cast %208 : vector<1x32xf32> to vector<32xf32>
    %cst_53 = arith.constant dense<0.000000e+00> : vector<16xf32>
    %210 = vector.multi_reduction <add>, %205, %cst_53 [1] : vector<16x32xf32> to vector<16xf32>
    %211 = vector.shape_cast %210 : vector<16xf32> to vector<16x1xf32>
    %cst_54 = arith.constant 3.200000e+01 : f32
    %212 = vector.broadcast %cst_54 : f32 to vector<16x1xf32>
    %213 = arith.divf %211, %212 : vector<16x1xf32>
    %214 = vector.broadcast %213 : vector<16x1xf32> to vector<16x32xf32>
    %215 = arith.subf %205, %214 : vector<16x32xf32>
    %216 = arith.mulf %215, %215 : vector<16x32xf32>
    %cst_55 = arith.constant dense<0.000000e+00> : vector<16xf32>
    %217 = vector.multi_reduction <add>, %216, %cst_55 [1] : vector<16x32xf32> to vector<16xf32>
    %218 = vector.shape_cast %217 : vector<16xf32> to vector<16x1xf32>
    %cst_56 = arith.constant 3.200000e+01 : f32
    %219 = vector.broadcast %cst_56 : f32 to vector<16x1xf32>
    %220 = arith.divf %218, %219 : vector<16x1xf32>
    %221 = vector.broadcast %213 : vector<16x1xf32> to vector<16x32xf32>
    %222 = arith.subf %205, %221 : vector<16x32xf32>
    %cst_57 = arith.constant 9.99999974E-6 : f32
    %223 = vector.broadcast %cst_57 : f32 to vector<16x1xf32>
    %224 = arith.addf %220, %223 : vector<16x1xf32>
    %225 = math.rsqrt %224 : vector<16x1xf32>
    %226 = vector.broadcast %225 : vector<16x1xf32> to vector<16x32xf32>
    %227 = arith.mulf %222, %226 : vector<16x32xf32>
    %228 = vector.shape_cast %207 : vector<32xf32> to vector<1x32xf32>
    %229 = vector.broadcast %228 : vector<1x32xf32> to vector<16x32xf32>
    %230 = arith.mulf %227, %229 : vector<16x32xf32>
    %231 = vector.shape_cast %209 : vector<32xf32> to vector<1x32xf32>
    %232 = vector.broadcast %231 : vector<1x32xf32> to vector<16x32xf32>
    %233 = arith.addf %230, %232 : vector<16x32xf32>
    %234 = arith.truncf %233 : vector<16x32xf32> to vector<16x32xbf16>
    %cst_58 = arith.constant 0.000000e+00 : f32
    %235 = vector.broadcast %cst_58 : f32 to vector<16x32xf32>
    %c0_59 = arith.constant 0 : index
    %c0_60 = arith.constant 0 : index
    %236 = vector.load %arg11[%c0_59, %c0_60] : memref<32x128xbf16, #tpu.memory_space<vmem>>, vector<32x128xbf16>
    %cst_61 = arith.constant dense<0.000000e+00> : vector<16x128xf32>
    %237 = tpu.matmul %234, %236, %cst_61 {dimension_numbers = #tpu.dot_dimension_numbers<[1], [0], [0], [1], [0, 0, 1, 1], [], []>} : vector<16x32xbf16>, vector<32x128xbf16>, vector<16x128xf32> -> vector<16x128xf32>
    %c0_62 = arith.constant 0 : index
    %c0_63 = arith.constant 0 : index
    %238 = vector.load %arg12[%c0_62, %c0_63] : memref<1x128xf32, #tpu.memory_space<vmem>>, vector<1x128xf32>
    %239 = vector.broadcast %238 : vector<1x128xf32> to vector<16x128xf32>
    %240 = arith.addf %237, %239 : vector<16x128xf32>
    %cst_64 = arith.constant 1.702000e+00 : f32
    %241 = vector.broadcast %cst_64 : f32 to vector<16x128xf32>
    %242 = arith.mulf %241, %240 : vector<16x128xf32>
    %243 = arith.negf %242 : vector<16x128xf32>
    %244 = math.exp %243 : vector<16x128xf32>
    %cst_65 = arith.constant 1.000000e+00 : f32
    %245 = vector.broadcast %cst_65 : f32 to vector<16x128xf32>
    %246 = arith.addf %245, %244 : vector<16x128xf32>
    %247 = arith.divf %245, %246 : vector<16x128xf32>
    %248 = arith.mulf %240, %247 : vector<16x128xf32>
    %249 = arith.truncf %248 : vector<16x128xf32> to vector<16x128xbf16>
    %c0_66 = arith.constant 0 : index
    %c0_67 = arith.constant 0 : index
    %250 = vector.load %arg13[%c0_66, %c0_67] : memref<128x32xbf16, #tpu.memory_space<vmem>>, vector<128x32xbf16>
    %cst_68 = arith.constant dense<0.000000e+00> : vector<16x32xf32>
    %251 = tpu.matmul %249, %250, %cst_68 {dimension_numbers = #tpu.dot_dimension_numbers<[1], [0], [0], [1], [0, 0, 1, 1], [], []>} : vector<16x128xbf16>, vector<128x32xbf16>, vector<16x32xf32> -> vector<16x32xf32>
    %252 = arith.addf %235, %251 : vector<16x32xf32>
    %253 = arith.addf %205, %252 : vector<16x32xf32>
    %c0_69 = arith.constant 0 : index
    %c0_70 = arith.constant 0 : index
    %254 = vector.load %arg14[%c0_69, %c0_70] : memref<1x32xf32, #tpu.memory_space<vmem>>, vector<1x32xf32>
    %255 = vector.shape_cast %254 : vector<1x32xf32> to vector<32xf32>
    %256 = vector.shape_cast %255 : vector<32xf32> to vector<1x32xf32>
    %257 = vector.broadcast %256 : vector<1x32xf32> to vector<16x32xf32>
    %258 = arith.addf %253, %257 : vector<16x32xf32>
    %259 = vector.shape_cast %258 : vector<16x32xf32> to vector<1x16x32xf32>
    %c0_71 = arith.constant 0 : index
    %c0_72 = arith.constant 0 : index
    %c0_73 = arith.constant 0 : index
    %260 = vector.load %arg15[%c0_71, %c0_72, %c0_73] : memref<1x16x32xf32, #tpu.memory_space<vmem>>, vector<1x16x32xf32>
    tpu.vector_store %arg15[%c0_71, %c0_72, %c0_73], %259 {strides = array<i32>} : memref<1x16x32xf32, #tpu.memory_space<vmem>>, vector<1x16x32xf32>,
    return
  }
  func.func @transform_0(%arg0: i32) -> (i32, i32, i32) {
    %c0_i32 = arith.constant 0 : i32
    %c0_i32_0 = arith.constant 0 : i32
    %c0_i32_1 = arith.constant 0 : i32
    return %arg0, %c0_i32, %c0_i32_0 : i32, i32, i32
  }
  func.func @transform_1(%arg0: i32) -> (i32, i32, i32) {
    %c0_i32 = arith.constant 0 : i32
    %c0_i32_0 = arith.constant 0 : i32
    %c0_i32_1 = arith.constant 0 : i32
    return %arg0, %c0_i32, %c0_i32_0 : i32, i32, i32
  }
  func.func @transform_2(%arg0: i32) -> (i32, i32) {
    %c0_i32 = arith.constant 0 : i32
    %c0_i32_0 = arith.constant 0 : i32
    %c0_i32_1 = arith.constant 0 : i32
    return %c0_i32, %c0_i32_0 : i32, i32
  }
  func.func @transform_3(%arg0: i32) -> (i32, i32) {
    %c0_i32 = arith.constant 0 : i32
    %c0_i32_0 = arith.constant 0 : i32
    %c0_i32_1 = arith.constant 0 : i32
    return %c0_i32, %c0_i32_0 : i32, i32
  }
  func.func @transform_4(%arg0: i32) -> (i32, i32) {
    %c0_i32 = arith.constant 0 : i32
    %c0_i32_0 = arith.constant 0 : i32
    %c0_i32_1 = arith.constant 0 : i32
    return %c0_i32, %c0_i32_0 : i32, i32
  }
  func.func @transform_5(%arg0: i32) -> (i32, i32) {
    %c0_i32 = arith.constant 0 : i32
    %c0_i32_0 = arith.constant 0 : i32
    %c0_i32_1 = arith.constant 0 : i32
    return %c0_i32, %c0_i32_0 : i32, i32
  }
  func.func @transform_6(%arg0: i32) -> (i32, i32) {
    %c0_i32 = arith.constant 0 : i32
    %c0_i32_0 = arith.constant 0 : i32
    %c0_i32_1 = arith.constant 0 : i32
    return %c0_i32, %c0_i32_0 : i32, i32
  }
  func.func @transform_7(%arg0: i32) -> (i32, i32) {
    %c0_i32 = arith.constant 0 : i32
    %c0_i32_0 = arith.constant 0 : i32
    %c0_i32_1 = arith.constant 0 : i32
    return %c0_i32, %c0_i32_0 : i32, i32
  }
  func.func @transform_8(%arg0: i32) -> (i32, i32) {
    %c0_i32 = arith.constant 0 : i32
    %c0_i32_0 = arith.constant 0 : i32
    %c0_i32_1 = arith.constant 0 : i32
    return %c0_i32, %c0_i32_0 : i32, i32
  }
  func.func @transform_9(%arg0: i32) -> (i32, i32) {
    %c0_i32 = arith.constant 0 : i32
    %c0_i32_0 = arith.constant 0 : i32
    %c0_i32_1 = arith.constant 0 : i32
    return %c0_i32, %c0_i32_0 : i32, i32
  }
  func.func @transform_10(%arg0: i32) -> (i32, i32) {
    %c0_i32 = arith.constant 0 : i32
    %c0_i32_0 = arith.constant 0 : i32
    %c0_i32_1 = arith.constant 0 : i32
    return %c0_i32, %c0_i32_0 : i32, i32
  }
  func.func @transform_11(%arg0: i32) -> (i32, i32) {
    %c0_i32 = arith.constant 0 : i32
    %c0_i32_0 = arith.constant 0 : i32
    %c0_i32_1 = arith.constant 0 : i32
    return %c0_i32, %c0_i32_0 : i32, i32
  }
  func.func @transform_12(%arg0: i32) -> (i32, i32) {
    %c0_i32 = arith.constant 0 : i32
    %c0_i32_0 = arith.constant 0 : i32
    %c0_i32_1 = arith.constant 0 : i32
    return %c0_i32, %c0_i32_0 : i32, i32
  }
  func.func @transform_13(%arg0: i32) -> (i32, i32) {
    %c0_i32 = arith.constant 0 : i32
    %c0_i32_0 = arith.constant 0 : i32
    %c0_i32_1 = arith.constant 0 : i32
    return %c0_i32, %c0_i32_0 : i32, i32
  }
  func.func @transform_14(%arg0: i32) -> (i32, i32, i32) {
    %c0_i32 = arith.constant 0 : i32
    %c0_i32_0 = arith.constant 0 : i32
    %c0_i32_1 = arith.constant 0 : i32
    return %arg0, %c0_i32, %c0_i32_0 : i32, i32, i32
  }
}

module attributes {stable_mosaic.version = 11 : i64} {
  func.func @_clip_layer_kernel(%arg0: i32, %arg1: memref<1x16x32xf32, #tpu.memory_space<vmem>>, %arg2: memref<1x1x16xf32, #tpu.memory_space<vmem>>, %arg3: memref<1x32xf32, #tpu.memory_space<vmem>>, %arg4: memref<1x32xf32, #tpu.memory_space<vmem>>, %arg5: memref<32x96xbf16, #tpu.memory_space<vmem>>, %arg6: memref<1x96xf32, #tpu.memory_space<vmem>>, %arg7: memref<32x32xbf16, #tpu.memory_space<vmem>>, %arg8: memref<1x32xf32, #tpu.memory_space<vmem>>, %arg9: memref<1x32xf32, #tpu.memory_space<vmem>>, %arg10: memref<1x32xf32, #tpu.memory_space<vmem>>, %arg11: memref<32x128xbf16, #tpu.memory_space<vmem>>, %arg12: memref<1x128xf32, #tpu.memory_space<vmem>>, %arg13: memref<128x32xbf16, #tpu.memory_space<vmem>>, %arg14: memref<1x32xf32, #tpu.memory_space<vmem>>, %arg15: memref<1x16x32xf32, #tpu.memory_space<vmem>>, %arg16: memref<16x32xbf16, #tpu.memory_space<vmem>>) attributes {dimension_semantics = [#tpu.dimension_semantics<parallel>], iteration_bounds = array<i64: 2>, scalar_prefetch = 0 : i64, scratch_operands = 1 : i64, tpu.core_type = #tpu.core_type<tc>, window_params = [{transform_indices = @transform_0, window_bounds = array<i64: 1, 16, 32>}, {transform_indices = @transform_1, window_bounds = array<i64: 1, 1, 16>}, {pipeline_mode = #tpu.pipeline_mode<synchronous>, transform_indices = @transform_2, window_bounds = array<i64: 1, 32>}, {pipeline_mode = #tpu.pipeline_mode<synchronous>, transform_indices = @transform_3, window_bounds = array<i64: 1, 32>}, {pipeline_mode = #tpu.pipeline_mode<synchronous>, transform_indices = @transform_4, window_bounds = array<i64: 32, 96>}, {pipeline_mode = #tpu.pipeline_mode<synchronous>, transform_indices = @transform_5, window_bounds = array<i64: 1, 96>}, {pipeline_mode = #tpu.pipeline_mode<synchronous>, transform_indices = @transform_6, window_bounds = array<i64: 32, 32>}, {pipeline_mode = #tpu.pipeline_mode<synchronous>, transform_indices = @transform_7, window_bounds = array<i64: 1, 32>}, {pipeline_mode = #tpu.pipeline_mode<synchronous>, transform_indices = @transform_8, window_bounds = array<i64: 1, 32>}, {pipeline_mode = #tpu.pipeline_mode<synchronous>, transform_indices = @transform_9, window_bounds = array<i64: 1, 32>}, {pipeline_mode = #tpu.pipeline_mode<synchronous>, transform_indices = @transform_10, window_bounds = array<i64: 32, 128>}, {pipeline_mode = #tpu.pipeline_mode<synchronous>, transform_indices = @transform_11, window_bounds = array<i64: 1, 128>}, {pipeline_mode = #tpu.pipeline_mode<synchronous>, transform_indices = @transform_12, window_bounds = array<i64: 128, 32>}, {pipeline_mode = #tpu.pipeline_mode<synchronous>, transform_indices = @transform_13, window_bounds = array<i64: 1, 32>}, {transform_indices = @transform_14, window_bounds = array<i64: 1, 16, 32>}]} {
    %c0 = arith.constant 0 : index
    %c0_0 = arith.constant 0 : index
    %c0_1 = arith.constant 0 : index
    %0 = vector.load %arg1[%c0, %c0_0, %c0_1] : memref<1x16x32xf32, #tpu.memory_space<vmem>>, vector<1x16x32xf32>
    %1 = vector.shape_cast %0 : vector<1x16x32xf32> to vector<16x32xf32>
    %c0_2 = arith.constant 0 : index
    %c0_3 = arith.constant 0 : index
    %c0_4 = arith.constant 0 : index
    %2 = vector.load %arg2[%c0_2, %c0_3, %c0_4] : memref<1x1x16xf32, #tpu.memory_space<vmem>>, vector<1x1x16xf32>
    %cst = arith.constant 5.000000e-01 : f32
    %3 = vector.broadcast %cst : f32 to vector<1x1x16xf32>
    %4 = arith.cmpf ogt, %2, %3 : vector<1x1x16xf32>
    %cst_5 = arith.constant 0.000000e+00 : f32
    %cst_6 = arith.constant -1.000000e+30 : f32
    %5 = vector.broadcast %cst_5 : f32 to vector<1x1x16xf32>
    %6 = vector.broadcast %cst_6 : f32 to vector<1x1x16xf32>
    %7 = arith.select %4, %5, %6 : vector<1x1x16xi1>, vector<1x1x16xf32>
    %c0_7 = arith.constant 0 : index
    %c0_8 = arith.constant 0 : index
    %8 = vector.load %arg3[%c0_7, %c0_8] : memref<1x32xf32, #tpu.memory_space<vmem>>, vector<1x32xf32>
    %9 = vector.shape_cast %8 : vector<1x32xf32> to vector<32xf32>
    %c0_9 = arith.constant 0 : index
    %c0_10 = arith.constant 0 : index
    %10 = vector.load %arg4[%c0_9, %c0_10] : memref<1x32xf32, #tpu.memory_space<vmem>>, vector<1x32xf32>
    %11 = vector.shape_cast %10 : vector<1x32xf32> to vector<32xf32>
    %cst_11 = arith.constant dense<0.000000e+00> : vector<16xf32>
    %12 = vector.multi_reduction <add>, %1, %cst_11 [1] : vector<16x32xf32> to vector<16xf32>
    %13 = vector.shape_cast %12 : vector<16xf32> to vector<16x1xf32>
    %cst_12 = arith.constant 3.200000e+01 : f32
    %14 = vector.broadcast %cst_12 : f32 to vector<16x1xf32>
    %15 = arith.divf %13, %14 : vector<16x1xf32>
    %16 = vector.broadcast %15 : vector<16x1xf32> to vector<16x32xf32>
    %17 = arith.subf %1, %16 : vector<16x32xf32>
    %18 = arith.mulf %17, %17 : vector<16x32xf32>
    %cst_13 = arith.constant dense<0.000000e+00> : vector<16xf32>
    %19 = vector.multi_reduction <add>, %18, %cst_13 [1] : vector<16x32xf32> to vector<16xf32>
    %20 = vector.shape_cast %19 : vector<16xf32> to vector<16x1xf32>
    %cst_14 = arith.constant 3.200000e+01 : f32
    %21 = vector.broadcast %cst_14 : f32 to vector<16x1xf32>
    %22 = arith.divf %20, %21 : vector<16x1xf32>
    %23 = vector.broadcast %15 : vector<16x1xf32> to vector<16x32xf32>
    %24 = arith.subf %1, %23 : vector<16x32xf32>
    %cst_15 = arith.constant 9.99999974E-6 : f32
    %25 = vector.broadcast %cst_15 : f32 to vector<16x1xf32>
    %26 = arith.addf %22, %25 : vector<16x1xf32>
    %27 = math.rsqrt %26 : vector<16x1xf32>
    %28 = vector.broadcast %27 : vector<16x1xf32> to vector<16x32xf32>
    %29 = arith.mulf %24, %28 : vector<16x32xf32>
    %30 = vector.shape_cast %9 : vector<32xf32> to vector<1x32xf32>
    %31 = vector.broadcast %30 : vector<1x32xf32> to vector<16x32xf32>
    %32 = arith.mulf %29, %31 : vector<16x32xf32>
    %33 = vector.shape_cast %11 : vector<32xf32> to vector<1x32xf32>
    %34 = vector.broadcast %33 : vector<1x32xf32> to vector<16x32xf32>
    %35 = arith.addf %32, %34 : vector<16x32xf32>
    %36 = arith.truncf %35 : vector<16x32xf32> to vector<16x32xbf16>
    %c0_16 = arith.constant 0 : index
    %c0_17 = arith.constant 0 : index
    %37 = vector.load %arg5[%c0_16, %c0_17] : memref<32x96xbf16, #tpu.memory_space<vmem>>, vector<32x96xbf16>
    %cst_18 = arith.constant dense<0.000000e+00> : vector<16x96xf32>
    %38 = tpu.matmul %36, %37, %cst_18 {dimension_numbers = #tpu.dot_dimension_numbers<[1], [0], [0], [1], [0, 0, 1, 1], [], []>} : vector<16x32xbf16>, vector<32x96xbf16>, vector<16x96xf32> -> vector<16x96xf32>
    %c0_19 = arith.constant 0 : index
    %c0_20 = arith.constant 0 : index
    %39 = vector.load %arg6[%c0_19, %c0_20] : memref<1x96xf32, #tpu.memory_space<vmem>>, vector<1x96xf32>
    %40 = vector.shape_cast %39 : vector<1x96xf32> to vector<96xf32>
    %41 = vector.extract_strided_slice %38 {offsets = [0, 0], sizes = [16, 8], strides = [1, 1]} : vector<16x96xf32> to vector<16x8xf32>
    %42 = vector.extract_strided_slice %40 {offsets = [0], sizes = [8], strides = [1]} : vector<96xf32> to vector<8xf32>
    %43 = vector.shape_cast %42 : vector<8xf32> to vector<1x8xf32>
    %44 = vector.broadcast %43 : vector<1x8xf32> to vector<16x8xf32>
    %45 = arith.addf %41, %44 : vector<16x8xf32>
    %46 = arith.truncf %45 : vector<16x8xf32> to vector<16x8xbf16>
    %47 = vector.shape_cast %46 : vector<16x8xbf16> to vector<1x16x8xbf16>
    %48 = vector.extract_strided_slice %38 {offsets = [0, 32], sizes = [16, 8], strides = [1, 1]} : vector<16x96xf32> to vector<16x8xf32>
    %49 = vector.extract_strided_slice %40 {offsets = [32], sizes = [8], strides = [1]} : vector<96xf32> to vector<8xf32>
    %50 = vector.shape_cast %49 : vector<8xf32> to vector<1x8xf32>
    %51 = vector.broadcast %50 : vector<1x8xf32> to vector<16x8xf32>
    %52 = arith.addf %48, %51 : vector<16x8xf32>
    %53 = arith.truncf %52 : vector<16x8xf32> to vector<16x8xbf16>
    %54 = vector.shape_cast %53 : vector<16x8xbf16> to vector<1x16x8xbf16>
    %55 = vector.extract_strided_slice %38 {offsets = [0, 64], sizes = [16, 8], strides = [1, 1]} : vector<16x96xf32> to vector<16x8xf32>
    %56 = vector.extract_strided_slice %40 {offsets = [64], sizes = [8], strides = [1]} : vector<96xf32> to vector<8xf32>
    %57 = vector.shape_cast %56 : vector<8xf32> to vector<1x8xf32>
    %58 = vector.broadcast %57 : vector<1x8xf32> to vector<16x8xf32>
    %59 = arith.addf %55, %58 : vector<16x8xf32>
    %60 = arith.truncf %59 : vector<16x8xf32> to vector<16x8xbf16>
    %61 = vector.shape_cast %60 : vector<16x8xbf16> to vector<1x16x8xbf16>
    "tpu.trace_start"() <{level = 10 : i32, message = "bqd,bkd->bqk"}> : () -> ()
    %cst_21 = arith.constant dense<0.000000e+00> : vector<1x16x16xf32>
    %62 = tpu.matmul %47, %54, %cst_21 {dimension_numbers = #tpu.dot_dimension_numbers<[2], [2], [1], [1], [0, 0, 0, 1, 1, 1], [0], [0]>} : vector<1x16x8xbf16>, vector<1x16x8xbf16>, vector<1x16x16xf32> -> vector<1x16x16xf32>
    "tpu.trace_stop"() : () -> ()
    %63 = vector.broadcast %7 : vector<1x1x16xf32> to vector<1x16x16xf32>
    %64 = arith.addf %62, %63 : vector<1x16x16xf32>
    %cst_22 = arith.constant dense<0xFF800000> : vector<1x16xf32>
    %65 = vector.multi_reduction <maximumf>, %64, %cst_22 [2] : vector<1x16x16xf32> to vector<1x16xf32>
    %66 = vector.shape_cast %65 : vector<1x16xf32> to vector<1x16x1xf32>
    %67 = vector.broadcast %66 : vector<1x16x1xf32> to vector<1x16x16xf32>
    %68 = arith.subf %64, %67 : vector<1x16x16xf32>
    %69 = math.exp %68 : vector<1x16x16xf32>
    %cst_23 = arith.constant dense<0.000000e+00> : vector<1x16xf32>
    %70 = vector.multi_reduction <add>, %69, %cst_23 [2] : vector<1x16x16xf32> to vector<1x16xf32>
    %71 = vector.shape_cast %70 : vector<1x16xf32> to vector<1x16x1xf32>
    %72 = tpu.reciprocal %71 {approx = true} : vector<1x16x1xf32> -> vector<1x16x1xf32>
    %73 = vector.broadcast %72 : vector<1x16x1xf32> to vector<1x16x16xf32>
    %74 = arith.mulf %69, %73 : vector<1x16x16xf32>
    %75 = arith.truncf %74 : vector<1x16x16xf32> to vector<1x16x16xbf16>
    "tpu.trace_start"() <{level = 10 : i32, message = "bqk,bkd->bqd"}> : () -> ()
    %cst_24 = arith.constant dense<0.000000e+00> : vector<1x16x8xf32>
    %76 = tpu.matmul %75, %61, %cst_24 {dimension_numbers = #tpu.dot_dimension_numbers<[2], [1], [1], [2], [0, 0, 0, 1, 1, 2], [0], [0]>} : vector<1x16x16xbf16>, vector<1x16x8xbf16>, vector<1x16x8xf32> -> vector<1x16x8xf32>
    "tpu.trace_stop"() : () -> ()
    %77 = vector.shape_cast %76 : vector<1x16x8xf32> to vector<16x8xf32>
    %78 = arith.truncf %77 : vector<16x8xf32> to vector<16x8xbf16>
    %c0_25 = arith.constant 0 : index
    %c0_26 = arith.constant 0 : index
    %79 = vector.load %arg16[%c0_25, %c0_26] : memref<16x32xbf16, #tpu.memory_space<vmem>>, vector<16x8xbf16>
    tpu.vector_store %arg16[%c0_25, %c0_26], %78 {strides = array<i32>} : memref<16x32xbf16, #tpu.memory_space<vmem>>, vector<16x8xbf16>,
    %80 = vector.extract_strided_slice %38 {offsets = [0, 8], sizes = [16, 8], strides = [1, 1]} : vector<16x96xf32> to vector<16x8xf32>
    %81 = vector.extract_strided_slice %40 {offsets = [8], sizes = [8], strides = [1]} : vector<96xf32> to vector<8xf32>
    %82 = vector.shape_cast %81 : vector<8xf32> to vector<1x8xf32>
    %83 = vector.broadcast %82 : vector<1x8xf32> to vector<16x8xf32>
    %84 = arith.addf %80, %83 : vector<16x8xf32>
    %85 = arith.truncf %84 : vector<16x8xf32> to vector<16x8xbf16>
    %86 = vector.shape_cast %85 : vector<16x8xbf16> to vector<1x16x8xbf16>
    %87 = vector.extract_strided_slice %38 {offsets = [0, 40], sizes = [16, 8], strides = [1, 1]} : vector<16x96xf32> to vector<16x8xf32>
    %88 = vector.extract_strided_slice %40 {offsets = [40], sizes = [8], strides = [1]} : vector<96xf32> to vector<8xf32>
    %89 = vector.shape_cast %88 : vector<8xf32> to vector<1x8xf32>
    %90 = vector.broadcast %89 : vector<1x8xf32> to vector<16x8xf32>
    %91 = arith.addf %87, %90 : vector<16x8xf32>
    %92 = arith.truncf %91 : vector<16x8xf32> to vector<16x8xbf16>
    %93 = vector.shape_cast %92 : vector<16x8xbf16> to vector<1x16x8xbf16>
    %94 = vector.extract_strided_slice %38 {offsets = [0, 72], sizes = [16, 8], strides = [1, 1]} : vector<16x96xf32> to vector<16x8xf32>
    %95 = vector.extract_strided_slice %40 {offsets = [72], sizes = [8], strides = [1]} : vector<96xf32> to vector<8xf32>
    %96 = vector.shape_cast %95 : vector<8xf32> to vector<1x8xf32>
    %97 = vector.broadcast %96 : vector<1x8xf32> to vector<16x8xf32>
    %98 = arith.addf %94, %97 : vector<16x8xf32>
    %99 = arith.truncf %98 : vector<16x8xf32> to vector<16x8xbf16>
    %100 = vector.shape_cast %99 : vector<16x8xbf16> to vector<1x16x8xbf16>
    "tpu.trace_start"() <{level = 10 : i32, message = "bqd,bkd->bqk"}> : () -> ()
    %cst_27 = arith.constant dense<0.000000e+00> : vector<1x16x16xf32>
    %101 = tpu.matmul %86, %93, %cst_27 {dimension_numbers = #tpu.dot_dimension_numbers<[2], [2], [1], [1], [0, 0, 0, 1, 1, 1], [0], [0]>} : vector<1x16x8xbf16>, vector<1x16x8xbf16>, vector<1x16x16xf32> -> vector<1x16x16xf32>
    "tpu.trace_stop"() : () -> ()
    %102 = vector.broadcast %7 : vector<1x1x16xf32> to vector<1x16x16xf32>
    %103 = arith.addf %101, %102 : vector<1x16x16xf32>
    %cst_28 = arith.constant dense<0xFF800000> : vector<1x16xf32>
    %104 = vector.multi_reduction <maximumf>, %103, %cst_28 [2] : vector<1x16x16xf32> to vector<1x16xf32>
    %105 = vector.shape_cast %104 : vector<1x16xf32> to vector<1x16x1xf32>
    %106 = vector.broadcast %105 : vector<1x16x1xf32> to vector<1x16x16xf32>
    %107 = arith.subf %103, %106 : vector<1x16x16xf32>
    %108 = math.exp %107 : vector<1x16x16xf32>
    %cst_29 = arith.constant dense<0.000000e+00> : vector<1x16xf32>
    %109 = vector.multi_reduction <add>, %108, %cst_29 [2] : vector<1x16x16xf32> to vector<1x16xf32>
    %110 = vector.shape_cast %109 : vector<1x16xf32> to vector<1x16x1xf32>
    %111 = tpu.reciprocal %110 {approx = true} : vector<1x16x1xf32> -> vector<1x16x1xf32>
    %112 = vector.broadcast %111 : vector<1x16x1xf32> to vector<1x16x16xf32>
    %113 = arith.mulf %108, %112 : vector<1x16x16xf32>
    %114 = arith.truncf %113 : vector<1x16x16xf32> to vector<1x16x16xbf16>
    "tpu.trace_start"() <{level = 10 : i32, message = "bqk,bkd->bqd"}> : () -> ()
    %cst_30 = arith.constant dense<0.000000e+00> : vector<1x16x8xf32>
    %115 = tpu.matmul %114, %100, %cst_30 {dimension_numbers = #tpu.dot_dimension_numbers<[2], [1], [1], [2], [0, 0, 0, 1, 1, 2], [0], [0]>} : vector<1x16x16xbf16>, vector<1x16x8xbf16>, vector<1x16x8xf32> -> vector<1x16x8xf32>
    "tpu.trace_stop"() : () -> ()
    %116 = vector.shape_cast %115 : vector<1x16x8xf32> to vector<16x8xf32>
    %117 = arith.truncf %116 : vector<16x8xf32> to vector<16x8xbf16>
    %c0_31 = arith.constant 0 : index
    %c8 = arith.constant 8 : index
    %118 = vector.load %arg16[%c0_31, %c8] : memref<16x32xbf16, #tpu.memory_space<vmem>>, vector<16x8xbf16>
    tpu.vector_store %arg16[%c0_31, %c8], %117 {strides = array<i32>} : memref<16x32xbf16, #tpu.memory_space<vmem>>, vector<16x8xbf16>,
    %119 = vector.extract_strided_slice %38 {offsets = [0, 16], sizes = [16, 8], strides = [1, 1]} : vector<16x96xf32> to vector<16x8xf32>
    %120 = vector.extract_strided_slice %40 {offsets = [16], sizes = [8], strides = [1]} : vector<96xf32> to vector<8xf32>
    %121 = vector.shape_cast %120 : vector<8xf32> to vector<1x8xf32>
    %122 = vector.broadcast %121 : vector<1x8xf32> to vector<16x8xf32>
    %123 = arith.addf %119, %122 : vector<16x8xf32>
    %124 = arith.truncf %123 : vector<16x8xf32> to vector<16x8xbf16>
    %125 = vector.shape_cast %124 : vector<16x8xbf16> to vector<1x16x8xbf16>
    %126 = vector.extract_strided_slice %38 {offsets = [0, 48], sizes = [16, 8], strides = [1, 1]} : vector<16x96xf32> to vector<16x8xf32>
    %127 = vector.extract_strided_slice %40 {offsets = [48], sizes = [8], strides = [1]} : vector<96xf32> to vector<8xf32>
    %128 = vector.shape_cast %127 : vector<8xf32> to vector<1x8xf32>
    %129 = vector.broadcast %128 : vector<1x8xf32> to vector<16x8xf32>
    %130 = arith.addf %126, %129 : vector<16x8xf32>
    %131 = arith.truncf %130 : vector<16x8xf32> to vector<16x8xbf16>
    %132 = vector.shape_cast %131 : vector<16x8xbf16> to vector<1x16x8xbf16>
    %133 = vector.extract_strided_slice %38 {offsets = [0, 80], sizes = [16, 8], strides = [1, 1]} : vector<16x96xf32> to vector<16x8xf32>
    %134 = vector.extract_strided_slice %40 {offsets = [80], sizes = [8], strides = [1]} : vector<96xf32> to vector<8xf32>
    %135 = vector.shape_cast %134 : vector<8xf32> to vector<1x8xf32>
    %136 = vector.broadcast %135 : vector<1x8xf32> to vector<16x8xf32>
    %137 = arith.addf %133, %136 : vector<16x8xf32>
    %138 = arith.truncf %137 : vector<16x8xf32> to vector<16x8xbf16>
    %139 = vector.shape_cast %138 : vector<16x8xbf16> to vector<1x16x8xbf16>
    "tpu.trace_start"() <{level = 10 : i32, message = "bqd,bkd->bqk"}> : () -> ()
    %cst_32 = arith.constant dense<0.000000e+00> : vector<1x16x16xf32>
    %140 = tpu.matmul %125, %132, %cst_32 {dimension_numbers = #tpu.dot_dimension_numbers<[2], [2], [1], [1], [0, 0, 0, 1, 1, 1], [0], [0]>} : vector<1x16x8xbf16>, vector<1x16x8xbf16>, vector<1x16x16xf32> -> vector<1x16x16xf32>
    "tpu.trace_stop"() : () -> ()
    %141 = vector.broadcast %7 : vector<1x1x16xf32> to vector<1x16x16xf32>
    %142 = arith.addf %140, %141 : vector<1x16x16xf32>
    %cst_33 = arith.constant dense<0xFF800000> : vector<1x16xf32>
    %143 = vector.multi_reduction <maximumf>, %142, %cst_33 [2] : vector<1x16x16xf32> to vector<1x16xf32>
    %144 = vector.shape_cast %143 : vector<1x16xf32> to vector<1x16x1xf32>
    %145 = vector.broadcast %144 : vector<1x16x1xf32> to vector<1x16x16xf32>
    %146 = arith.subf %142, %145 : vector<1x16x16xf32>
    %147 = math.exp %146 : vector<1x16x16xf32>
    %cst_34 = arith.constant dense<0.000000e+00> : vector<1x16xf32>
    %148 = vector.multi_reduction <add>, %147, %cst_34 [2] : vector<1x16x16xf32> to vector<1x16xf32>
    %149 = vector.shape_cast %148 : vector<1x16xf32> to vector<1x16x1xf32>
    %150 = tpu.reciprocal %149 {approx = true} : vector<1x16x1xf32> -> vector<1x16x1xf32>
    %151 = vector.broadcast %150 : vector<1x16x1xf32> to vector<1x16x16xf32>
    %152 = arith.mulf %147, %151 : vector<1x16x16xf32>
    %153 = arith.truncf %152 : vector<1x16x16xf32> to vector<1x16x16xbf16>
    "tpu.trace_start"() <{level = 10 : i32, message = "bqk,bkd->bqd"}> : () -> ()
    %cst_35 = arith.constant dense<0.000000e+00> : vector<1x16x8xf32>
    %154 = tpu.matmul %153, %139, %cst_35 {dimension_numbers = #tpu.dot_dimension_numbers<[2], [1], [1], [2], [0, 0, 0, 1, 1, 2], [0], [0]>} : vector<1x16x16xbf16>, vector<1x16x8xbf16>, vector<1x16x8xf32> -> vector<1x16x8xf32>
    "tpu.trace_stop"() : () -> ()
    %155 = vector.shape_cast %154 : vector<1x16x8xf32> to vector<16x8xf32>
    %156 = arith.truncf %155 : vector<16x8xf32> to vector<16x8xbf16>
    %c0_36 = arith.constant 0 : index
    %c16 = arith.constant 16 : index
    %157 = vector.load %arg16[%c0_36, %c16] : memref<16x32xbf16, #tpu.memory_space<vmem>>, vector<16x8xbf16>
    tpu.vector_store %arg16[%c0_36, %c16], %156 {strides = array<i32>} : memref<16x32xbf16, #tpu.memory_space<vmem>>, vector<16x8xbf16>,
    %158 = vector.extract_strided_slice %38 {offsets = [0, 24], sizes = [16, 8], strides = [1, 1]} : vector<16x96xf32> to vector<16x8xf32>
    %159 = vector.extract_strided_slice %40 {offsets = [24], sizes = [8], strides = [1]} : vector<96xf32> to vector<8xf32>
    %160 = vector.shape_cast %159 : vector<8xf32> to vector<1x8xf32>
    %161 = vector.broadcast %160 : vector<1x8xf32> to vector<16x8xf32>
    %162 = arith.addf %158, %161 : vector<16x8xf32>
    %163 = arith.truncf %162 : vector<16x8xf32> to vector<16x8xbf16>
    %164 = vector.shape_cast %163 : vector<16x8xbf16> to vector<1x16x8xbf16>
    %165 = vector.extract_strided_slice %38 {offsets = [0, 56], sizes = [16, 8], strides = [1, 1]} : vector<16x96xf32> to vector<16x8xf32>
    %166 = vector.extract_strided_slice %40 {offsets = [56], sizes = [8], strides = [1]} : vector<96xf32> to vector<8xf32>
    %167 = vector.shape_cast %166 : vector<8xf32> to vector<1x8xf32>
    %168 = vector.broadcast %167 : vector<1x8xf32> to vector<16x8xf32>
    %169 = arith.addf %165, %168 : vector<16x8xf32>
    %170 = arith.truncf %169 : vector<16x8xf32> to vector<16x8xbf16>
    %171 = vector.shape_cast %170 : vector<16x8xbf16> to vector<1x16x8xbf16>
    %172 = vector.extract_strided_slice %38 {offsets = [0, 88], sizes = [16, 8], strides = [1, 1]} : vector<16x96xf32> to vector<16x8xf32>
    %173 = vector.extract_strided_slice %40 {offsets = [88], sizes = [8], strides = [1]} : vector<96xf32> to vector<8xf32>
    %174 = vector.shape_cast %173 : vector<8xf32> to vector<1x8xf32>
    %175 = vector.broadcast %174 : vector<1x8xf32> to vector<16x8xf32>
    %176 = arith.addf %172, %175 : vector<16x8xf32>
    %177 = arith.truncf %176 : vector<16x8xf32> to vector<16x8xbf16>
    %178 = vector.shape_cast %177 : vector<16x8xbf16> to vector<1x16x8xbf16>
    "tpu.trace_start"() <{level = 10 : i32, message = "bqd,bkd->bqk"}> : () -> ()
    %cst_37 = arith.constant dense<0.000000e+00> : vector<1x16x16xf32>
    %179 = tpu.matmul %164, %171, %cst_37 {dimension_numbers = #tpu.dot_dimension_numbers<[2], [2], [1], [1], [0, 0, 0, 1, 1, 1], [0], [0]>} : vector<1x16x8xbf16>, vector<1x16x8xbf16>, vector<1x16x16xf32> -> vector<1x16x16xf32>
    "tpu.trace_stop"() : () -> ()
    %180 = vector.broadcast %7 : vector<1x1x16xf32> to vector<1x16x16xf32>
    %181 = arith.addf %179, %180 : vector<1x16x16xf32>
    %cst_38 = arith.constant dense<0xFF800000> : vector<1x16xf32>
    %182 = vector.multi_reduction <maximumf>, %181, %cst_38 [2] : vector<1x16x16xf32> to vector<1x16xf32>
    %183 = vector.shape_cast %182 : vector<1x16xf32> to vector<1x16x1xf32>
    %184 = vector.broadcast %183 : vector<1x16x1xf32> to vector<1x16x16xf32>
    %185 = arith.subf %181, %184 : vector<1x16x16xf32>
    %186 = math.exp %185 : vector<1x16x16xf32>
    %cst_39 = arith.constant dense<0.000000e+00> : vector<1x16xf32>
    %187 = vector.multi_reduction <add>, %186, %cst_39 [2] : vector<1x16x16xf32> to vector<1x16xf32>
    %188 = vector.shape_cast %187 : vector<1x16xf32> to vector<1x16x1xf32>
    %189 = tpu.reciprocal %188 {approx = true} : vector<1x16x1xf32> -> vector<1x16x1xf32>
    %190 = vector.broadcast %189 : vector<1x16x1xf32> to vector<1x16x16xf32>
    %191 = arith.mulf %186, %190 : vector<1x16x16xf32>
    %192 = arith.truncf %191 : vector<1x16x16xf32> to vector<1x16x16xbf16>
    "tpu.trace_start"() <{level = 10 : i32, message = "bqk,bkd->bqd"}> : () -> ()
    %cst_40 = arith.constant dense<0.000000e+00> : vector<1x16x8xf32>
    %193 = tpu.matmul %192, %178, %cst_40 {dimension_numbers = #tpu.dot_dimension_numbers<[2], [1], [1], [2], [0, 0, 0, 1, 1, 2], [0], [0]>} : vector<1x16x16xbf16>, vector<1x16x8xbf16>, vector<1x16x8xf32> -> vector<1x16x8xf32>
    "tpu.trace_stop"() : () -> ()
    %194 = vector.shape_cast %193 : vector<1x16x8xf32> to vector<16x8xf32>
    %195 = arith.truncf %194 : vector<16x8xf32> to vector<16x8xbf16>
    %c0_41 = arith.constant 0 : index
    %c24 = arith.constant 24 : index
    %196 = vector.load %arg16[%c0_41, %c24] : memref<16x32xbf16, #tpu.memory_space<vmem>>, vector<16x8xbf16>
    tpu.vector_store %arg16[%c0_41, %c24], %195 {strides = array<i32>} : memref<16x32xbf16, #tpu.memory_space<vmem>>, vector<16x8xbf16>,
    %c0_42 = arith.constant 0 : index
    %c0_43 = arith.constant 0 : index
    %197 = vector.load %arg16[%c0_42, %c0_43] : memref<16x32xbf16, #tpu.memory_space<vmem>>, vector<16x32xbf16>
    %c0_44 = arith.constant 0 : index
    %c0_45 = arith.constant 0 : index
    %198 = vector.load %arg7[%c0_44, %c0_45] : memref<32x32xbf16, #tpu.memory_space<vmem>>, vector<32x32xbf16>
    %cst_46 = arith.constant dense<0.000000e+00> : vector<16x32xf32>
    %199 = tpu.matmul %197, %198, %cst_46 {dimension_numbers = #tpu.dot_dimension_numbers<[1], [0], [0], [1], [0, 0, 1, 1], [], []>} : vector<16x32xbf16>, vector<32x32xbf16>, vector<16x32xf32> -> vector<16x32xf32>
    %200 = arith.addf %1, %199 : vector<16x32xf32>
    %c0_47 = arith.constant 0 : index
    %c0_48 = arith.constant 0 : index
    %201 = vector.load %arg8[%c0_47, %c0_48] : memref<1x32xf32, #tpu.memory_space<vmem>>, vector<1x32xf32>
    %202 = vector.shape_cast %201 : vector<1x32xf32> to vector<32xf32>
    %203 = vector.shape_cast %202 : vector<32xf32> to vector<1x32xf32>
    %204 = vector.broadcast %203 : vector<1x32xf32> to vector<16x32xf32>
    %205 = arith.addf %200, %204 : vector<16x32xf32>
    %c0_49 = arith.constant 0 : index
    %c0_50 = arith.constant 0 : index
    %206 = vector.load %arg9[%c0_49, %c0_50] : memref<1x32xf32, #tpu.memory_space<vmem>>, vector<1x32xf32>
    %207 = vector.shape_cast %206 : vector<1x32xf32> to vector<32xf32>
    %c0_51 = arith.constant 0 : index
    %c0_52 = arith.constant 0 : index
    %208 = vector.load %arg10[%c0_51, %c0_52] : memref<1x32xf32, #tpu.memory_space<vmem>>, vector<1x32xf32>
    %209 = vector.shape_cast %208 : vector<1x32xf32> to vector<32xf32>
    %cst_53 = arith.constant dense<0.000000e+00> : vector<16xf32>
    %210 = vector.multi_reduction <add>, %205, %cst_53 [1] : vector<16x32xf32> to vector<16xf32>
    %211 = vector.shape_cast %210 : vector<16xf32> to vector<16x1xf32>
    %cst_54 = arith.constant 3.200000e+01 : f32
    %212 = vector.broadcast %cst_54 : f32 to vector<16x1xf32>
    %213 = arith.divf %211, %212 : vector<16x1xf32>
    %214 = vector.broadcast %213 : vector<16x1xf32> to vector<16x32xf32>
    %215 = arith.subf %205, %214 : vector<16x32xf32>
    %216 = arith.mulf %215, %215 : vector<16x32xf32>
    %cst_55 = arith.constant dense<0.000000e+00> : vector<16xf32>
    %217 = vector.multi_reduction <add>, %216, %cst_55 [1] : vector<16x32xf32> to vector<16xf32>
    %218 = vector.shape_cast %217 : vector<16xf32> to vector<16x1xf32>
    %cst_56 = arith.constant 3.200000e+01 : f32
    %219 = vector.broadcast %cst_56 : f32 to vector<16x1xf32>
    %220 = arith.divf %218, %219 : vector<16x1xf32>
    %221 = vector.broadcast %213 : vector<16x1xf32> to vector<16x32xf32>
    %222 = arith.subf %205, %221 : vector<16x32xf32>
    %cst_57 = arith.constant 9.99999974E-6 : f32
    %223 = vector.broadcast %cst_57 : f32 to vector<16x1xf32>
    %224 = arith.addf %220, %223 : vector<16x1xf32>
    %225 = math.rsqrt %224 : vector<16x1xf32>
    %226 = vector.broadcast %225 : vector<16x1xf32> to vector<16x32xf32>
    %227 = arith.mulf %222, %226 : vector<16x32xf32>
    %228 = vector.shape_cast %207 : vector<32xf32> to vector<1x32xf32>
    %229 = vector.broadcast %228 : vector<1x32xf32> to vector<16x32xf32>
    %230 = arith.mulf %227, %229 : vector<16x32xf32>
    %231 = vector.shape_cast %209 : vector<32xf32> to vector<1x32xf32>
    %232 = vector.broadcast %231 : vector<1x32xf32> to vector<16x32xf32>
    %233 = arith.addf %230, %232 : vector<16x32xf32>
    %234 = arith.truncf %233 : vector<16x32xf32> to vector<16x32xbf16>
    %cst_58 = arith.constant 0.000000e+00 : f32
    %235 = vector.broadcast %cst_58 : f32 to vector<16x32xf32>
    %c0_59 = arith.constant 0 : index
    %c0_60 = arith.constant 0 : index
    %236 = vector.load %arg11[%c0_59, %c0_60] : memref<32x128xbf16, #tpu.memory_space<vmem>>, vector<32x128xbf16>
    %cst_61 = arith.constant dense<0.000000e+00> : vector<16x128xf32>
    %237 = tpu.matmul %234, %236, %cst_61 {dimension_numbers = #tpu.dot_dimension_numbers<[1], [0], [0], [1], [0, 0, 1, 1], [], []>} : vector<16x32xbf16>, vector<32x128xbf16>, vector<16x128xf32> -> vector<16x128xf32>
    %c0_62 = arith.constant 0 : index
    %c0_63 = arith.constant 0 : index
    %238 = vector.load %arg12[%c0_62, %c0_63] : memref<1x128xf32, #tpu.memory_space<vmem>>, vector<1x128xf32>
    %239 = vector.broadcast %238 : vector<1x128xf32> to vector<16x128xf32>
    %240 = arith.addf %237, %239 : vector<16x128xf32>
    %cst_64 = arith.constant 1.702000e+00 : f32
    %241 = vector.broadcast %cst_64 : f32 to vector<16x128xf32>
    %242 = arith.mulf %241, %240 : vector<16x128xf32>
    %243 = arith.negf %242 : vector<16x128xf32>
    %244 = math.exp %243 : vector<16x128xf32>
    %cst_65 = arith.constant 1.000000e+00 : f32
    %245 = vector.broadcast %cst_65 : f32 to vector<16x128xf32>
    %246 = arith.addf %245, %244 : vector<16x128xf32>
    %247 = arith.divf %245, %246 : vector<16x128xf32>
    %248 = arith.mulf %240, %247 : vector<16x128xf32>
    %249 = arith.truncf %248 : vector<16x128xf32> to vector<16x128xbf16>
    %c0_66 = arith.constant 0 : index
    %c0_67 = arith.constant 0 : index
    %250 = vector.load %arg13[%c0_66, %c0_67] : memref<128x32xbf16, #tpu.memory_space<vmem>>, vector<128x32xbf16>
    %cst_68 = arith.constant dense<0.000000e+00> : vector<16x32xf32>
    %251 = tpu.matmul %249, %250, %cst_68 {dimension_numbers = #tpu.dot_dimension_numbers<[1], [0], [0], [1], [0, 0, 1, 1], [], []>} : vector<16x128xbf16>, vector<128x32xbf16>, vector<16x32xf32> -> vector<16x32xf32>
    %252 = arith.addf %235, %251 : vector<16x32xf32>
    %253 = arith.addf %205, %252 : vector<16x32xf32>
    %c0_69 = arith.constant 0 : index
    %c0_70 = arith.constant 0 : index
    %254 = vector.load %arg14[%c0_69, %c0_70] : memref<1x32xf32, #tpu.memory_space<vmem>>, vector<1x32xf32>
    %255 = vector.shape_cast %254 : vector<1x32xf32> to vector<32xf32>
    %256 = vector.shape_cast %255 : vector<32xf32> to vector<1x32xf32>
    %257 = vector.broadcast %256 : vector<1x32xf32> to vector<16x32xf32>
    %258 = arith.addf %253, %257 : vector<16x32xf32>
    %259 = vector.shape_cast %258 : vector<16x32xf32> to vector<1x16x32xf32>
    %c0_71 = arith.constant 0 : index
    %c0_72 = arith.constant 0 : index
    %c0_73 = arith.constant 0 : index
    %260 = vector.load %arg15[%c0_71, %c0_72, %c0_73] : memref<1x16x32xf32, #tpu.memory_space<vmem>>, vector<1x16x32xf32>
    tpu.vector_store %arg15[%c0_71, %c0_72, %c0_73], %259 {strides = array<i32>} : memref<1x16x32xf32, #tpu.memory_space<vmem>>, vector<1x16x32xf32>,
    return
  }
  func.func @transform_0(%arg0: i32) -> (i32, i32, i32) {
    %c0_i32 = arith.constant 0 : i32
    %c0_i32_0 = arith.constant 0 : i32
    %c0_i32_1 = arith.constant 0 : i32
    return %arg0, %c0_i32, %c0_i32_0 : i32, i32, i32
  }
  func.func @transform_1(%arg0: i32) -> (i32, i32, i32) {
    %c0_i32 = arith.constant 0 : i32
    %c0_i32_0 = arith.constant 0 : i32
    %c0_i32_1 = arith.constant 0 : i32
    return %arg0, %c0_i32, %c0_i32_0 : i32, i32, i32
  }
  func.func @transform_2(%arg0: i32) -> (i32, i32) {
    %c0_i32 = arith.constant 0 : i32
    %c0_i32_0 = arith.constant 0 : i32
    %c0_i32_1 = arith.constant 0 : i32
    return %c0_i32, %c0_i32_0 : i32, i32
  }
  func.func @transform_3(%arg0: i32) -> (i32, i32) {
    %c0_i32 = arith.constant 0 : i32
    %c0_i32_0 = arith.constant 0 : i32
    %c0_i32_1 = arith.constant 0 : i32
    return %c0_i32, %c0_i32_0 : i32, i32
  }
  func.func @transform_4(%arg0: i32) -> (i32, i32) {
    %c0_i32 = arith.constant 0 : i32
    %c0_i32_0 = arith.constant 0 : i32
    %c0_i32_1 = arith.constant 0 : i32
    return %c0_i32, %c0_i32_0 : i32, i32
  }
  func.func @transform_5(%arg0: i32) -> (i32, i32) {
    %c0_i32 = arith.constant 0 : i32
    %c0_i32_0 = arith.constant 0 : i32
    %c0_i32_1 = arith.constant 0 : i32
    return %c0_i32, %c0_i32_0 : i32, i32
  }
  func.func @transform_6(%arg0: i32) -> (i32, i32) {
    %c0_i32 = arith.constant 0 : i32
    %c0_i32_0 = arith.constant 0 : i32
    %c0_i32_1 = arith.constant 0 : i32
    return %c0_i32, %c0_i32_0 : i32, i32
  }
  func.func @transform_7(%arg0: i32) -> (i32, i32) {
    %c0_i32 = arith.constant 0 : i32
    %c0_i32_0 = arith.constant 0 : i32
    %c0_i32_1 = arith.constant 0 : i32
    return %c0_i32, %c0_i32_0 : i32, i32
  }
  func.func @transform_8(%arg0: i32) -> (i32, i32) {
    %c0_i32 = arith.constant 0 : i32
    %c0_i32_0 = arith.constant 0 : i32
    %c0_i32_1 = arith.constant 0 : i32
    return %c0_i32, %c0_i32_0 : i32, i32
  }
  func.func @transform_9(%arg0: i32) -> (i32, i32) {
    %c0_i32 = arith.constant 0 : i32
    %c0_i32_0 = arith.constant 0 : i32
    %c0_i32_1 = arith.constant 0 : i32
    return %c0_i32, %c0_i32_0 : i32, i32
  }
  func.func @transform_10(%arg0: i32) -> (i32, i32) {
    %c0_i32 = arith.constant 0 : i32
    %c0_i32_0 = arith.constant 0 : i32
    %c0_i32_1 = arith.constant 0 : i32
    return %c0_i32, %c0_i32_0 : i32, i32
  }
  func.func @transform_11(%arg0: i32) -> (i32, i32) {
    %c0_i32 = arith.constant 0 : i32
    %c0_i32_0 = arith.constant 0 : i32
    %c0_i32_1 = arith.constant 0 : i32
    return %c0_i32, %c0_i32_0 : i32, i32
  }
  func.func @transform_12(%arg0: i32) -> (i32, i32) {
    %c0_i32 = arith.constant 0 : i32
    %c0_i32_0 = arith.constant 0 : i32
    %c0_i32_1 = arith.constant 0 : i32
    return %c0_i32, %c0_i32_0 : i32, i32
  }
  func.func @transform_13(%arg0: i32) -> (i32, i32) {
    %c0_i32 = arith.constant 0 : i32
    %c0_i32_0 = arith.constant 0 : i32
    %c0_i32_1 = arith.constant 0 : i32
    return %c0_i32, %c0_i32_0 : i32, i32
  }
  func.func @transform_14(%arg0: i32) -> (i32, i32, i32) {
    %c0_i32 = arith.constant 0 : i32
    %c0_i32_0 = arith.constant 0 : i32
    %c0_i32_1 = arith.constant 0 : i32
    return %arg0, %c0_i32, %c0_i32_0 : i32, i32, i32
  }
}

</mosaic_0001>

<llo_original>
// kernel: tpu_custom_call.1
$region0: #{tpu_custom_call.1}
  #allocation0 [shape = 'u32[]', space=smem, size = 0x4, offset = 0x4, fixed_abs, tag = 'smem constant byte address 0x4 - core index']
  #allocation1 [shape = 'u32[144,128]{1,0:T(1,128)}', space=vmem, size = 0x12000, scoped, tag = 'internal scratch']
  #allocation2 [shape = 'bf16[16,32]{1,0:T(16,128)(2,1)}', space=vmem, size = 0x1000, scoped, tag = 'scratch operand']
  %s0 = inlined_call_operand.vmem [shape: f32[2,16,32], index: 0, kind: input, shape index: {}]
  %s1 = inlined_call_operand.vmem [shape: f32[2,1,16], index: 1, kind: input, shape index: {}]
  %s2 = inlined_call_operand.vmem [shape: f32[1,32], index: 2, kind: input, shape index: {}]
  %s3 = inlined_call_operand.vmem [shape: f32[1,32], index: 3, kind: input, shape index: {}]
  %s4 = inlined_call_operand.vmem [shape: bf16[32,96], index: 4, kind: input, shape index: {}]
  %s5 = inlined_call_operand.vmem [shape: f32[1,96], index: 5, kind: input, shape index: {}]
  %s6 = inlined_call_operand.vmem [shape: bf16[32,32], index: 6, kind: input, shape index: {}]
  %s7 = inlined_call_operand.vmem [shape: f32[1,32], index: 7, kind: input, shape index: {}]
  %s8 = inlined_call_operand.vmem [shape: f32[1,32], index: 8, kind: input, shape index: {}]
  %s9 = inlined_call_operand.vmem [shape: f32[1,32], index: 9, kind: input, shape index: {}]
  %s10 = inlined_call_operand.vmem [shape: bf16[32,128], index: 10, kind: input, shape index: {}]
  %s11 = inlined_call_operand.vmem [shape: f32[1,128], index: 11, kind: input, shape index: {}]
  %s12 = inlined_call_operand.vmem [shape: bf16[128,32], index: 12, kind: input, shape index: {}]
  %s13 = inlined_call_operand.vmem [shape: f32[1,32], index: 13, kind: input, shape index: {}]
  %s14 = inlined_call_operand.hbm [shape: f32[2,16,32], index: 14, kind: output, shape index: {}]
  %s15 = sld [smem:[#allocation0]]
  $region89: #{tpu_custom_call.1} parent=0
    _
  %s17 = ssub.s32 1, %s15
  %s18 = scalar_select 0, %s17, %s15
  $region1: #{tpu_custom_call.1} parent=0
    #allocation3 [shape = 'u8[16384]{0}', space=vmem, size = 0x4000, scoped, tag = 'output window, operand 0']
    #allocation4 [shape = 's32[2]{0}', space=sflag, size = 0x8, scoped, tag = 'scoped memory for tpu_custom_call.1']
    %19 = vsyncpa [#allocation4], 0
    %s20 = scalar_lea.sflag [#allocation4], 1
    %21 = vsyncpa %s20, 0
    loop: start=0, step=1, limit=4
    $region2: #{tpu_custom_call.1} parent=1 // loop_pre_header
      _
    $region3: #{tpu_custom_call.1} parent=1 // loop_header
      %s23 = sphi 0, %s27
      %p24 = scmp.ge.s32.totalorder %s23, 4
      %s33 = sphi 0, %s35
      %s36 = sphi 0, %s33
      %s37 = sphi 0, %s36
      %s53 = sphi 0, %s37
      %s59 = sphi 0, %s61
      %s62 = sphi 0, %s59
      %s63 = sphi 0, %s62
      %s79 = sphi 0, %s63
      %s83 = sphi 0, %s83
      %s85 = sphi 0, %s83
      %s86 = sphi 0, %s85
      %s100 = sphi 0, %s86
      %s104 = sphi 0, %s104
      %s106 = sphi 0, %s104
      %s107 = sphi 0, %s106
      %s121 = sphi 0, %s107
      %s125 = sphi 0, %s125
      %s127 = sphi 0, %s125
      %s128 = sphi 0, %s127
      %s142 = sphi 0, %s128
      %s146 = sphi 0, %s146
      %s148 = sphi 0, %s146
      %s149 = sphi 0, %s148
      %s163 = sphi 0, %s149
      %s167 = sphi 0, %s167
      %s169 = sphi 0, %s167
      %s170 = sphi 0, %s169
      %s184 = sphi 0, %s170
      %s188 = sphi 0, %s188
      %s190 = sphi 0, %s188
      %s191 = sphi 0, %s190
      %s205 = sphi 0, %s191
      %s209 = sphi 0, %s209
      %s211 = sphi 0, %s209
      %s212 = sphi 0, %s211
      %s226 = sphi 0, %s212
      %s230 = sphi 0, %s230
      %s232 = sphi 0, %s230
      %s233 = sphi 0, %s232
      %s247 = sphi 0, %s233
      %s251 = sphi 0, %s251
      %s253 = sphi 0, %s251
      %s254 = sphi 0, %s253
      %s268 = sphi 0, %s254
      %s272 = sphi 0, %s272
      %s274 = sphi 0, %s272
      %s275 = sphi 0, %s274
      %s289 = sphi 0, %s275
      %s293 = sphi 0, %s293
      %s295 = sphi 0, %s293
      %s296 = sphi 0, %s295
      %s310 = sphi 0, %s296
      %s314 = sphi 0, %s314
      %s316 = sphi 0, %s314
      %s317 = sphi 0, %s316
      %s331 = sphi 0, %s317
      %s337 = sphi 0, %s339
      %s340 = sphi 0, %s337
      %s341 = sphi 0, %s340
      %s357 = sphi 0, %s341
    $region4: #{tpu_custom_call.1} parent=1 // loop_header_branch
      %26 = sbr.rel (%p24) target = $region8
    $region5: #{tpu_custom_call.1} parent=1 // loop_body
      %s28 = ssub.s32 %s23, 1
      %s29 = ssub.s32 %s23, 2
      %s30 = sadd.s32 %s23, 1
      %s31 = ssub.s32 %s23, %s30
      %p32 = scmp.eq.s32.totalorder %s31, 0
      %s34 = sadd.s32 %s33, 1
      %s35 = scalar_select %p32, %s33, %s34
      %p38 = pneg %p32
      %p39 = scmp.eq.s32.totalorder %s23, 1
      %p40 = por %p38, %p39
      %p41 = scmp.ne.s32.totalorder %s33, %s36
      %p42 = scmp.eq.s32.totalorder %s23, 0
      %p43 = por %p41, %p42
      %p44 = scmp.ne.s32.totalorder %s33, %s36
      %p45 = scmp.eq.s32.totalorder %s28, 1
      %p46 = por %p44, %p45
      %p47 = scmp.ne.s32.totalorder %s36, %s37
      %p48 = scmp.eq.s32.totalorder %s28, 0
      %p49 = por %p47, %p48
      %p50 = scmp.ne.s32.totalorder %s36, %s37
      %p51 = scmp.eq.s32.totalorder %s29, 1
      %p52 = por %p50, %p51
      %p54 = scmp.ne.s32.totalorder %s37, %s53
      %p55 = scmp.eq.s32.totalorder %s29, 0
      %p56 = por %p54, %p55
      %s57 = ssub.s32 %s23, %s30
      %p58 = scmp.eq.s32.totalorder %s57, 0
      %s60 = sadd.s32 %s59, 1
      %s61 = scalar_select %p58, %s59, %s60
      %p64 = pneg %p58
      %p65 = scmp.eq.s32.totalorder %s23, 1
      %p66 = por %p64, %p65
      %p67 = scmp.ne.s32.totalorder %s59, %s62
      %p68 = scmp.eq.s32.totalorder %s23, 0
      %p69 = por %p67, %p68
      %p70 = scmp.ne.s32.totalorder %s59, %s62
      %p71 = scmp.eq.s32.totalorder %s28, 1
      %p72 = por %p70, %p71
      %p73 = scmp.ne.s32.totalorder %s62, %s63
      %p74 = scmp.eq.s32.totalorder %s28, 0
      %p75 = por %p73, %p74
      %p76 = scmp.ne.s32.totalorder %s62, %s63
      %p77 = scmp.eq.s32.totalorder %s29, 1
      %p78 = por %p76, %p77
      %p80 = scmp.ne.s32.totalorder %s63, %s79
      %p81 = scmp.eq.s32.totalorder %s29, 0
      %p82 = por %p80, %p81
      %s84 = sadd.s32 %s83, 1
      %p87 = scmp.eq.s32.totalorder %s23, 1
      %p88 = scmp.ne.s32.totalorder %s83, %s85
      %p89 = scmp.eq.s32.totalorder %s23, 0
      %p90 = por %p88, %p89
      %p91 = scmp.ne.s32.totalorder %s83, %s85
      %p92 = scmp.eq.s32.totalorder %s28, 1
      %p93 = por %p91, %p92
      %p94 = scmp.ne.s32.totalorder %s85, %s86
      %p95 = scmp.eq.s32.totalorder %s28, 0
      %p96 = por %p94, %p95
      %p97 = scmp.ne.s32.totalorder %s85, %s86
      %p98 = scmp.eq.s32.totalorder %s29, 1
      %p99 = por %p97, %p98
      %p101 = scmp.ne.s32.totalorder %s86, %s100
      %p102 = scmp.eq.s32.totalorder %s29, 0
      %p103 = por %p101, %p102
      %s105 = sadd.s32 %s104, 1
      %p108 = scmp.eq.s32.totalorder %s23, 1
      %p109 = scmp.ne.s32.totalorder %s104, %s106
      %p110 = scmp.eq.s32.totalorder %s23, 0
      %p111 = por %p109, %p110
      %p112 = scmp.ne.s32.totalorder %s104, %s106
      %p113 = scmp.eq.s32.totalorder %s28, 1
      %p114 = por %p112, %p113
      %p115 = scmp.ne.s32.totalorder %s106, %s107
      %p116 = scmp.eq.s32.totalorder %s28, 0
      %p117 = por %p115, %p116
      %p118 = scmp.ne.s32.totalorder %s106, %s107
      %p119 = scmp.eq.s32.totalorder %s29, 1
      %p120 = por %p118, %p119
      %p122 = scmp.ne.s32.totalorder %s107, %s121
      %p123 = scmp.eq.s32.totalorder %s29, 0
      %p124 = por %p122, %p123
      %s126 = sadd.s32 %s125, 1
      %p129 = scmp.eq.s32.totalorder %s23, 1
      %p130 = scmp.ne.s32.totalorder %s125, %s127
      %p131 = scmp.eq.s32.totalorder %s23, 0
      %p132 = por %p130, %p131
      %p133 = scmp.ne.s32.totalorder %s125, %s127
      %p134 = scmp.eq.s32.totalorder %s28, 1
      %p135 = por %p133, %p134
      %p136 = scmp.ne.s32.totalorder %s127, %s128
      %p137 = scmp.eq.s32.totalorder %s28, 0
      %p138 = por %p136, %p137
      %p139 = scmp.ne.s32.totalorder %s127, %s128
      %p140 = scmp.eq.s32.totalorder %s29, 1
      %p141 = por %p139, %p140
      %p143 = scmp.ne.s32.totalorder %s128, %s142
      %p144 = scmp.eq.s32.totalorder %s29, 0
      %p145 = por %p143, %p144
      %s147 = sadd.s32 %s146, 1
      %p150 = scmp.eq.s32.totalorder %s23, 1
      %p151 = scmp.ne.s32.totalorder %s146, %s148
      %p152 = scmp.eq.s32.totalorder %s23, 0
      %p153 = por %p151, %p152
      %p154 = scmp.ne.s32.totalorder %s146, %s148
      %p155 = scmp.eq.s32.totalorder %s28, 1
      %p156 = por %p154, %p155
      %p157 = scmp.ne.s32.totalorder %s148, %s149
      %p158 = scmp.eq.s32.totalorder %s28, 0
      %p159 = por %p157, %p158
      %p160 = scmp.ne.s32.totalorder %s148, %s149
      %p161 = scmp.eq.s32.totalorder %s29, 1
      %p162 = por %p160, %p161
      %p164 = scmp.ne.s32.totalorder %s149, %s163
      %p165 = scmp.eq.s32.totalorder %s29, 0
      %p166 = por %p164, %p165
      %s168 = sadd.s32 %s167, 1
      %p171 = scmp.eq.s32.totalorder %s23, 1
      %p172 = scmp.ne.s32.totalorder %s167, %s169
      %p173 = scmp.eq.s32.totalorder %s23, 0
      %p174 = por %p172, %p173
      %p175 = scmp.ne.s32.totalorder %s167, %s169
      %p176 = scmp.eq.s32.totalorder %s28, 1
      %p177 = por %p175, %p176
      %p178 = scmp.ne.s32.totalorder %s169, %s170
      %p179 = scmp.eq.s32.totalorder %s28, 0
      %p180 = por %p178, %p179
      %p181 = scmp.ne.s32.totalorder %s169, %s170
      %p182 = scmp.eq.s32.totalorder %s29, 1
      %p183 = por %p181, %p182
      %p185 = scmp.ne.s32.totalorder %s170, %s184
      %p186 = scmp.eq.s32.totalorder %s29, 0
      %p187 = por %p185, %p186
      %s189 = sadd.s32 %s188, 1
      %p192 = scmp.eq.s32.totalorder %s23, 1
      %p193 = scmp.ne.s32.totalorder %s188, %s190
      %p194 = scmp.eq.s32.totalorder %s23, 0
      %p195 = por %p193, %p194
      %p196 = scmp.ne.s32.totalorder %s188, %s190
      %p197 = scmp.eq.s32.totalorder %s28, 1
      %p198 = por %p196, %p197
      %p199 = scmp.ne.s32.totalorder %s190, %s191
      %p200 = scmp.eq.s32.totalorder %s28, 0
      %p201 = por %p199, %p200
      %p202 = scmp.ne.s32.totalorder %s190, %s191
      %p203 = scmp.eq.s32.totalorder %s29, 1
      %p204 = por %p202, %p203
      %p206 = scmp.ne.s32.totalorder %s191, %s205
      %p207 = scmp.eq.s32.totalorder %s29, 0
      %p208 = por %p206, %p207
      %s210 = sadd.s32 %s209, 1
      %p213 = scmp.eq.s32.totalorder %s23, 1
      %p214 = scmp.ne.s32.totalorder %s209, %s211
      %p215 = scmp.eq.s32.totalorder %s23, 0
      %p216 = por %p214, %p215
      %p217 = scmp.ne.s32.totalorder %s209, %s211
      %p218 = scmp.eq.s32.totalorder %s28, 1
      %p219 = por %p217, %p218
      %p220 = scmp.ne.s32.totalorder %s211, %s212
      %p221 = scmp.eq.s32.totalorder %s28, 0
      %p222 = por %p220, %p221
      %p223 = scmp.ne.s32.totalorder %s211, %s212
      %p224 = scmp.eq.s32.totalorder %s29, 1
      %p225 = por %p223, %p224
      %p227 = scmp.ne.s32.totalorder %s212, %s226
      %p228 = scmp.eq.s32.totalorder %s29, 0
      %p229 = por %p227, %p228
      %s231 = sadd.s32 %s230, 1
      %p234 = scmp.eq.s32.totalorder %s23, 1
      %p235 = scmp.ne.s32.totalorder %s230, %s232
      %p236 = scmp.eq.s32.totalorder %s23, 0
      %p237 = por %p235, %p236
      %p238 = scmp.ne.s32.totalorder %s230, %s232
      %p239 = scmp.eq.s32.totalorder %s28, 1
      %p240 = por %p238, %p239
      %p241 = scmp.ne.s32.totalorder %s232, %s233
      %p242 = scmp.eq.s32.totalorder %s28, 0
      %p243 = por %p241, %p242
      %p244 = scmp.ne.s32.totalorder %s232, %s233
      %p245 = scmp.eq.s32.totalorder %s29, 1
      %p246 = por %p244, %p245
      %p248 = scmp.ne.s32.totalorder %s233, %s247
      %p249 = scmp.eq.s32.totalorder %s29, 0
      %p250 = por %p248, %p249
      %s252 = sadd.s32 %s251, 1
      %p255 = scmp.eq.s32.totalorder %s23, 1
      %p256 = scmp.ne.s32.totalorder %s251, %s253
      %p257 = scmp.eq.s32.totalorder %s23, 0
      %p258 = por %p256, %p257
      %p259 = scmp.ne.s32.totalorder %s251, %s253
      %p260 = scmp.eq.s32.totalorder %s28, 1
      %p261 = por %p259, %p260
      %p262 = scmp.ne.s32.totalorder %s253, %s254
      %p263 = scmp.eq.s32.totalorder %s28, 0
      %p264 = por %p262, %p263
      %p265 = scmp.ne.s32.totalorder %s253, %s254
      %p266 = scmp.eq.s32.totalorder %s29, 1
      %p267 = por %p265, %p266
      %p269 = scmp.ne.s32.totalorder %s254, %s268
      %p270 = scmp.eq.s32.totalorder %s29, 0
      %p271 = por %p269, %p270
      %s273 = sadd.s32 %s272, 1
      %p276 = scmp.eq.s32.totalorder %s23, 1
      %p277 = scmp.ne.s32.totalorder %s272, %s274
      %p278 = scmp.eq.s32.totalorder %s23, 0
      %p279 = por %p277, %p278
      %p280 = scmp.ne.s32.totalorder %s272, %s274
      %p281 = scmp.eq.s32.totalorder %s28, 1
      %p282 = por %p280, %p281
      %p283 = scmp.ne.s32.totalorder %s274, %s275
      %p284 = scmp.eq.s32.totalorder %s28, 0
      %p285 = por %p283, %p284
      %p286 = scmp.ne.s32.totalorder %s274, %s275
      %p287 = scmp.eq.s32.totalorder %s29, 1
      %p288 = por %p286, %p287
      %p290 = scmp.ne.s32.totalorder %s275, %s289
      %p291 = scmp.eq.s32.totalorder %s29, 0
      %p292 = por %p290, %p291
      %s294 = sadd.s32 %s293, 1
      %p297 = scmp.eq.s32.totalorder %s23, 1
      %p298 = scmp.ne.s32.totalorder %s293, %s295
      %p299 = scmp.eq.s32.totalorder %s23, 0
      %p300 = por %p298, %p299
      %p301 = scmp.ne.s32.totalorder %s293, %s295
      %p302 = scmp.eq.s32.totalorder %s28, 1
      %p303 = por %p301, %p302
      %p304 = scmp.ne.s32.totalorder %s295, %s296
      %p305 = scmp.eq.s32.totalorder %s28, 0
      %p306 = por %p304, %p305
      %p307 = scmp.ne.s32.totalorder %s295, %s296
      %p308 = scmp.eq.s32.totalorder %s29, 1
      %p309 = por %p307, %p308
      %p311 = scmp.ne.s32.totalorder %s296, %s310
      %p312 = scmp.eq.s32.totalorder %s29, 0
      %p313 = por %p311, %p312
      %s315 = sadd.s32 %s314, 1
      %p318 = scmp.eq.s32.totalorder %s23, 1
      %p319 = scmp.ne.s32.totalorder %s314, %s316
      %p320 = scmp.eq.s32.totalorder %s23, 0
      %p321 = por %p319, %p320
      %p322 = scmp.ne.s32.totalorder %s314, %s316
      %p323 = scmp.eq.s32.totalorder %s28, 1
      %p324 = por %p322, %p323
      %p325 = scmp.ne.s32.totalorder %s316, %s317
      %p326 = scmp.eq.s32.totalorder %s28, 0
      %p327 = por %p325, %p326
      %p328 = scmp.ne.s32.totalorder %s316, %s317
      %p329 = scmp.eq.s32.totalorder %s29, 1
      %p330 = por %p328, %p329
      %p332 = scmp.ne.s32.totalorder %s317, %s331
      %p333 = scmp.eq.s32.totalorder %s29, 0
      %p334 = por %p332, %p333
      %s335 = ssub.s32 %s23, %s30
      %p336 = scmp.eq.s32.totalorder %s335, 0
      %s338 = sadd.s32 %s337, 1
      %s339 = scalar_select %p336, %s337, %s338
      %p342 = pneg %p336
      %p343 = scmp.eq.s32.totalorder %s23, 1
      %p344 = por %p342, %p343
      %p345 = scmp.ne.s32.totalorder %s337, %s340
      %p346 = scmp.eq.s32.totalorder %s23, 0
      %p347 = por %p345, %p346
      %p348 = scmp.ne.s32.totalorder %s337, %s340
      %p349 = scmp.eq.s32.totalorder %s28, 1
      %p350 = por %p348, %p349
      %p351 = scmp.ne.s32.totalorder %s340, %s341
      %p352 = scmp.eq.s32.totalorder %s28, 0
      %p353 = por %p351, %p352
      %p354 = scmp.ne.s32.totalorder %s340, %s341
      %p355 = scmp.eq.s32.totalorder %s29, 1
      %p356 = por %p354, %p355
      %p358 = scmp.ne.s32.totalorder %s341, %s357
      %p359 = scmp.eq.s32.totalorder %s29, 0
      %p360 = por %p358, %p359
      %p361 = scmp.le.s32.totalorder 1, %s23
      %p362 = scmp.lt.s32.totalorder %s23, 3
      %p363 = pnand %p361, %p362
      %p364 = pneg %p363
      // Predicated region
      $region9: #{tpu_custom_call.1} parent=5 // pred_check
        _
      $region10: #{tpu_custom_call.1} parent=5 // pred_check_branch
        %366 = sbr.rel (%p363) target = $region12
      $region11: #{tpu_custom_call.1} parent=5 // pred_region
        %s367 = ssub.s32 %s23, 1
        // Predicated region
        $region13: #{tpu_custom_call.1} parent=11 // pred_check
          %p368 = pneg %p96
        $region14: #{tpu_custom_call.1} parent=11 // pred_check_branch
          %370 = sbr.rel (%p368) target = $region16
        $region15: #{tpu_custom_call.1} parent=11 // pred_region
          _
        $region16: #{tpu_custom_call.1} parent=11 // pred_fallthru
          _
        // Predicated region
        $region17: #{tpu_custom_call.1} parent=11 // pred_check
          %p371 = pneg %p117
        $region18: #{tpu_custom_call.1} parent=11 // pred_check_branch
          %373 = sbr.rel (%p371) target = $region20
        $region19: #{tpu_custom_call.1} parent=11 // pred_region
          _
        $region20: #{tpu_custom_call.1} parent=11 // pred_fallthru
          _
        // Predicated region
        $region21: #{tpu_custom_call.1} parent=11 // pred_check
          %p374 = pneg %p138
        $region22: #{tpu_custom_call.1} parent=11 // pred_check_branch
          %376 = sbr.rel (%p374) target = $region24
        $region23: #{tpu_custom_call.1} parent=11 // pred_region
          _
        $region24: #{tpu_custom_call.1} parent=11 // pred_fallthru
          _
        // Predicated region
        $region25: #{tpu_custom_call.1} parent=11 // pred_check
          %p377 = pneg %p159
        $region26: #{tpu_custom_call.1} parent=11 // pred_check_branch
          %379 = sbr.rel (%p377) target = $region28
        $region27: #{tpu_custom_call.1} parent=11 // pred_region
          _
        $region28: #{tpu_custom_call.1} parent=11 // pred_fallthru
          _
        // Predicated region
        $region29: #{tpu_custom_call.1} parent=11 // pred_check
          %p380 = pneg %p180
        $region30: #{tpu_custom_call.1} parent=11 // pred_check_branch
          %382 = sbr.rel (%p380) target = $region32
        $region31: #{tpu_custom_call.1} parent=11 // pred_region
          _
        $region32: #{tpu_custom_call.1} parent=11 // pred_fallthru
          _
        // Predicated region
        $region33: #{tpu_custom_call.1} parent=11 // pred_check
          %p383 = pneg %p201
        $region34: #{tpu_custom_call.1} parent=11 // pred_check_branch
          %385 = sbr.rel (%p383) target = $region36
        $region35: #{tpu_custom_call.1} parent=11 // pred_region
          _
        $region36: #{tpu_custom_call.1} parent=11 // pred_fallthru
          _
        // Predicated region
        $region37: #{tpu_custom_call.1} parent=11 // pred_check
          %p386 = pneg %p222
        $region38: #{tpu_custom_call.1} parent=11 // pred_check_branch
          %388 = sbr.rel (%p386) target = $region40
        $region39: #{tpu_custom_call.1} parent=11 // pred_region
          _
        $region40: #{tpu_custom_call.1} parent=11 // pred_fallthru
          _
        // Predicated region
        $region41: #{tpu_custom_call.1} parent=11 // pred_check
          %p389 = pneg %p243
        $region42: #{tpu_custom_call.1} parent=11 // pred_check_branch
          %391 = sbr.rel (%p389) target = $region44
        $region43: #{tpu_custom_call.1} parent=11 // pred_region
          _
        $region44: #{tpu_custom_call.1} parent=11 // pred_fallthru
          _
        // Predicated region
        $region45: #{tpu_custom_call.1} parent=11 // pred_check
          %p392 = pneg %p264
        $region46: #{tpu_custom_call.1} parent=11 // pred_check_branch
          %394 = sbr.rel (%p392) target = $region48
        $region47: #{tpu_custom_call.1} parent=11 // pred_region
          _
        $region48: #{tpu_custom_call.1} parent=11 // pred_fallthru
          _
        // Predicated region
        $region49: #{tpu_custom_call.1} parent=11 // pred_check
          %p395 = pneg %p285
        $region50: #{tpu_custom_call.1} parent=11 // pred_check_branch
          %397 = sbr.rel (%p395) target = $region52
        $region51: #{tpu_custom_call.1} parent=11 // pred_region
          _
        $region52: #{tpu_custom_call.1} parent=11 // pred_fallthru
          _
        // Predicated region
        $region53: #{tpu_custom_call.1} parent=11 // pred_check
          %p398 = pneg %p306
        $region54: #{tpu_custom_call.1} parent=11 // pred_check_branch
          %400 = sbr.rel (%p398) target = $region56
        $region55: #{tpu_custom_call.1} parent=11 // pred_region
          _
        $region56: #{tpu_custom_call.1} parent=11 // pred_fallthru
          _
        // Predicated region
        $region57: #{tpu_custom_call.1} parent=11 // pred_check
          %p401 = pneg %p327
        $region58: #{tpu_custom_call.1} parent=11 // pred_check_branch
          %403 = sbr.rel (%p401) target = $region60
        $region59: #{tpu_custom_call.1} parent=11 // pred_region
          _
        $region60: #{tpu_custom_call.1} parent=11 // pred_fallthru
          _
      $region12: #{tpu_custom_call.1} parent=5 // pred_fallthru
        _
      %p404 = scmp.lt.s32.totalorder %s23, 2
      // Predicated region
      $region61: #{tpu_custom_call.1} parent=5 // pred_check
        %p405 = pneg %p404
      $region62: #{tpu_custom_call.1} parent=5 // pred_check_branch
        %407 = sbr.rel (%p405) target = $region64
      $region63: #{tpu_custom_call.1} parent=5 // pred_region
        // Predicated region
        $region65: #{tpu_custom_call.1} parent=63 // pred_check
          %p408 = pneg %p43
        $region66: #{tpu_custom_call.1} parent=63 // pred_check_branch
          %410 = sbr.rel (%p408) target = $region68
        $region67: #{tpu_custom_call.1} parent=63 // pred_region
          %p411 = scmp.lt.s32.totalorder %s23, 1
          %s412 = scalar_select %p411, %s23, 1
          %s413 = smul.addr %s412, 2
          %s414 = smul.addr %s413, 8
          %s415 = scalar_lea.vmem %s0, %s414
        $region68: #{tpu_custom_call.1} parent=63 // pred_fallthru
          _
        // Predicated region
        $region69: #{tpu_custom_call.1} parent=63 // pred_check
          %p416 = pneg %p69
        $region70: #{tpu_custom_call.1} parent=63 // pred_check_branch
          %418 = sbr.rel (%p416) target = $region72
        $region71: #{tpu_custom_call.1} parent=63 // pred_region
          %p419 = scmp.lt.s32.totalorder %s23, 1
          %s420 = scalar_select %p419, %s23, 1
          %s421 = scalar_lea.vmem %s1, %s420
        $region72: #{tpu_custom_call.1} parent=63 // pred_fallthru
          _
      $region64: #{tpu_custom_call.1} parent=5 // pred_fallthru
        _
      %p422 = scmp.le.s32.totalorder 1, %s23
      %p423 = scmp.lt.s32.totalorder %s23, 3
      %p424 = pnand %p422, %p423
      %p425 = pneg %p424
      // Predicated region
      $region73: #{tpu_custom_call.1} parent=5 // pred_check
        _
      $region74: #{tpu_custom_call.1} parent=5 // pred_check_branch
        %427 = sbr.rel (%p424) target = $region76
      $region75: #{tpu_custom_call.1} parent=5 // pred_region
        %s428 = ssub.s32 %s23, 1
        %p429 = scmp.lt.s32.totalorder %s28, 1
        %s430 = scalar_select %p429, %s28, 1
        %s431 = smul.addr %s430, 2
        %s432 = smul.addr %s431, 8
        %s433 = scalar_lea.vmem %s0, %s432
        %p434 = pneg %p49
        %p435 = pneg %p46
        %p436 = scmp.lt.s32.totalorder %s28, 1
        %s437 = scalar_select %p436, %s28, 1
        %s438 = scalar_lea.vmem %s1, %s437
        %p439 = pneg %p75
        %p440 = pneg %p72
        %p441 = pneg %p96
        %p442 = pneg %p93
        %p443 = pneg %p117
        %p444 = pneg %p114
        %p445 = pneg %p138
        %p446 = pneg %p135
        %p447 = pneg %p159
        %p448 = pneg %p156
        %p449 = pneg %p180
        %p450 = pneg %p177
        %p451 = pneg %p201
        %p452 = pneg %p198
        %p453 = pneg %p222
        %p454 = pneg %p219
        %p455 = pneg %p243
        %p456 = pneg %p240
        %p457 = pneg %p264
        %p458 = pneg %p261
        %p459 = pneg %p285
        %p460 = pneg %p282
        %p461 = pneg %p306
        %p462 = pneg %p303
        %p463 = pneg %p327
        %p464 = pneg %p324
        %p465 = pneg %p353
        %p466 = pneg %p350
        %s467 = sand.u32 %s340, 1
        %s468 = scalar_lea.sflag [#allocation4], %s467
        %s469 = sand.u32 %s340, 1
        %s470 = smul.addr %s469, 16
        %s471 = scalar_lea.vmem [#allocation3], %s470
        %p472 = scmp.lt.s32.totalorder %s28, 1
        %s473 = scalar_select %p472, %s28, 1
        %s474 = smul.addr %s473, 2
        %s475 = smul.addr %s474, 8
        %s476 = scalar_lea.vmem %s0, %s475
        %p477 = scmp.lt.s32.totalorder %s28, 1
        %s478 = scalar_select %p477, %s28, 1
        %s479 = scalar_lea.vmem %s1, %s478
        %v481 = vld [vmem:[%s476] sm:$0xff]
        %v482 = vld [vmem:[%s476 + $0x8] sm:$0xff]
        %v483 = vld [vmem:[%s479] sm:$0x1]
        %vm484 = vcmp.gt.f32.partialorder %v483, 0.5
        %v485 = vsel %vm484, 0.0, -1e+30
        %v486 = vld [vmem:[%s2] sm:$0x1]
        %v487 = vld [vmem:[%s3] sm:$0x1]
        %vm488 = vcmask 261120
        %v489 = vsel %vm488, %v481, 0.0
        %490 = vadd.xlane.f32.xlu0 %v489
        %v491 = vpop.xlane.xlu0 %490
        %v492 = vsel %vm488, %v482, 0.0
        %493 = vadd.xlane.f32.xlu0 %v492
        %v494 = vpop.xlane.xlu0 %493
        %v495 = vrcp.pop 32.0
        %v496 = vmul.f32 %v491, %v495
        %v497 = vmul.f32 %v494, %v495
        %v498 = vsub.f32 %v481, %v496
        %v499 = vsub.f32 %v482, %v497
        %v500 = vmul.f32 %v498, %v498
        %v501 = vmul.f32 %v499, %v499
        %v502 = vsel %vm488, %v500, 0.0
        %503 = vadd.xlane.f32.xlu0 %v502
        %v504 = vpop.xlane.xlu0 %503
        %v505 = vsel %vm488, %v501, 0.0
        %506 = vadd.xlane.f32.xlu0 %v505
        %v507 = vpop.xlane.xlu0 %506
        %v508 = vmul.f32 %v504, %v495
        %v509 = vmul.f32 %v507, %v495
        %v510 = vadd.f32 %v508, 1e-05
        %v511 = vadd.f32 %v509, 1e-05
        %v512 = vrsqrt.pop %v510
        %v513 = vrsqrt.pop %v511
        %v514 = vmul.f32 %v498, %v512
        %v515 = vmul.f32 %v499, %v513
        %v517 = vlaneseq
        %v518 = vshrl.u32 %v517, 7
        %v519 = vsub.s32 0, %v518
        %v520 = vrot.slane %v486, %v519
        %v522 = vmul.f32 %v514, %v520
        %v523 = vmul.f32 %v515, %v520
        %v525 = vlaneseq
        %v526 = vshrl.u32 %v525, 7
        %v527 = vsub.s32 0, %v526
        %v528 = vrot.slane %v487, %v527
        %v530 = vadd.f32 %v522, %v528
        %v531 = vadd.f32 %v523, %v528
        %v532 = vpack.c.bf16 %v531, %v530
        %v533 = vld [vmem:[%s4] sm:$0xf]
        %v534 = vld [vmem:[%s4 + $0x4] sm:$0xf]
        %v535 = vld [vmem:[%s4 + $0x8] sm:$0xf]
        %v536 = vld [vmem:[%s4 + $0xc] sm:$0xf]
        %v541 = vunpack.c.l.b16 %v533
        %v542 = vunpack.c.l.b16 %v534
        %v543 = vunpack.c.l.b16 %v535
        %v544 = vunpack.c.l.b16 %v536
        %v545 = vpack.c.b16 %v542, %v541
        %v546 = vpack.c.b16 %v544, %v543
        %v550 = vsel %vm488, %v532, 0
        %552 = vmatprep.subr.bf16.mxu0 0
        %553 = vmatpush1.bf16.msra.mxu0 %v545
        %554 = vmatprep.subr.bf16.mxu0 0
        %555 = vmatpush1.bf16.msra.mxu0 %v546
        %556 = vmatprep.subr.bf16.mxu0 0
        %557 = vmatpush1.bf16.msra.mxu0 0
        %558 = vmatprep.subr.bf16.mxu0 0
        %559 = vmatpush1.bf16.msra.mxu0 0
        %560 = vmatprep.subr.bf16.mxu0 0
        %561 = vmatpush1.bf16.msra.mxu0 0
        %562 = vmatprep.subr.bf16.mxu0 0
        %563 = vmatpush1.bf16.msra.mxu0 0
        %564 = vmatprep.subr.bf16.mxu0 0
        %565 = vmatpush1.bf16.msra.mxu0 0
        %566 = vmatprep.subr.bf16.mxu0 0
        %567 = vmatpush1.bf16.msra.mxu0 0
        %568 = vmatprep.subr.bf16.mxu0 0
        %569 = vmatpush1.bf16.msra.mxu0 0
        %570 = vmatprep.subr.bf16.mxu0 0
        %571 = vmatpush1.bf16.msra.mxu0 0
        %572 = vmatprep.subr.bf16.mxu0 0
        %573 = vmatpush1.bf16.msra.mxu0 0
        %574 = vmatprep.subr.bf16.mxu0 0
        %575 = vmatpush1.bf16.msra.mxu0 0
        %576 = vmatprep.subr.bf16.mxu0 0
        %577 = vmatpush1.bf16.msra.mxu0 0
        %578 = vmatprep.subr.bf16.mxu0 0
        %579 = vmatpush1.bf16.msra.mxu0 0
        %580 = vmatprep.subr.bf16.mxu0 0
        %581 = vmatpush1.bf16.msra.mxu0 0
        %582 = vmatprep.subr.bf16.mxu0 0
        %583 = vmatpush1.bf16.msra.mxu0 0
        %584 = vmatprep.mubr.bf16.mxu0 0
        %585 = vmatmul.mubr.bf16.gmra.mrb[0].mxu0 %v550
        %v586 = vpop.f32.mrb[0].mxu0
        %v587 = vadd.f32 0.0, %v586
        %v588 = vpop.f32.mrb[0].mxu0
        %v589 = vpop.f32.mrb[0].mxu0
        %v590 = vadd.f32 0.0, %v589
        %v591 = vpop.f32.mrb[0].mxu0
        %592 = vdwg.mxu0
        %v593 = vld [vmem:[%s5] sm:$0x1]
        %v595 = vlaneseq
        %v596 = vshrl.u32 %v595, 7
        %v597 = vsub.s32 0, %v596
        %v598 = vrot.slane %v593, %v597
        %v600 = vadd.f32 %v587, %v598
        %v601 = vadd.f32 %v590, %v598
        %v602 = vpack.c.bf16 %v601, %v600
        %v604 = vlaneseq
        %v605 = vshrl.u32 %v604, 7
        %v606 = vsub.s32 0, %v605
        %v607 = vrot.slane %v485, %v606
        %610 = vrot.lane.b32.xlu0 %v602, 96
        %v611 = vpop.permute.xlu0 %610
        %vm612 = vcmask 64512
        %v614 = vsel %vm612, %v602, 0
        %v617 = vsel %vm612, %v611, 0
        %619 = vmatprep.subr.bf16.mxu0 0
        %620 = vmatpush1.bf16.xpose.msra.mxu0 %v617
        %621 = vmatprep.subr.bf16.mxu0 0
        %622 = vmatpush1.bf16.xpose.msra.mxu0 0
        %623 = vmatprep.subr.bf16.mxu0 0
        %624 = vmatpush1.bf16.xpose.msra.mxu0 0
        %625 = vmatprep.subr.bf16.mxu0 0
        %626 = vmatpush1.bf16.xpose.msra.mxu0 0
        %627 = vmatprep.subr.bf16.mxu0 0
        %628 = vmatpush1.bf16.xpose.msra.mxu0 0
        %629 = vmatprep.subr.bf16.mxu0 0
        %630 = vmatpush1.bf16.xpose.msra.mxu0 0
        %631 = vmatprep.subr.bf16.mxu0 0
        %632 = vmatpush1.bf16.xpose.msra.mxu0 0
        %633 = vmatprep.subr.bf16.mxu0 0
        %634 = vmatpush1.bf16.xpose.msra.mxu0 0
        %635 = vmatprep.subr.bf16.mxu0 0
        %636 = vmatpush1.bf16.xpose.msra.mxu0 0
        %637 = vmatprep.subr.bf16.mxu0 0
        %638 = vmatpush1.bf16.xpose.msra.mxu0 0
        %639 = vmatprep.subr.bf16.mxu0 0
        %640 = vmatpush1.bf16.xpose.msra.mxu0 0
        %641 = vmatprep.subr.bf16.mxu0 0
        %642 = vmatpush1.bf16.xpose.msra.mxu0 0
        %643 = vmatprep.subr.bf16.mxu0 0
        %644 = vmatpush1.bf16.xpose.msra.mxu0 0
        %645 = vmatprep.subr.bf16.mxu0 0
        %646 = vmatpush1.bf16.xpose.msra.mxu0 0
        %647 = vmatprep.subr.bf16.mxu0 0
        %648 = vmatpush1.bf16.xpose.msra.mxu0 0
        %649 = vmatprep.subr.bf16.mxu0 0
        %650 = vmatpush1.bf16.xpose.msra.mxu0 0
        %651 = vmatprep.mubr.bf16.mxu0 0
        %652 = vmatmul.mubr.bf16.gmra.mrb[0].mxu0 %v614
        %v653 = vpop.f32.mrb[0].mxu0
        %v654 = vadd.f32 %v607, %v653
        %v655 = vpop.f32.mrb[0].mxu0
        %v656 = vpop.f32.mrb[0].mxu0
        %v657 = vadd.f32 %v607, %v656
        %v658 = vpop.f32.mrb[0].mxu0
        %659 = vdwg.mxu0
        %vm660 = vcmask 130048
        %v661 = vsel %vm660, %v654, -inf
        %662 = vmax.xlane.f32.xlu0 %v661
        %v663 = vpop.xlane.xlu0 %662
        %v664 = vsel %vm660, %v657, -inf
        %665 = vmax.xlane.f32.xlu0 %v664
        %v666 = vpop.xlane.xlu0 %665
        %v667 = vsub.f32 %v654, %v663
        %v668 = vsub.f32 %v657, %v666
        %v669 = vmul.f32 %v667, 1.442695
        %v670 = vpow.pop %v669
        %v671 = vmul.f32 %v668, 1.442695
        %v672 = vpow.pop %v671
        %v673 = vsel %vm660, %v670, 0.0
        %674 = vadd.xlane.f32.xlu0 %v673
        %v675 = vpop.xlane.xlu0 %674
        %v676 = vsel %vm660, %v672, 0.0
        %677 = vadd.xlane.f32.xlu0 %v676
        %v678 = vpop.xlane.xlu0 %677
        %v679 = vrcp.pop %v675
        %v680 = vrcp.pop %v678
        %v681 = vmul.f32 %v670, %v679
        %v682 = vmul.f32 %v672, %v680
        %v683 = vpack.c.bf16 %v682, %v681
        %684 = vrot.lane.b32.xlu0 %v602, 64
        %v685 = vpop.permute.xlu0 %684
        %v688 = vsel %vm660, %v683, 0
        %690 = vmatprep.subr.bf16.mxu0 0
        %691 = vmatpush1.bf16.msra.mxu0 %v685
        %692 = vmatprep.subr.bf16.mxu0 0
        %693 = vmatpush1.bf16.msra.mxu0 0
        %694 = vmatprep.subr.bf16.mxu0 0
        %695 = vmatpush1.bf16.msra.mxu0 0
        %696 = vmatprep.subr.bf16.mxu0 0
        %697 = vmatpush1.bf16.msra.mxu0 0
        %698 = vmatprep.subr.bf16.mxu0 0
        %699 = vmatpush1.bf16.msra.mxu0 0
        %700 = vmatprep.subr.bf16.mxu0 0
        %701 = vmatpush1.bf16.msra.mxu0 0
        %702 = vmatprep.subr.bf16.mxu0 0
        %703 = vmatpush1.bf16.msra.mxu0 0
        %704 = vmatprep.subr.bf16.mxu0 0
        %705 = vmatpush1.bf16.msra.mxu0 0
        %706 = vmatprep.subr.bf16.mxu0 0
        %707 = vmatpush1.bf16.msra.mxu0 0
        %708 = vmatprep.subr.bf16.mxu0 0
        %709 = vmatpush1.bf16.msra.mxu0 0
        %710 = vmatprep.subr.bf16.mxu0 0
        %711 = vmatpush1.bf16.msra.mxu0 0
        %712 = vmatprep.subr.bf16.mxu0 0
        %713 = vmatpush1.bf16.msra.mxu0 0
        %714 = vmatprep.subr.bf16.mxu0 0
        %715 = vmatpush1.bf16.msra.mxu0 0
        %716 = vmatprep.subr.bf16.mxu0 0
        %717 = vmatpush1.bf16.msra.mxu0 0
        %718 = vmatprep.subr.bf16.mxu0 0
        %719 = vmatpush1.bf16.msra.mxu0 0
        %720 = vmatprep.subr.bf16.mxu0 0
        %721 = vmatpush1.bf16.msra.mxu0 0
        %722 = vmatprep.mubr.bf16.mxu0 0
        %723 = vmatmul.mubr.bf16.gmra.mrb[0].mxu0 %v688
        %v724 = vpop.f32.mrb[0].mxu0
        %v725 = vadd.f32 0.0, %v724
        %v726 = vpop.f32.mrb[0].mxu0
        %v727 = vpop.f32.mrb[0].mxu0
        %v728 = vadd.f32 0.0, %v727
        %v729 = vpop.f32.mrb[0].mxu0
        %730 = vdwg.mxu0
        %v731 = vpack.c.bf16 %v728, %v725
        %732 = vst.msk [vmem:[#allocation2] sm:$0xff] %vm612, %v731
        %733 = vrot.lane.b32.xlu0 %v602, 120
        %v734 = vpop.permute.xlu0 %733
        %735 = vrot.lane.b32.xlu0 %v602, 88
        %v736 = vpop.permute.xlu0 %735
        %v738 = vsel %vm612, %v734, 0
        %v741 = vsel %vm612, %v736, 0
        %743 = vmatprep.subr.bf16.mxu0 0
        %744 = vmatpush1.bf16.xpose.msra.mxu0 %v741
        %745 = vmatprep.subr.bf16.mxu0 0
        %746 = vmatpush1.bf16.xpose.msra.mxu0 0
        %747 = vmatprep.subr.bf16.mxu0 0
        %748 = vmatpush1.bf16.xpose.msra.mxu0 0
        %749 = vmatprep.subr.bf16.mxu0 0
        %750 = vmatpush1.bf16.xpose.msra.mxu0 0
        %751 = vmatprep.subr.bf16.mxu0 0
        %752 = vmatpush1.bf16.xpose.msra.mxu0 0
        %753 = vmatprep.subr.bf16.mxu0 0
        %754 = vmatpush1.bf16.xpose.msra.mxu0 0
        %755 = vmatprep.subr.bf16.mxu0 0
        %756 = vmatpush1.bf16.xpose.msra.mxu0 0
        %757 = vmatprep.subr.bf16.mxu0 0
        %758 = vmatpush1.bf16.xpose.msra.mxu0 0
        %759 = vmatprep.subr.bf16.mxu0 0
        %760 = vmatpush1.bf16.xpose.msra.mxu0 0
        %761 = vmatprep.subr.bf16.mxu0 0
        %762 = vmatpush1.bf16.xpose.msra.mxu0 0
        %763 = vmatprep.subr.bf16.mxu0 0
        %764 = vmatpush1.bf16.xpose.msra.mxu0 0
        %765 = vmatprep.subr.bf16.mxu0 0
        %766 = vmatpush1.bf16.xpose.msra.mxu0 0
        %767 = vmatprep.subr.bf16.mxu0 0
        %768 = vmatpush1.bf16.xpose.msra.mxu0 0
        %769 = vmatprep.subr.bf16.mxu0 0
        %770 = vmatpush1.bf16.xpose.msra.mxu0 0
        %771 = vmatprep.subr.bf16.mxu0 0
        %772 = vmatpush1.bf16.xpose.msra.mxu0 0
        %773 = vmatprep.subr.bf16.mxu0 0
        %774 = vmatpush1.bf16.xpose.msra.mxu0 0
        %775 = vmatprep.mubr.bf16.mxu0 0
        %776 = vmatmul.mubr.bf16.gmra.mrb[0].mxu0 %v738
        %v777 = vpop.f32.mrb[0].mxu0
        %v778 = vadd.f32 %v607, %v777
        %v779 = vpop.f32.mrb[0].mxu0
        %v780 = vpop.f32.mrb[0].mxu0
        %v781 = vadd.f32 %v607, %v780
        %v782 = vpop.f32.mrb[0].mxu0
        %783 = vdwg.mxu0
        %v784 = vsel %vm660, %v778, -inf
        %785 = vmax.xlane.f32.xlu0 %v784
        %v786 = vpop.xlane.xlu0 %785
        %v787 = vsel %vm660, %v781, -inf
        %788 = vmax.xlane.f32.xlu0 %v787
        %v789 = vpop.xlane.xlu0 %788
        %v790 = vsub.f32 %v778, %v786
        %v791 = vsub.f32 %v781, %v789
        %v792 = vmul.f32 %v790, 1.442695
        %v793 = vpow.pop %v792
        %v794 = vmul.f32 %v791, 1.442695
        %v795 = vpow.pop %v794
        %v796 = vsel %vm660, %v793, 0.0
        %797 = vadd.xlane.f32.xlu0 %v796
        %v798 = vpop.xlane.xlu0 %797
        %v799 = vsel %vm660, %v795, 0.0
        %800 = vadd.xlane.f32.xlu0 %v799
        %v801 = vpop.xlane.xlu0 %800
        %v802 = vrcp.pop %v798
        %v803 = vrcp.pop %v801
        %v804 = vmul.f32 %v793, %v802
        %v805 = vmul.f32 %v795, %v803
        %v806 = vpack.c.bf16 %v805, %v804
        %807 = vrot.lane.b32.xlu0 %v602, 56
        %v808 = vpop.permute.xlu0 %807
        %v811 = vsel %vm660, %v806, 0
        %813 = vmatprep.subr.bf16.mxu0 0
        %814 = vmatpush1.bf16.msra.mxu0 %v808
        %815 = vmatprep.subr.bf16.mxu0 0
        %816 = vmatpush1.bf16.msra.mxu0 0
        %817 = vmatprep.subr.bf16.mxu0 0
        %818 = vmatpush1.bf16.msra.mxu0 0
        %819 = vmatprep.subr.bf16.mxu0 0
        %820 = vmatpush1.bf16.msra.mxu0 0
        %821 = vmatprep.subr.bf16.mxu0 0
        %822 = vmatpush1.bf16.msra.mxu0 0
        %823 = vmatprep.subr.bf16.mxu0 0
        %824 = vmatpush1.bf16.msra.mxu0 0
        %825 = vmatprep.subr.bf16.mxu0 0
        %826 = vmatpush1.bf16.msra.mxu0 0
        %827 = vmatprep.subr.bf16.mxu0 0
        %828 = vmatpush1.bf16.msra.mxu0 0
        %829 = vmatprep.subr.bf16.mxu0 0
        %830 = vmatpush1.bf16.msra.mxu0 0
        %831 = vmatprep.subr.bf16.mxu0 0
        %832 = vmatpush1.bf16.msra.mxu0 0
        %833 = vmatprep.subr.bf16.mxu0 0
        %834 = vmatpush1.bf16.msra.mxu0 0
        %835 = vmatprep.subr.bf16.mxu0 0
        %836 = vmatpush1.bf16.msra.mxu0 0
        %837 = vmatprep.subr.bf16.mxu0 0
        %838 = vmatpush1.bf16.msra.mxu0 0
        %839 = vmatprep.subr.bf16.mxu0 0
        %840 = vmatpush1.bf16.msra.mxu0 0
        %841 = vmatprep.subr.bf16.mxu0 0
        %842 = vmatpush1.bf16.msra.mxu0 0
        %843 = vmatprep.subr.bf16.mxu0 0
        %844 = vmatpush1.bf16.msra.mxu0 0
        %845 = vmatprep.mubr.bf16.mxu0 0
        %846 = vmatmul.mubr.bf16.gmra.mrb[0].mxu0 %v811
        %v847 = vpop.f32.mrb[0].mxu0
        %v848 = vadd.f32 0.0, %v847
        %v849 = vpop.f32.mrb[0].mxu0
        %v850 = vpop.f32.mrb[0].mxu0
        %v851 = vadd.f32 0.0, %v850
        %v852 = vpop.f32.mrb[0].mxu0
        %853 = vdwg.mxu0
        %v854 = vpack.c.bf16 %v851, %v848
        %856 = vrot.lane.b32.xlu0 %v854, 8
        %v857 = vpop.permute.xlu0 %856
        %vm859 = vcmask 130112
        %860 = vst.msk [vmem:[#allocation2] sm:$0xff] %vm859, %v857
        %861 = vrot.lane.b32.xlu0 %v602, 112
        %v862 = vpop.permute.xlu0 %861
        %863 = vrot.lane.b32.xlu0 %v602, 80
        %v864 = vpop.permute.xlu0 %863
        %v866 = vsel %vm612, %v862, 0
        %v869 = vsel %vm612, %v864, 0
        %871 = vmatprep.subr.bf16.mxu0 0
        %872 = vmatpush1.bf16.xpose.msra.mxu0 %v869
        %873 = vmatprep.subr.bf16.mxu0 0
        %874 = vmatpush1.bf16.xpose.msra.mxu0 0
        %875 = vmatprep.subr.bf16.mxu0 0
        %876 = vmatpush1.bf16.xpose.msra.mxu0 0
        %877 = vmatprep.subr.bf16.mxu0 0
        %878 = vmatpush1.bf16.xpose.msra.mxu0 0
        %879 = vmatprep.subr.bf16.mxu0 0
        %880 = vmatpush1.bf16.xpose.msra.mxu0 0
        %881 = vmatprep.subr.bf16.mxu0 0
        %882 = vmatpush1.bf16.xpose.msra.mxu0 0
        %883 = vmatprep.subr.bf16.mxu0 0
        %884 = vmatpush1.bf16.xpose.msra.mxu0 0
        %885 = vmatprep.subr.bf16.mxu0 0
        %886 = vmatpush1.bf16.xpose.msra.mxu0 0
        %887 = vmatprep.subr.bf16.mxu0 0
        %888 = vmatpush1.bf16.xpose.msra.mxu0 0
        %889 = vmatprep.subr.bf16.mxu0 0
        %890 = vmatpush1.bf16.xpose.msra.mxu0 0
        %891 = vmatprep.subr.bf16.mxu0 0
        %892 = vmatpush1.bf16.xpose.msra.mxu0 0
        %893 = vmatprep.subr.bf16.mxu0 0
        %894 = vmatpush1.bf16.xpose.msra.mxu0 0
        %895 = vmatprep.subr.bf16.mxu0 0
        %896 = vmatpush1.bf16.xpose.msra.mxu0 0
        %897 = vmatprep.subr.bf16.mxu0 0
        %898 = vmatpush1.bf16.xpose.msra.mxu0 0
        %899 = vmatprep.subr.bf16.mxu0 0
        %900 = vmatpush1.bf16.xpose.msra.mxu0 0
        %901 = vmatprep.subr.bf16.mxu0 0
        %902 = vmatpush1.bf16.xpose.msra.mxu0 0
        %903 = vmatprep.mubr.bf16.mxu0 0
        %904 = vmatmul.mubr.bf16.gmra.mrb[0].mxu0 %v866
        %v905 = vpop.f32.mrb[0].mxu0
        %v906 = vadd.f32 %v607, %v905
        %v907 = vpop.f32.mrb[0].mxu0
        %v908 = vpop.f32.mrb[0].mxu0
        %v909 = vadd.f32 %v607, %v908
        %v910 = vpop.f32.mrb[0].mxu0
        %911 = vdwg.mxu0
        %v912 = vsel %vm660, %v906, -inf
        %913 = vmax.xlane.f32.xlu0 %v912
        %v914 = vpop.xlane.xlu0 %913
        %v915 = vsel %vm660, %v909, -inf
        %916 = vmax.xlane.f32.xlu0 %v915
        %v917 = vpop.xlane.xlu0 %916
        %v918 = vsub.f32 %v906, %v914
        %v919 = vsub.f32 %v909, %v917
        %v920 = vmul.f32 %v918, 1.442695
        %v921 = vpow.pop %v920
        %v922 = vmul.f32 %v919, 1.442695
        %v923 = vpow.pop %v922
        %v924 = vsel %vm660, %v921, 0.0
        %925 = vadd.xlane.f32.xlu0 %v924
        %v926 = vpop.xlane.xlu0 %925
        %v927 = vsel %vm660, %v923, 0.0
        %928 = vadd.xlane.f32.xlu0 %v927
        %v929 = vpop.xlane.xlu0 %928
        %v930 = vrcp.pop %v926
        %v931 = vrcp.pop %v929
        %v932 = vmul.f32 %v921, %v930
        %v933 = vmul.f32 %v923, %v931
        %v934 = vpack.c.bf16 %v933, %v932
        %935 = vrot.lane.b32.xlu0 %v602, 48
        %v936 = vpop.permute.xlu0 %935
        %v939 = vsel %vm660, %v934, 0
        %941 = vmatprep.subr.bf16.mxu0 0
        %942 = vmatpush1.bf16.msra.mxu0 %v936
        %943 = vmatprep.subr.bf16.mxu0 0
        %944 = vmatpush1.bf16.msra.mxu0 0
        %945 = vmatprep.subr.bf16.mxu0 0
        %946 = vmatpush1.bf16.msra.mxu0 0
        %947 = vmatprep.subr.bf16.mxu0 0
        %948 = vmatpush1.bf16.msra.mxu0 0
        %949 = vmatprep.subr.bf16.mxu0 0
        %950 = vmatpush1.bf16.msra.mxu0 0
        %951 = vmatprep.subr.bf16.mxu0 0
        %952 = vmatpush1.bf16.msra.mxu0 0
        %953 = vmatprep.subr.bf16.mxu0 0
        %954 = vmatpush1.bf16.msra.mxu0 0
        %955 = vmatprep.subr.bf16.mxu0 0
        %956 = vmatpush1.bf16.msra.mxu0 0
        %957 = vmatprep.subr.bf16.mxu0 0
        %958 = vmatpush1.bf16.msra.mxu0 0
        %959 = vmatprep.subr.bf16.mxu0 0
        %960 = vmatpush1.bf16.msra.mxu0 0
        %961 = vmatprep.subr.bf16.mxu0 0
        %962 = vmatpush1.bf16.msra.mxu0 0
        %963 = vmatprep.subr.bf16.mxu0 0
        %964 = vmatpush1.bf16.msra.mxu0 0
        %965 = vmatprep.subr.bf16.mxu0 0
        %966 = vmatpush1.bf16.msra.mxu0 0
        %967 = vmatprep.subr.bf16.mxu0 0
        %968 = vmatpush1.bf16.msra.mxu0 0
        %969 = vmatprep.subr.bf16.mxu0 0
        %970 = vmatpush1.bf16.msra.mxu0 0
        %971 = vmatprep.subr.bf16.mxu0 0
        %972 = vmatpush1.bf16.msra.mxu0 0
        %973 = vmatprep.mubr.bf16.mxu0 0
        %974 = vmatmul.mubr.bf16.gmra.mrb[0].mxu0 %v939
        %v975 = vpop.f32.mrb[0].mxu0
        %v976 = vadd.f32 0.0, %v975
        %v977 = vpop.f32.mrb[0].mxu0
        %v978 = vpop.f32.mrb[0].mxu0
        %v979 = vadd.f32 0.0, %v978
        %v980 = vpop.f32.mrb[0].mxu0
        %981 = vdwg.mxu0
        %v982 = vpack.c.bf16 %v979, %v976
        %984 = vrot.lane.b32.xlu0 %v982, 16
        %v985 = vpop.permute.xlu0 %984
        %vm987 = vcmask 195712
        %988 = vst.msk [vmem:[#allocation2] sm:$0xff] %vm987, %v985
        %989 = vrot.lane.b32.xlu0 %v602, 104
        %v990 = vpop.permute.xlu0 %989
        %991 = vrot.lane.b32.xlu0 %v602, 72
        %v992 = vpop.permute.xlu0 %991
        %v994 = vsel %vm612, %v990, 0
        %v997 = vsel %vm612, %v992, 0
        %999 = vmatprep.subr.bf16.mxu0 0
        %1000 = vmatpush1.bf16.xpose.msra.mxu0 %v997
        %1001 = vmatprep.subr.bf16.mxu0 0
        %1002 = vmatpush1.bf16.xpose.msra.mxu0 0
        %1003 = vmatprep.subr.bf16.mxu0 0
        %1004 = vmatpush1.bf16.xpose.msra.mxu0 0
        %1005 = vmatprep.subr.bf16.mxu0 0
        %1006 = vmatpush1.bf16.xpose.msra.mxu0 0
        %1007 = vmatprep.subr.bf16.mxu0 0
        %1008 = vmatpush1.bf16.xpose.msra.mxu0 0
        %1009 = vmatprep.subr.bf16.mxu0 0
        %1010 = vmatpush1.bf16.xpose.msra.mxu0 0
        %1011 = vmatprep.subr.bf16.mxu0 0
        %1012 = vmatpush1.bf16.xpose.msra.mxu0 0
        %1013 = vmatprep.subr.bf16.mxu0 0
        %1014 = vmatpush1.bf16.xpose.msra.mxu0 0
        %1015 = vmatprep.subr.bf16.mxu0 0
        %1016 = vmatpush1.bf16.xpose.msra.mxu0 0
        %1017 = vmatprep.subr.bf16.mxu0 0
        %1018 = vmatpush1.bf16.xpose.msra.mxu0 0
        %1019 = vmatprep.subr.bf16.mxu0 0
        %1020 = vmatpush1.bf16.xpose.msra.mxu0 0
        %1021 = vmatprep.subr.bf16.mxu0 0
        %1022 = vmatpush1.bf16.xpose.msra.mxu0 0
        %1023 = vmatprep.subr.bf16.mxu0 0
        %1024 = vmatpush1.bf16.xpose.msra.mxu0 0
        %1025 = vmatprep.subr.bf16.mxu0 0
        %1026 = vmatpush1.bf16.xpose.msra.mxu0 0
        %1027 = vmatprep.subr.bf16.mxu0 0
        %1028 = vmatpush1.bf16.xpose.msra.mxu0 0
        %1029 = vmatprep.subr.bf16.mxu0 0
        %1030 = vmatpush1.bf16.xpose.msra.mxu0 0
        %1031 = vmatprep.mubr.bf16.mxu0 0
        %1032 = vmatmul.mubr.bf16.gmra.mrb[0].mxu0 %v994
        %v1033 = vpop.f32.mrb[0].mxu0
        %v1034 = vadd.f32 %v607, %v1033
        %v1035 = vpop.f32.mrb[0].mxu0
        %v1036 = vpop.f32.mrb[0].mxu0
        %v1037 = vadd.f32 %v607, %v1036
        %v1038 = vpop.f32.mrb[0].mxu0
        %1039 = vdwg.mxu0
        %v1040 = vsel %vm660, %v1034, -inf
        %1041 = vmax.xlane.f32.xlu0 %v1040
        %v1042 = vpop.xlane.xlu0 %1041
        %v1043 = vsel %vm660, %v1037, -inf
        %1044 = vmax.xlane.f32.xlu0 %v1043
        %v1045 = vpop.xlane.xlu0 %1044
        %v1046 = vsub.f32 %v1034, %v1042
        %v1047 = vsub.f32 %v1037, %v1045
        %v1048 = vmul.f32 %v1046, 1.442695
        %v1049 = vpow.pop %v1048
        %v1050 = vmul.f32 %v1047, 1.442695
        %v1051 = vpow.pop %v1050
        %v1052 = vsel %vm660, %v1049, 0.0
        %1053 = vadd.xlane.f32.xlu0 %v1052
        %v1054 = vpop.xlane.xlu0 %1053
        %v1055 = vsel %vm660, %v1051, 0.0
        %1056 = vadd.xlane.f32.xlu0 %v1055
        %v1057 = vpop.xlane.xlu0 %1056
        %v1058 = vrcp.pop %v1054
        %v1059 = vrcp.pop %v1057
        %v1060 = vmul.f32 %v1049, %v1058
        %v1061 = vmul.f32 %v1051, %v1059
        %v1062 = vpack.c.bf16 %v1061, %v1060
        %1063 = vrot.lane.b32.xlu0 %v602, 40
        %v1064 = vpop.permute.xlu0 %1063
        %v1067 = vsel %vm660, %v1062, 0
        %1069 = vmatprep.subr.bf16.mxu0 0
        %1070 = vmatpush1.bf16.msra.mxu0 %v1064
        %1071 = vmatprep.subr.bf16.mxu0 0
        %1072 = vmatpush1.bf16.msra.mxu0 0
        %1073 = vmatprep.subr.bf16.mxu0 0
        %1074 = vmatpush1.bf16.msra.mxu0 0
        %1075 = vmatprep.subr.bf16.mxu0 0
        %1076 = vmatpush1.bf16.msra.mxu0 0
        %1077 = vmatprep.subr.bf16.mxu0 0
        %1078 = vmatpush1.bf16.msra.mxu0 0
        %1079 = vmatprep.subr.bf16.mxu0 0
        %1080 = vmatpush1.bf16.msra.mxu0 0
        %1081 = vmatprep.subr.bf16.mxu0 0
        %1082 = vmatpush1.bf16.msra.mxu0 0
        %1083 = vmatprep.subr.bf16.mxu0 0
        %1084 = vmatpush1.bf16.msra.mxu0 0
        %1085 = vmatprep.subr.bf16.mxu0 0
        %1086 = vmatpush1.bf16.msra.mxu0 0
        %1087 = vmatprep.subr.bf16.mxu0 0
        %1088 = vmatpush1.bf16.msra.mxu0 0
        %1089 = vmatprep.subr.bf16.mxu0 0
        %1090 = vmatpush1.bf16.msra.mxu0 0
        %1091 = vmatprep.subr.bf16.mxu0 0
        %1092 = vmatpush1.bf16.msra.mxu0 0
        %1093 = vmatprep.subr.bf16.mxu0 0
        %1094 = vmatpush1.bf16.msra.mxu0 0
        %1095 = vmatprep.subr.bf16.mxu0 0
        %1096 = vmatpush1.bf16.msra.mxu0 0
        %1097 = vmatprep.subr.bf16.mxu0 0
        %1098 = vmatpush1.bf16.msra.mxu0 0
        %1099 = vmatprep.subr.bf16.mxu0 0
        %1100 = vmatpush1.bf16.msra.mxu0 0
        %1101 = vmatprep.mubr.bf16.mxu0 0
        %1102 = vmatmul.mubr.bf16.gmra.mrb[0].mxu0 %v1067
        %v1103 = vpop.f32.mrb[0].mxu0
        %v1104 = vadd.f32 0.0, %v1103
        %v1105 = vpop.f32.mrb[0].mxu0
        %v1106 = vpop.f32.mrb[0].mxu0
        %v1107 = vadd.f32 0.0, %v1106
        %v1108 = vpop.f32.mrb[0].mxu0
        %1109 = vdwg.mxu0
        %v1110 = vpack.c.bf16 %v1107, %v1104
        %1112 = vrot.lane.b32.xlu0 %v1110, 24
        %v1113 = vpop.permute.xlu0 %1112
        %vm1115 = vcmask 261312
        %1116 = vst.msk [vmem:[#allocation2] sm:$0xff] %vm1115, %v1113
        %v1117 = vld [vmem:[#allocation2] sm:$0xff]
        %v1118 = vld [vmem:[%s6] sm:$0xf]
        %v1119 = vld [vmem:[%s6 + $0x4] sm:$0xf]
        %v1120 = vld [vmem:[%s6 + $0x8] sm:$0xf]
        %v1121 = vld [vmem:[%s6 + $0xc] sm:$0xf]
        %v1126 = vunpack.c.l.b16 %v1118
        %v1127 = vunpack.c.l.b16 %v1119
        %v1128 = vunpack.c.l.b16 %v1120
        %v1129 = vunpack.c.l.b16 %v1121
        %v1130 = vpack.c.b16 %v1127, %v1126
        %v1131 = vpack.c.b16 %v1129, %v1128
        %v1135 = vsel %vm488, %v1117, 0
        %1137 = vmatprep.subr.bf16.mxu0 0
        %1138 = vmatpush1.bf16.msra.mxu0 %v1130
        %1139 = vmatprep.subr.bf16.mxu0 0
        %1140 = vmatpush1.bf16.msra.mxu0 %v1131
        %1141 = vmatprep.subr.bf16.mxu0 0
        %1142 = vmatpush1.bf16.msra.mxu0 0
        %1143 = vmatprep.subr.bf16.mxu0 0
        %1144 = vmatpush1.bf16.msra.mxu0 0
        %1145 = vmatprep.subr.bf16.mxu0 0
        %1146 = vmatpush1.bf16.msra.mxu0 0
        %1147 = vmatprep.subr.bf16.mxu0 0
        %1148 = vmatpush1.bf16.msra.mxu0 0
        %1149 = vmatprep.subr.bf16.mxu0 0
        %1150 = vmatpush1.bf16.msra.mxu0 0
        %1151 = vmatprep.subr.bf16.mxu0 0
        %1152 = vmatpush1.bf16.msra.mxu0 0
        %1153 = vmatprep.subr.bf16.mxu0 0
        %1154 = vmatpush1.bf16.msra.mxu0 0
        %1155 = vmatprep.subr.bf16.mxu0 0
        %1156 = vmatpush1.bf16.msra.mxu0 0
        %1157 = vmatprep.subr.bf16.mxu0 0
        %1158 = vmatpush1.bf16.msra.mxu0 0
        %1159 = vmatprep.subr.bf16.mxu0 0
        %1160 = vmatpush1.bf16.msra.mxu0 0
        %1161 = vmatprep.subr.bf16.mxu0 0
        %1162 = vmatpush1.bf16.msra.mxu0 0
        %1163 = vmatprep.subr.bf16.mxu0 0
        %1164 = vmatpush1.bf16.msra.mxu0 0
        %1165 = vmatprep.subr.bf16.mxu0 0
        %1166 = vmatpush1.bf16.msra.mxu0 0
        %1167 = vmatprep.subr.bf16.mxu0 0
        %1168 = vmatpush1.bf16.msra.mxu0 0
        %1169 = vmatprep.mubr.bf16.mxu0 0
        %1170 = vmatmul.mubr.bf16.gmra.mrb[0].mxu0 %v1135
        %v1171 = vpop.f32.mrb[0].mxu0
        %v1172 = vadd.f32 0.0, %v1171
        %v1173 = vpop.f32.mrb[0].mxu0
        %v1174 = vpop.f32.mrb[0].mxu0
        %v1175 = vadd.f32 0.0, %v1174
        %v1176 = vpop.f32.mrb[0].mxu0
        %1177 = vdwg.mxu0
        %v1178 = vadd.f32 %v481, %v1172
        %v1179 = vadd.f32 %v482, %v1175
        %v1180 = vld [vmem:[%s7] sm:$0x1]
        %v1182 = vlaneseq
        %v1183 = vshrl.u32 %v1182, 7
        %v1184 = vsub.s32 0, %v1183
        %v1185 = vrot.slane %v1180, %v1184
        %v1187 = vadd.f32 %v1178, %v1185
        %v1188 = vadd.f32 %v1179, %v1185
        %v1189 = vld [vmem:[%s8] sm:$0x1]
        %v1190 = vld [vmem:[%s9] sm:$0x1]
        %v1191 = vsel %vm488, %v1187, 0.0
        %1192 = vadd.xlane.f32.xlu0 %v1191
        %v1193 = vpop.xlane.xlu0 %1192
        %v1194 = vsel %vm488, %v1188, 0.0
        %1195 = vadd.xlane.f32.xlu0 %v1194
        %v1196 = vpop.xlane.xlu0 %1195
        %v1197 = vmul.f32 %v1193, %v495
        %v1198 = vmul.f32 %v1196, %v495
        %v1199 = vsub.f32 %v1187, %v1197
        %v1200 = vsub.f32 %v1188, %v1198
        %v1201 = vmul.f32 %v1199, %v1199
        %v1202 = vmul.f32 %v1200, %v1200
        %v1203 = vsel %vm488, %v1201, 0.0
        %1204 = vadd.xlane.f32.xlu0 %v1203
        %v1205 = vpop.xlane.xlu0 %1204
        %v1206 = vsel %vm488, %v1202, 0.0
        %1207 = vadd.xlane.f32.xlu0 %v1206
        %v1208 = vpop.xlane.xlu0 %1207
        %v1209 = vmul.f32 %v1205, %v495
        %v1210 = vmul.f32 %v1208, %v495
        %v1211 = vadd.f32 %v1209, 1e-05
        %v1212 = vadd.f32 %v1210, 1e-05
        %v1213 = vrsqrt.pop %v1211
        %v1214 = vrsqrt.pop %v1212
        %v1215 = vmul.f32 %v1199, %v1213
        %v1216 = vmul.f32 %v1200, %v1214
        %v1218 = vlaneseq
        %v1219 = vshrl.u32 %v1218, 7
        %v1220 = vsub.s32 0, %v1219
        %v1221 = vrot.slane %v1189, %v1220
        %v1223 = vmul.f32 %v1215, %v1221
        %v1224 = vmul.f32 %v1216, %v1221
        %v1226 = vlaneseq
        %v1227 = vshrl.u32 %v1226, 7
        %v1228 = vsub.s32 0, %v1227
        %v1229 = vrot.slane %v1190, %v1228
        %v1231 = vadd.f32 %v1223, %v1229
        %v1232 = vadd.f32 %v1224, %v1229
        %v1233 = vpack.c.bf16 %v1232, %v1231
        %v1234 = vld [vmem:[%s10] sm:$0xf]
        %v1235 = vld [vmem:[%s10 + $0x4] sm:$0xf]
        %v1236 = vld [vmem:[%s10 + $0x8] sm:$0xf]
        %v1237 = vld [vmem:[%s10 + $0xc] sm:$0xf]
        %v1238 = vld [vmem:[%s11] sm:$0x1]
        %v1240 = vlaneseq
        %v1241 = vshrl.u32 %v1240, 7
        %v1242 = vsub.s32 0, %v1241
        %v1243 = vrot.slane %v1238, %v1242
        %v1249 = vunpack.c.l.b16 %v1234
        %v1250 = vunpack.c.l.b16 %v1235
        %v1251 = vunpack.c.l.b16 %v1236
        %v1252 = vunpack.c.l.b16 %v1237
        %v1253 = vpack.c.b16 %v1250, %v1249
        %v1254 = vpack.c.b16 %v1252, %v1251
        %v1258 = vsel %vm488, %v1233, 0
        %1260 = vmatprep.subr.bf16.mxu0 0
        %1261 = vmatpush1.bf16.msra.mxu0 %v1253
        %1262 = vmatprep.subr.bf16.mxu0 0
        %1263 = vmatpush1.bf16.msra.mxu0 %v1254
        %1264 = vmatprep.subr.bf16.mxu0 0
        %1265 = vmatpush1.bf16.msra.mxu0 0
        %1266 = vmatprep.subr.bf16.mxu0 0
        %1267 = vmatpush1.bf16.msra.mxu0 0
        %1268 = vmatprep.subr.bf16.mxu0 0
        %1269 = vmatpush1.bf16.msra.mxu0 0
        %1270 = vmatprep.subr.bf16.mxu0 0
        %1271 = vmatpush1.bf16.msra.mxu0 0
        %1272 = vmatprep.subr.bf16.mxu0 0
        %1273 = vmatpush1.bf16.msra.mxu0 0
        %1274 = vmatprep.subr.bf16.mxu0 0
        %1275 = vmatpush1.bf16.msra.mxu0 0
        %1276 = vmatprep.subr.bf16.mxu0 0
        %1277 = vmatpush1.bf16.msra.mxu0 0
        %1278 = vmatprep.subr.bf16.mxu0 0
        %1279 = vmatpush1.bf16.msra.mxu0 0
        %1280 = vmatprep.subr.bf16.mxu0 0
        %1281 = vmatpush1.bf16.msra.mxu0 0
        %1282 = vmatprep.subr.bf16.mxu0 0
        %1283 = vmatpush1.bf16.msra.mxu0 0
        %1284 = vmatprep.subr.bf16.mxu0 0
        %1285 = vmatpush1.bf16.msra.mxu0 0
        %1286 = vmatprep.subr.bf16.mxu0 0
        %1287 = vmatpush1.bf16.msra.mxu0 0
        %1288 = vmatprep.subr.bf16.mxu0 0
        %1289 = vmatpush1.bf16.msra.mxu0 0
        %1290 = vmatprep.subr.bf16.mxu0 0
        %1291 = vmatpush1.bf16.msra.mxu0 0
        %1292 = vmatprep.mubr.bf16.mxu0 0
        %1293 = vmatmul.mubr.bf16.gmra.mrb[0].mxu0 %v1258
        %v1294 = vpop.f32.mrb[0].mxu0
        %v1295 = vadd.f32 %v1243, %v1294
        %v1296 = vpop.f32.mrb[0].mxu0
        %v1297 = vpop.f32.mrb[0].mxu0
        %v1298 = vadd.f32 %v1243, %v1297
        %v1299 = vpop.f32.mrb[0].mxu0
        %1300 = vdwg.mxu0
        %v1301 = vmul.f32 %v1295, 1.702
        %v1302 = vmul.f32 %v1298, 1.702
        %v1303 = vxor.u32 %v1301, 2147483648
        %v1304 = vxor.u32 %v1302, 2147483648
        %v1305 = vmul.f32 %v1303, 1.442695
        %v1306 = vpow.pop %v1305
        %v1307 = vmul.f32 %v1304, 1.442695
        %v1308 = vpow.pop %v1307
        %v1309 = vadd.f32 %v1306, 1.0
        %v1310 = vadd.f32 %v1308, 1.0
        %v1311 = vrcp.pop %v1309
        %v1312 = vmul.f32 1.0, %v1311
        %v1313 = vrcp.pop %v1310
        %v1314 = vmul.f32 1.0, %v1313
        %v1315 = vmul.f32 %v1295, %v1312
        %v1316 = vmul.f32 %v1298, %v1314
        %v1317 = vpack.c.bf16 %v1316, %v1315
        %v1318 = vld [vmem:[%s12] sm:$0xf]
        %v1319 = vld [vmem:[%s12 + $0x4] sm:$0xf]
        %v1320 = vld [vmem:[%s12 + $0x8] sm:$0xf]
        %v1321 = vld [vmem:[%s12 + $0xc] sm:$0xf]
        %v1322 = vld [vmem:[%s12 + $0x10] sm:$0xf]
        %v1323 = vld [vmem:[%s12 + $0x14] sm:$0xf]
        %v1324 = vld [vmem:[%s12 + $0x18] sm:$0xf]
        %v1325 = vld [vmem:[%s12 + $0x1c] sm:$0xf]
        %v1326 = vld [vmem:[%s12 + $0x20] sm:$0xf]
        %v1327 = vld [vmem:[%s12 + $0x24] sm:$0xf]
        %v1328 = vld [vmem:[%s12 + $0x28] sm:$0xf]
        %v1329 = vld [vmem:[%s12 + $0x2c] sm:$0xf]
        %v1330 = vld [vmem:[%s12 + $0x30] sm:$0xf]
        %v1331 = vld [vmem:[%s12 + $0x34] sm:$0xf]
        %v1332 = vld [vmem:[%s12 + $0x38] sm:$0xf]
        %v1333 = vld [vmem:[%s12 + $0x3c] sm:$0xf]
        %v1350 = vunpack.c.l.b16 %v1318
        %v1351 = vunpack.c.l.b16 %v1319
        %v1352 = vunpack.c.l.b16 %v1320
        %v1353 = vunpack.c.l.b16 %v1321
        %v1354 = vunpack.c.l.b16 %v1322
        %v1355 = vunpack.c.l.b16 %v1323
        %v1356 = vunpack.c.l.b16 %v1324
        %v1357 = vunpack.c.l.b16 %v1325
        %v1358 = vunpack.c.l.b16 %v1326
        %v1359 = vunpack.c.l.b16 %v1327
        %v1360 = vunpack.c.l.b16 %v1328
        %v1361 = vunpack.c.l.b16 %v1329
        %v1362 = vunpack.c.l.b16 %v1330
        %v1363 = vunpack.c.l.b16 %v1331
        %v1364 = vunpack.c.l.b16 %v1332
        %v1365 = vunpack.c.l.b16 %v1333
        %v1366 = vpack.c.b16 %v1351, %v1350
        %v1367 = vpack.c.b16 %v1353, %v1352
        %v1368 = vpack.c.b16 %v1355, %v1354
        %v1369 = vpack.c.b16 %v1357, %v1356
        %v1370 = vpack.c.b16 %v1359, %v1358
        %v1371 = vpack.c.b16 %v1361, %v1360
        %v1372 = vpack.c.b16 %v1363, %v1362
        %v1373 = vpack.c.b16 %v1365, %v1364
        %1382 = vmatprep.subr.bf16.mxu0 0
        %1383 = vmatpush1.bf16.msra.mxu0 %v1366
        %1384 = vmatprep.subr.bf16.mxu0 0
        %1385 = vmatpush1.bf16.msra.mxu0 %v1367
        %1386 = vmatprep.subr.bf16.mxu0 0
        %1387 = vmatpush1.bf16.msra.mxu0 %v1368
        %1388 = vmatprep.subr.bf16.mxu0 0
        %1389 = vmatpush1.bf16.msra.mxu0 %v1369
        %1390 = vmatprep.subr.bf16.mxu0 0
        %1391 = vmatpush1.bf16.msra.mxu0 %v1370
        %1392 = vmatprep.subr.bf16.mxu0 0
        %1393 = vmatpush1.bf16.msra.mxu0 %v1371
        %1394 = vmatprep.subr.bf16.mxu0 0
        %1395 = vmatpush1.bf16.msra.mxu0 %v1372
        %1396 = vmatprep.subr.bf16.mxu0 0
        %1397 = vmatpush1.bf16.msra.mxu0 %v1373
        %1398 = vmatprep.subr.bf16.mxu0 0
        %1399 = vmatpush1.bf16.msra.mxu0 0
        %1400 = vmatprep.subr.bf16.mxu0 0
        %1401 = vmatpush1.bf16.msra.mxu0 0
        %1402 = vmatprep.subr.bf16.mxu0 0
        %1403 = vmatpush1.bf16.msra.mxu0 0
        %1404 = vmatprep.subr.bf16.mxu0 0
        %1405 = vmatpush1.bf16.msra.mxu0 0
        %1406 = vmatprep.subr.bf16.mxu0 0
        %1407 = vmatpush1.bf16.msra.mxu0 0
        %1408 = vmatprep.subr.bf16.mxu0 0
        %1409 = vmatpush1.bf16.msra.mxu0 0
        %1410 = vmatprep.subr.bf16.mxu0 0
        %1411 = vmatpush1.bf16.msra.mxu0 0
        %1412 = vmatprep.subr.bf16.mxu0 0
        %1413 = vmatpush1.bf16.msra.mxu0 0
        %1414 = vmatprep.mubr.bf16.mxu0 0
        %1415 = vmatmul.mubr.bf16.gmra.mrb[0].mxu0 %v1317
        %v1416 = vpop.f32.mrb[0].mxu0
        %v1417 = vadd.f32 0.0, %v1416
        %v1418 = vpop.f32.mrb[0].mxu0
        %v1419 = vpop.f32.mrb[0].mxu0
        %v1420 = vadd.f32 0.0, %v1419
        %v1421 = vpop.f32.mrb[0].mxu0
        %1422 = vdwg.mxu0
        %v1423 = vadd.f32 %v1187, %v1417
        %v1424 = vadd.f32 %v1188, %v1420
        %v1425 = vld [vmem:[%s13] sm:$0x1]
        %v1427 = vlaneseq
        %v1428 = vshrl.u32 %v1427, 7
        %v1429 = vsub.s32 0, %v1428
        %v1430 = vrot.slane %v1425, %v1429
        %v1432 = vadd.f32 %v1423, %v1430
        %v1433 = vadd.f32 %v1424, %v1430
        %1434 = vst.msk [vmem:[%s471] sm:$0xff] %vm488, %v1432
        %1435 = vst.msk [vmem:[%s471 + $0x8] sm:$0xff] %vm488, %v1433
        %s1436 = sand.u32 %s340, 1
        %s1437 = scalar_lea.sflag [#allocation4], %s1436
        %s1438 = sand.u32 %s340, 1
        %s1439 = smul.addr %s1438, 16
        %s1440 = scalar_lea.vmem [#allocation3], %s1439
        // Predicated region
        $region77: #{tpu_custom_call.1} parent=75 // pred_check
          %p1441 = pneg %p350
        $region78: #{tpu_custom_call.1} parent=75 // pred_check_branch
          %1443 = sbr.rel (%p1441) target = $region80
        $region79: #{tpu_custom_call.1} parent=75 // pred_region
          %s1445 = ssub.s32 256, 256
          %1446 = vsyncadd %s1437, %s1445
          %s1447 = smul.addr %s28, 2
          %s1448 = smul.addr %s1447, 128
          %s1449 = scalar_lea.hbm %s14, %s1448
          %s1450 = sshll.u32 %s1440, 4
          %s1451 = int_to_ptr.vmem [resolvable:$true] %s1450
          %1456 = dma.vmem_to_hbm [thread:$0]  %s1451, 256, %s1449, %s1437, 128, 128, 8
        $region80: #{tpu_custom_call.1} parent=75 // pred_fallthru
          _
      $region76: #{tpu_custom_call.1} parent=5 // pred_fallthru
        _
      %p1457 = scmp.le.s32.totalorder 2, %s23
      // Predicated region
      $region81: #{tpu_custom_call.1} parent=5 // pred_check
        %p1458 = pneg %p1457
      $region82: #{tpu_custom_call.1} parent=5 // pred_check_branch
        %1460 = sbr.rel (%p1458) target = $region84
      $region83: #{tpu_custom_call.1} parent=5 // pred_region
        %s1461 = ssub.s32 %s23, 2
        // Predicated region
        $region85: #{tpu_custom_call.1} parent=83 // pred_check
          %p1462 = pneg %p356
        $region86: #{tpu_custom_call.1} parent=83 // pred_check_branch
          %1464 = sbr.rel (%p1462) target = $region88
        $region87: #{tpu_custom_call.1} parent=83 // pred_region
          %s1465 = sand.u32 %s341, 1
          %s1466 = scalar_lea.sflag [#allocation4], %s1465
          %s1467 = sand.u32 %s341, 1
          %s1468 = smul.addr %s1467, 16
          %s1469 = scalar_lea.vmem [#allocation3], %s1468
          %1470 = dma.done %s1466, 256
        $region88: #{tpu_custom_call.1} parent=83 // pred_fallthru
          _
      $region84: #{tpu_custom_call.1} parent=5 // pred_fallthru
        _
    $region6: #{tpu_custom_call.1} parent=1 // loop_footer
      %s27 = sadd.s32 1, %s23
    $region7: #{tpu_custom_call.1} parent=1 // loop_footer_branch
      %22 = sbr.rel target = $region3
    $region8: #{tpu_custom_call.1} parent=1 // loop_exit
      _
    %1471 = vsyncpa [#allocation4], 1
    %s1472 = scalar_lea.sflag [#allocation4], 1
    %1473 = vsyncpa %s1472, 1

// kernel: tpu_custom_call.1
$region0: #{tpu_custom_call.1}
  #allocation0 [shape = 'u32[]', space=smem, size = 0x4, offset = 0x4, fixed_abs, tag = 'smem constant byte address 0x4 - core index']
  #allocation1 [shape = 'u32[144,128]{1,0:T(1,128)}', space=vmem, size = 0x12000, scoped, tag = 'internal scratch']
  #allocation2 [shape = 'bf16[16,32]{1,0:T(16,128)(2,1)}', space=vmem, size = 0x1000, scoped, tag = 'scratch operand']
  %s0 = inlined_call_operand.vmem [shape: f32[2,16,32], index: 0, kind: input, shape index: {}]
  %s1 = inlined_call_operand.vmem [shape: f32[2,1,16], index: 1, kind: input, shape index: {}]
  %s2 = inlined_call_operand.vmem [shape: f32[1,32], index: 2, kind: input, shape index: {}]
  %s3 = inlined_call_operand.vmem [shape: f32[1,32], index: 3, kind: input, shape index: {}]
  %s4 = inlined_call_operand.vmem [shape: bf16[32,96], index: 4, kind: input, shape index: {}]
  %s5 = inlined_call_operand.vmem [shape: f32[1,96], index: 5, kind: input, shape index: {}]
  %s6 = inlined_call_operand.vmem [shape: bf16[32,32], index: 6, kind: input, shape index: {}]
  %s7 = inlined_call_operand.vmem [shape: f32[1,32], index: 7, kind: input, shape index: {}]
  %s8 = inlined_call_operand.vmem [shape: f32[1,32], index: 8, kind: input, shape index: {}]
  %s9 = inlined_call_operand.vmem [shape: f32[1,32], index: 9, kind: input, shape index: {}]
  %s10 = inlined_call_operand.vmem [shape: bf16[32,128], index: 10, kind: input, shape index: {}]
  %s11 = inlined_call_operand.vmem [shape: f32[1,128], index: 11, kind: input, shape index: {}]
  %s12 = inlined_call_operand.vmem [shape: bf16[128,32], index: 12, kind: input, shape index: {}]
  %s13 = inlined_call_operand.vmem [shape: f32[1,32], index: 13, kind: input, shape index: {}]
  %s14 = inlined_call_operand.hbm [shape: f32[2,16,32], index: 14, kind: output, shape index: {}]
  %s15 = sld [smem:[#allocation0]]
  $region89: #{tpu_custom_call.1} parent=0
    _
  %s17 = ssub.s32 1, %s15
  %s18 = scalar_select 0, %s17, %s15
  $region1: #{tpu_custom_call.1} parent=0
    #allocation3 [shape = 'u8[16384]{0}', space=vmem, size = 0x4000, scoped, tag = 'output window, operand 0']
    #allocation4 [shape = 's32[2]{0}', space=sflag, size = 0x8, scoped, tag = 'scoped memory for tpu_custom_call.1']
    %19 = vsyncpa [#allocation4], 0
    %s20 = scalar_lea.sflag [#allocation4], 1
    %21 = vsyncpa %s20, 0
    loop: start=0, step=1, limit=4
    $region2: #{tpu_custom_call.1} parent=1 // loop_pre_header
      _
    $region3: #{tpu_custom_call.1} parent=1 // loop_header
      %s23 = sphi 0, %s27
      %p24 = scmp.ge.s32.totalorder %s23, 4
      %s33 = sphi 0, %s35
      %s36 = sphi 0, %s33
      %s37 = sphi 0, %s36
      %s53 = sphi 0, %s37
      %s59 = sphi 0, %s61
      %s62 = sphi 0, %s59
      %s63 = sphi 0, %s62
      %s79 = sphi 0, %s63
      %s83 = sphi 0, %s83
      %s85 = sphi 0, %s83
      %s86 = sphi 0, %s85
      %s100 = sphi 0, %s86
      %s104 = sphi 0, %s104
      %s106 = sphi 0, %s104
      %s107 = sphi 0, %s106
      %s121 = sphi 0, %s107
      %s125 = sphi 0, %s125
      %s127 = sphi 0, %s125
      %s128 = sphi 0, %s127
      %s142 = sphi 0, %s128
      %s146 = sphi 0, %s146
      %s148 = sphi 0, %s146
      %s149 = sphi 0, %s148
      %s163 = sphi 0, %s149
      %s167 = sphi 0, %s167
      %s169 = sphi 0, %s167
      %s170 = sphi 0, %s169
      %s184 = sphi 0, %s170
      %s188 = sphi 0, %s188
      %s190 = sphi 0, %s188
      %s191 = sphi 0, %s190
      %s205 = sphi 0, %s191
      %s209 = sphi 0, %s209
      %s211 = sphi 0, %s209
      %s212 = sphi 0, %s211
      %s226 = sphi 0, %s212
      %s230 = sphi 0, %s230
      %s232 = sphi 0, %s230
      %s233 = sphi 0, %s232
      %s247 = sphi 0, %s233
      %s251 = sphi 0, %s251
      %s253 = sphi 0, %s251
      %s254 = sphi 0, %s253
      %s268 = sphi 0, %s254
      %s272 = sphi 0, %s272
      %s274 = sphi 0, %s272
      %s275 = sphi 0, %s274
      %s289 = sphi 0, %s275
      %s293 = sphi 0, %s293
      %s295 = sphi 0, %s293
      %s296 = sphi 0, %s295
      %s310 = sphi 0, %s296
      %s314 = sphi 0, %s314
      %s316 = sphi 0, %s314
      %s317 = sphi 0, %s316
      %s331 = sphi 0, %s317
      %s337 = sphi 0, %s339
      %s340 = sphi 0, %s337
      %s341 = sphi 0, %s340
      %s357 = sphi 0, %s341
    $region4: #{tpu_custom_call.1} parent=1 // loop_header_branch
      %26 = sbr.rel (%p24) target = $region8
    $region5: #{tpu_custom_call.1} parent=1 // loop_body
      %s28 = ssub.s32 %s23, 1
      %s29 = ssub.s32 %s23, 2
      %s30 = sadd.s32 %s23, 1
      %s31 = ssub.s32 %s23, %s30
      %p32 = scmp.eq.s32.totalorder %s31, 0
      %s34 = sadd.s32 %s33, 1
      %s35 = scalar_select %p32, %s33, %s34
      %p38 = pneg %p32
      %p39 = scmp.eq.s32.totalorder %s23, 1
      %p40 = por %p38, %p39
      %p41 = scmp.ne.s32.totalorder %s33, %s36
      %p42 = scmp.eq.s32.totalorder %s23, 0
      %p43 = por %p41, %p42
      %p44 = scmp.ne.s32.totalorder %s33, %s36
      %p45 = scmp.eq.s32.totalorder %s28, 1
      %p46 = por %p44, %p45
      %p47 = scmp.ne.s32.totalorder %s36, %s37
      %p48 = scmp.eq.s32.totalorder %s28, 0
      %p49 = por %p47, %p48
      %p50 = scmp.ne.s32.totalorder %s36, %s37
      %p51 = scmp.eq.s32.totalorder %s29, 1
      %p52 = por %p50, %p51
      %p54 = scmp.ne.s32.totalorder %s37, %s53
      %p55 = scmp.eq.s32.totalorder %s29, 0
      %p56 = por %p54, %p55
      %s57 = ssub.s32 %s23, %s30
      %p58 = scmp.eq.s32.totalorder %s57, 0
      %s60 = sadd.s32 %s59, 1
      %s61 = scalar_select %p58, %s59, %s60
      %p64 = pneg %p58
      %p65 = scmp.eq.s32.totalorder %s23, 1
      %p66 = por %p64, %p65
      %p67 = scmp.ne.s32.totalorder %s59, %s62
      %p68 = scmp.eq.s32.totalorder %s23, 0
      %p69 = por %p67, %p68
      %p70 = scmp.ne.s32.totalorder %s59, %s62
      %p71 = scmp.eq.s32.totalorder %s28, 1
      %p72 = por %p70, %p71
      %p73 = scmp.ne.s32.totalorder %s62, %s63
      %p74 = scmp.eq.s32.totalorder %s28, 0
      %p75 = por %p73, %p74
      %p76 = scmp.ne.s32.totalorder %s62, %s63
      %p77 = scmp.eq.s32.totalorder %s29, 1
      %p78 = por %p76, %p77
      %p80 = scmp.ne.s32.totalorder %s63, %s79
      %p81 = scmp.eq.s32.totalorder %s29, 0
      %p82 = por %p80, %p81
      %s84 = sadd.s32 %s83, 1
      %p87 = scmp.eq.s32.totalorder %s23, 1
      %p88 = scmp.ne.s32.totalorder %s83, %s85
      %p89 = scmp.eq.s32.totalorder %s23, 0
      %p90 = por %p88, %p89
      %p91 = scmp.ne.s32.totalorder %s83, %s85
      %p92 = scmp.eq.s32.totalorder %s28, 1
      %p93 = por %p91, %p92
      %p94 = scmp.ne.s32.totalorder %s85, %s86
      %p95 = scmp.eq.s32.totalorder %s28, 0
      %p96 = por %p94, %p95
      %p97 = scmp.ne.s32.totalorder %s85, %s86
      %p98 = scmp.eq.s32.totalorder %s29, 1
      %p99 = por %p97, %p98
      %p101 = scmp.ne.s32.totalorder %s86, %s100
      %p102 = scmp.eq.s32.totalorder %s29, 0
      %p103 = por %p101, %p102
      %s105 = sadd.s32 %s104, 1
      %p108 = scmp.eq.s32.totalorder %s23, 1
      %p109 = scmp.ne.s32.totalorder %s104, %s106
      %p110 = scmp.eq.s32.totalorder %s23, 0
      %p111 = por %p109, %p110
      %p112 = scmp.ne.s32.totalorder %s104, %s106
      %p113 = scmp.eq.s32.totalorder %s28, 1
      %p114 = por %p112, %p113
      %p115 = scmp.ne.s32.totalorder %s106, %s107
      %p116 = scmp.eq.s32.totalorder %s28, 0
      %p117 = por %p115, %p116
      %p118 = scmp.ne.s32.totalorder %s106, %s107
      %p119 = scmp.eq.s32.totalorder %s29, 1
      %p120 = por %p118, %p119
      %p122 = scmp.ne.s32.totalorder %s107, %s121
      %p123 = scmp.eq.s32.totalorder %s29, 0
      %p124 = por %p122, %p123
      %s126 = sadd.s32 %s125, 1
      %p129 = scmp.eq.s32.totalorder %s23, 1
      %p130 = scmp.ne.s32.totalorder %s125, %s127
      %p131 = scmp.eq.s32.totalorder %s23, 0
      %p132 = por %p130, %p131
      %p133 = scmp.ne.s32.totalorder %s125, %s127
      %p134 = scmp.eq.s32.totalorder %s28, 1
      %p135 = por %p133, %p134
      %p136 = scmp.ne.s32.totalorder %s127, %s128
      %p137 = scmp.eq.s32.totalorder %s28, 0
      %p138 = por %p136, %p137
      %p139 = scmp.ne.s32.totalorder %s127, %s128
      %p140 = scmp.eq.s32.totalorder %s29, 1
      %p141 = por %p139, %p140
      %p143 = scmp.ne.s32.totalorder %s128, %s142
      %p144 = scmp.eq.s32.totalorder %s29, 0
      %p145 = por %p143, %p144
      %s147 = sadd.s32 %s146, 1
      %p150 = scmp.eq.s32.totalorder %s23, 1
      %p151 = scmp.ne.s32.totalorder %s146, %s148
      %p152 = scmp.eq.s32.totalorder %s23, 0
      %p153 = por %p151, %p152
      %p154 = scmp.ne.s32.totalorder %s146, %s148
      %p155 = scmp.eq.s32.totalorder %s28, 1
      %p156 = por %p154, %p155
      %p157 = scmp.ne.s32.totalorder %s148, %s149
      %p158 = scmp.eq.s32.totalorder %s28, 0
      %p159 = por %p157, %p158
      %p160 = scmp.ne.s32.totalorder %s148, %s149
      %p161 = scmp.eq.s32.totalorder %s29, 1
      %p162 = por %p160, %p161
      %p164 = scmp.ne.s32.totalorder %s149, %s163
      %p165 = scmp.eq.s32.totalorder %s29, 0
      %p166 = por %p164, %p165
      %s168 = sadd.s32 %s167, 1
      %p171 = scmp.eq.s32.totalorder %s23, 1
      %p172 = scmp.ne.s32.totalorder %s167, %s169
      %p173 = scmp.eq.s32.totalorder %s23, 0
      %p174 = por %p172, %p173
      %p175 = scmp.ne.s32.totalorder %s167, %s169
      %p176 = scmp.eq.s32.totalorder %s28, 1
      %p177 = por %p175, %p176
      %p178 = scmp.ne.s32.totalorder %s169, %s170
      %p179 = scmp.eq.s32.totalorder %s28, 0
      %p180 = por %p178, %p179
      %p181 = scmp.ne.s32.totalorder %s169, %s170
      %p182 = scmp.eq.s32.totalorder %s29, 1
      %p183 = por %p181, %p182
      %p185 = scmp.ne.s32.totalorder %s170, %s184
      %p186 = scmp.eq.s32.totalorder %s29, 0
      %p187 = por %p185, %p186
      %s189 = sadd.s32 %s188, 1
      %p192 = scmp.eq.s32.totalorder %s23, 1
      %p193 = scmp.ne.s32.totalorder %s188, %s190
      %p194 = scmp.eq.s32.totalorder %s23, 0
      %p195 = por %p193, %p194
      %p196 = scmp.ne.s32.totalorder %s188, %s190
      %p197 = scmp.eq.s32.totalorder %s28, 1
      %p198 = por %p196, %p197
      %p199 = scmp.ne.s32.totalorder %s190, %s191
      %p200 = scmp.eq.s32.totalorder %s28, 0
      %p201 = por %p199, %p200
      %p202 = scmp.ne.s32.totalorder %s190, %s191
      %p203 = scmp.eq.s32.totalorder %s29, 1
      %p204 = por %p202, %p203
      %p206 = scmp.ne.s32.totalorder %s191, %s205
      %p207 = scmp.eq.s32.totalorder %s29, 0
      %p208 = por %p206, %p207
      %s210 = sadd.s32 %s209, 1
      %p213 = scmp.eq.s32.totalorder %s23, 1
      %p214 = scmp.ne.s32.totalorder %s209, %s211
      %p215 = scmp.eq.s32.totalorder %s23, 0
      %p216 = por %p214, %p215
      %p217 = scmp.ne.s32.totalorder %s209, %s211
      %p218 = scmp.eq.s32.totalorder %s28, 1
      %p219 = por %p217, %p218
      %p220 = scmp.ne.s32.totalorder %s211, %s212
      %p221 = scmp.eq.s32.totalorder %s28, 0
      %p222 = por %p220, %p221
      %p223 = scmp.ne.s32.totalorder %s211, %s212
      %p224 = scmp.eq.s32.totalorder %s29, 1
      %p225 = por %p223, %p224
      %p227 = scmp.ne.s32.totalorder %s212, %s226
      %p228 = scmp.eq.s32.totalorder %s29, 0
      %p229 = por %p227, %p228
      %s231 = sadd.s32 %s230, 1
      %p234 = scmp.eq.s32.totalorder %s23, 1
      %p235 = scmp.ne.s32.totalorder %s230, %s232
      %p236 = scmp.eq.s32.totalorder %s23, 0
      %p237 = por %p235, %p236
      %p238 = scmp.ne.s32.totalorder %s230, %s232
      %p239 = scmp.eq.s32.totalorder %s28, 1
      %p240 = por %p238, %p239
      %p241 = scmp.ne.s32.totalorder %s232, %s233
      %p242 = scmp.eq.s32.totalorder %s28, 0
      %p243 = por %p241, %p242
      %p244 = scmp.ne.s32.totalorder %s232, %s233
      %p245 = scmp.eq.s32.totalorder %s29, 1
      %p246 = por %p244, %p245
      %p248 = scmp.ne.s32.totalorder %s233, %s247
      %p249 = scmp.eq.s32.totalorder %s29, 0
      %p250 = por %p248, %p249
      %s252 = sadd.s32 %s251, 1
      %p255 = scmp.eq.s32.totalorder %s23, 1
      %p256 = scmp.ne.s32.totalorder %s251, %s253
      %p257 = scmp.eq.s32.totalorder %s23, 0
      %p258 = por %p256, %p257
      %p259 = scmp.ne.s32.totalorder %s251, %s253
      %p260 = scmp.eq.s32.totalorder %s28, 1
      %p261 = por %p259, %p260
      %p262 = scmp.ne.s32.totalorder %s253, %s254
      %p263 = scmp.eq.s32.totalorder %s28, 0
      %p264 = por %p262, %p263
      %p265 = scmp.ne.s32.totalorder %s253, %s254
      %p266 = scmp.eq.s32.totalorder %s29, 1
      %p267 = por %p265, %p266
      %p269 = scmp.ne.s32.totalorder %s254, %s268
      %p270 = scmp.eq.s32.totalorder %s29, 0
      %p271 = por %p269, %p270
      %s273 = sadd.s32 %s272, 1
      %p276 = scmp.eq.s32.totalorder %s23, 1
      %p277 = scmp.ne.s32.totalorder %s272, %s274
      %p278 = scmp.eq.s32.totalorder %s23, 0
      %p279 = por %p277, %p278
      %p280 = scmp.ne.s32.totalorder %s272, %s274
      %p281 = scmp.eq.s32.totalorder %s28, 1
      %p282 = por %p280, %p281
      %p283 = scmp.ne.s32.totalorder %s274, %s275
      %p284 = scmp.eq.s32.totalorder %s28, 0
      %p285 = por %p283, %p284
      %p286 = scmp.ne.s32.totalorder %s274, %s275
      %p287 = scmp.eq.s32.totalorder %s29, 1
      %p288 = por %p286, %p287
      %p290 = scmp.ne.s32.totalorder %s275, %s289
      %p291 = scmp.eq.s32.totalorder %s29, 0
      %p292 = por %p290, %p291
      %s294 = sadd.s32 %s293, 1
      %p297 = scmp.eq.s32.totalorder %s23, 1
      %p298 = scmp.ne.s32.totalorder %s293, %s295
      %p299 = scmp.eq.s32.totalorder %s23, 0
      %p300 = por %p298, %p299
      %p301 = scmp.ne.s32.totalorder %s293, %s295
      %p302 = scmp.eq.s32.totalorder %s28, 1
      %p303 = por %p301, %p302
      %p304 = scmp.ne.s32.totalorder %s295, %s296
      %p305 = scmp.eq.s32.totalorder %s28, 0
      %p306 = por %p304, %p305
      %p307 = scmp.ne.s32.totalorder %s295, %s296
      %p308 = scmp.eq.s32.totalorder %s29, 1
      %p309 = por %p307, %p308
      %p311 = scmp.ne.s32.totalorder %s296, %s310
      %p312 = scmp.eq.s32.totalorder %s29, 0
      %p313 = por %p311, %p312
      %s315 = sadd.s32 %s314, 1
      %p318 = scmp.eq.s32.totalorder %s23, 1
      %p319 = scmp.ne.s32.totalorder %s314, %s316
      %p320 = scmp.eq.s32.totalorder %s23, 0
      %p321 = por %p319, %p320
      %p322 = scmp.ne.s32.totalorder %s314, %s316
      %p323 = scmp.eq.s32.totalorder %s28, 1
      %p324 = por %p322, %p323
      %p325 = scmp.ne.s32.totalorder %s316, %s317
      %p326 = scmp.eq.s32.totalorder %s28, 0
      %p327 = por %p325, %p326
      %p328 = scmp.ne.s32.totalorder %s316, %s317
      %p329 = scmp.eq.s32.totalorder %s29, 1
      %p330 = por %p328, %p329
      %p332 = scmp.ne.s32.totalorder %s317, %s331
      %p333 = scmp.eq.s32.totalorder %s29, 0
      %p334 = por %p332, %p333
      %s335 = ssub.s32 %s23, %s30
      %p336 = scmp.eq.s32.totalorder %s335, 0
      %s338 = sadd.s32 %s337, 1
      %s339 = scalar_select %p336, %s337, %s338
      %p342 = pneg %p336
      %p343 = scmp.eq.s32.totalorder %s23, 1
      %p344 = por %p342, %p343
      %p345 = scmp.ne.s32.totalorder %s337, %s340
      %p346 = scmp.eq.s32.totalorder %s23, 0
      %p347 = por %p345, %p346
      %p348 = scmp.ne.s32.totalorder %s337, %s340
      %p349 = scmp.eq.s32.totalorder %s28, 1
      %p350 = por %p348, %p349
      %p351 = scmp.ne.s32.totalorder %s340, %s341
      %p352 = scmp.eq.s32.totalorder %s28, 0
      %p353 = por %p351, %p352
      %p354 = scmp.ne.s32.totalorder %s340, %s341
      %p355 = scmp.eq.s32.totalorder %s29, 1
      %p356 = por %p354, %p355
      %p358 = scmp.ne.s32.totalorder %s341, %s357
      %p359 = scmp.eq.s32.totalorder %s29, 0
      %p360 = por %p358, %p359
      %p361 = scmp.le.s32.totalorder 1, %s23
      %p362 = scmp.lt.s32.totalorder %s23, 3
      %p363 = pnand %p361, %p362
      %p364 = pneg %p363
      // Predicated region
      $region9: #{tpu_custom_call.1} parent=5 // pred_check
        _
      $region10: #{tpu_custom_call.1} parent=5 // pred_check_branch
        %366 = sbr.rel (%p363) target = $region12
      $region11: #{tpu_custom_call.1} parent=5 // pred_region
        %s367 = ssub.s32 %s23, 1
        // Predicated region
        $region13: #{tpu_custom_call.1} parent=11 // pred_check
          %p368 = pneg %p96
        $region14: #{tpu_custom_call.1} parent=11 // pred_check_branch
          %370 = sbr.rel (%p368) target = $region16
        $region15: #{tpu_custom_call.1} parent=11 // pred_region
          _
        $region16: #{tpu_custom_call.1} parent=11 // pred_fallthru
          _
        // Predicated region
        $region17: #{tpu_custom_call.1} parent=11 // pred_check
          %p371 = pneg %p117
        $region18: #{tpu_custom_call.1} parent=11 // pred_check_branch
          %373 = sbr.rel (%p371) target = $region20
        $region19: #{tpu_custom_call.1} parent=11 // pred_region
          _
        $region20: #{tpu_custom_call.1} parent=11 // pred_fallthru
          _
        // Predicated region
        $region21: #{tpu_custom_call.1} parent=11 // pred_check
          %p374 = pneg %p138
        $region22: #{tpu_custom_call.1} parent=11 // pred_check_branch
          %376 = sbr.rel (%p374) target = $region24
        $region23: #{tpu_custom_call.1} parent=11 // pred_region
          _
        $region24: #{tpu_custom_call.1} parent=11 // pred_fallthru
          _
        // Predicated region
        $region25: #{tpu_custom_call.1} parent=11 // pred_check
          %p377 = pneg %p159
        $region26: #{tpu_custom_call.1} parent=11 // pred_check_branch
          %379 = sbr.rel (%p377) target = $region28
        $region27: #{tpu_custom_call.1} parent=11 // pred_region
          _
        $region28: #{tpu_custom_call.1} parent=11 // pred_fallthru
          _
        // Predicated region
        $region29: #{tpu_custom_call.1} parent=11 // pred_check
          %p380 = pneg %p180
        $region30: #{tpu_custom_call.1} parent=11 // pred_check_branch
          %382 = sbr.rel (%p380) target = $region32
        $region31: #{tpu_custom_call.1} parent=11 // pred_region
          _
        $region32: #{tpu_custom_call.1} parent=11 // pred_fallthru
          _
        // Predicated region
        $region33: #{tpu_custom_call.1} parent=11 // pred_check
          %p383 = pneg %p201
        $region34: #{tpu_custom_call.1} parent=11 // pred_check_branch
          %385 = sbr.rel (%p383) target = $region36
        $region35: #{tpu_custom_call.1} parent=11 // pred_region
          _
        $region36: #{tpu_custom_call.1} parent=11 // pred_fallthru
          _
        // Predicated region
        $region37: #{tpu_custom_call.1} parent=11 // pred_check
          %p386 = pneg %p222
        $region38: #{tpu_custom_call.1} parent=11 // pred_check_branch
          %388 = sbr.rel (%p386) target = $region40
        $region39: #{tpu_custom_call.1} parent=11 // pred_region
          _
        $region40: #{tpu_custom_call.1} parent=11 // pred_fallthru
          _
        // Predicated region
        $region41: #{tpu_custom_call.1} parent=11 // pred_check
          %p389 = pneg %p243
        $region42: #{tpu_custom_call.1} parent=11 // pred_check_branch
          %391 = sbr.rel (%p389) target = $region44
        $region43: #{tpu_custom_call.1} parent=11 // pred_region
          _
        $region44: #{tpu_custom_call.1} parent=11 // pred_fallthru
          _
        // Predicated region
        $region45: #{tpu_custom_call.1} parent=11 // pred_check
          %p392 = pneg %p264
        $region46: #{tpu_custom_call.1} parent=11 // pred_check_branch
          %394 = sbr.rel (%p392) target = $region48
        $region47: #{tpu_custom_call.1} parent=11 // pred_region
          _
        $region48: #{tpu_custom_call.1} parent=11 // pred_fallthru
          _
        // Predicated region
        $region49: #{tpu_custom_call.1} parent=11 // pred_check
          %p395 = pneg %p285
        $region50: #{tpu_custom_call.1} parent=11 // pred_check_branch
          %397 = sbr.rel (%p395) target = $region52
        $region51: #{tpu_custom_call.1} parent=11 // pred_region
          _
        $region52: #{tpu_custom_call.1} parent=11 // pred_fallthru
          _
        // Predicated region
        $region53: #{tpu_custom_call.1} parent=11 // pred_check
          %p398 = pneg %p306
        $region54: #{tpu_custom_call.1} parent=11 // pred_check_branch
          %400 = sbr.rel (%p398) target = $region56
        $region55: #{tpu_custom_call.1} parent=11 // pred_region
          _
        $region56: #{tpu_custom_call.1} parent=11 // pred_fallthru
          _
        // Predicated region
        $region57: #{tpu_custom_call.1} parent=11 // pred_check
          %p401 = pneg %p327
        $region58: #{tpu_custom_call.1} parent=11 // pred_check_branch
          %403 = sbr.rel (%p401) target = $region60
        $region59: #{tpu_custom_call.1} parent=11 // pred_region
          _
        $region60: #{tpu_custom_call.1} parent=11 // pred_fallthru
          _
      $region12: #{tpu_custom_call.1} parent=5 // pred_fallthru
        _
      %p404 = scmp.lt.s32.totalorder %s23, 2
      // Predicated region
      $region61: #{tpu_custom_call.1} parent=5 // pred_check
        %p405 = pneg %p404
      $region62: #{tpu_custom_call.1} parent=5 // pred_check_branch
        %407 = sbr.rel (%p405) target = $region64
      $region63: #{tpu_custom_call.1} parent=5 // pred_region
        // Predicated region
        $region65: #{tpu_custom_call.1} parent=63 // pred_check
          %p408 = pneg %p43
        $region66: #{tpu_custom_call.1} parent=63 // pred_check_branch
          %410 = sbr.rel (%p408) target = $region68
        $region67: #{tpu_custom_call.1} parent=63 // pred_region
          %p411 = scmp.lt.s32.totalorder %s23, 1
          %s412 = scalar_select %p411, %s23, 1
          %s413 = smul.addr %s412, 2
          %s414 = smul.addr %s413, 8
          %s415 = scalar_lea.vmem %s0, %s414
        $region68: #{tpu_custom_call.1} parent=63 // pred_fallthru
          _
        // Predicated region
        $region69: #{tpu_custom_call.1} parent=63 // pred_check
          %p416 = pneg %p69
        $region70: #{tpu_custom_call.1} parent=63 // pred_check_branch
          %418 = sbr.rel (%p416) target = $region72
        $region71: #{tpu_custom_call.1} parent=63 // pred_region
          %p419 = scmp.lt.s32.totalorder %s23, 1
          %s420 = scalar_select %p419, %s23, 1
          %s421 = scalar_lea.vmem %s1, %s420
        $region72: #{tpu_custom_call.1} parent=63 // pred_fallthru
          _
      $region64: #{tpu_custom_call.1} parent=5 // pred_fallthru
        _
      %p422 = scmp.le.s32.totalorder 1, %s23
      %p423 = scmp.lt.s32.totalorder %s23, 3
      %p424 = pnand %p422, %p423
      %p425 = pneg %p424
      // Predicated region
      $region73: #{tpu_custom_call.1} parent=5 // pred_check
        _
      $region74: #{tpu_custom_call.1} parent=5 // pred_check_branch
        %427 = sbr.rel (%p424) target = $region76
      $region75: #{tpu_custom_call.1} parent=5 // pred_region
        %s428 = ssub.s32 %s23, 1
        %p429 = scmp.lt.s32.totalorder %s28, 1
        %s430 = scalar_select %p429, %s28, 1
        %s431 = smul.addr %s430, 2
        %s432 = smul.addr %s431, 8
        %s433 = scalar_lea.vmem %s0, %s432
        %p434 = pneg %p49
        %p435 = pneg %p46
        %p436 = scmp.lt.s32.totalorder %s28, 1
        %s437 = scalar_select %p436, %s28, 1
        %s438 = scalar_lea.vmem %s1, %s437
        %p439 = pneg %p75
        %p440 = pneg %p72
        %p441 = pneg %p96
        %p442 = pneg %p93
        %p443 = pneg %p117
        %p444 = pneg %p114
        %p445 = pneg %p138
        %p446 = pneg %p135
        %p447 = pneg %p159
        %p448 = pneg %p156
        %p449 = pneg %p180
        %p450 = pneg %p177
        %p451 = pneg %p201
        %p452 = pneg %p198
        %p453 = pneg %p222
        %p454 = pneg %p219
        %p455 = pneg %p243
        %p456 = pneg %p240
        %p457 = pneg %p264
        %p458 = pneg %p261
        %p459 = pneg %p285
        %p460 = pneg %p282
        %p461 = pneg %p306
        %p462 = pneg %p303
        %p463 = pneg %p327
        %p464 = pneg %p324
        %p465 = pneg %p353
        %p466 = pneg %p350
        %s467 = sand.u32 %s340, 1
        %s468 = scalar_lea.sflag [#allocation4], %s467
        %s469 = sand.u32 %s340, 1
        %s470 = smul.addr %s469, 16
        %s471 = scalar_lea.vmem [#allocation3], %s470
        %p472 = scmp.lt.s32.totalorder %s28, 1
        %s473 = scalar_select %p472, %s28, 1
        %s474 = smul.addr %s473, 2
        %s475 = smul.addr %s474, 8
        %s476 = scalar_lea.vmem %s0, %s475
        %p477 = scmp.lt.s32.totalorder %s28, 1
        %s478 = scalar_select %p477, %s28, 1
        %s479 = scalar_lea.vmem %s1, %s478
        %v481 = vld [vmem:[%s476] sm:$0xff]
        %v482 = vld [vmem:[%s476 + $0x8] sm:$0xff]
        %v483 = vld [vmem:[%s479] sm:$0x1]
        %vm484 = vcmp.gt.f32.partialorder %v483, 0.5
        %v485 = vsel %vm484, 0.0, -1e+30
        %v486 = vld [vmem:[%s2] sm:$0x1]
        %v487 = vld [vmem:[%s3] sm:$0x1]
        %vm488 = vcmask 261120
        %v489 = vsel %vm488, %v481, 0.0
        %490 = vadd.xlane.f32.xlu0 %v489
        %v491 = vpop.xlane.xlu0 %490
        %v492 = vsel %vm488, %v482, 0.0
        %493 = vadd.xlane.f32.xlu0 %v492
        %v494 = vpop.xlane.xlu0 %493
        %v495 = vrcp.pop 32.0
        %v496 = vmul.f32 %v491, %v495
        %v497 = vmul.f32 %v494, %v495
        %v498 = vsub.f32 %v481, %v496
        %v499 = vsub.f32 %v482, %v497
        %v500 = vmul.f32 %v498, %v498
        %v501 = vmul.f32 %v499, %v499
        %v502 = vsel %vm488, %v500, 0.0
        %503 = vadd.xlane.f32.xlu0 %v502
        %v504 = vpop.xlane.xlu0 %503
        %v505 = vsel %vm488, %v501, 0.0
        %506 = vadd.xlane.f32.xlu0 %v505
        %v507 = vpop.xlane.xlu0 %506
        %v508 = vmul.f32 %v504, %v495
        %v509 = vmul.f32 %v507, %v495
        %v510 = vadd.f32 %v508, 1e-05
        %v511 = vadd.f32 %v509, 1e-05
        %v512 = vrsqrt.pop %v510
        %v513 = vrsqrt.pop %v511
        %v514 = vmul.f32 %v498, %v512
        %v515 = vmul.f32 %v499, %v513
        %v517 = vlaneseq
        %v518 = vshrl.u32 %v517, 7
        %v519 = vsub.s32 0, %v518
        %v520 = vrot.slane %v486, %v519
        %v522 = vmul.f32 %v514, %v520
        %v523 = vmul.f32 %v515, %v520
        %v525 = vlaneseq
        %v526 = vshrl.u32 %v525, 7
        %v527 = vsub.s32 0, %v526
        %v528 = vrot.slane %v487, %v527
        %v530 = vadd.f32 %v522, %v528
        %v531 = vadd.f32 %v523, %v528
        %v532 = vpack.c.bf16 %v531, %v530
        %v533 = vld [vmem:[%s4] sm:$0xf]
        %v534 = vld [vmem:[%s4 + $0x4] sm:$0xf]
        %v535 = vld [vmem:[%s4 + $0x8] sm:$0xf]
        %v536 = vld [vmem:[%s4 + $0xc] sm:$0xf]
        %v541 = vunpack.c.l.b16 %v533
        %v542 = vunpack.c.l.b16 %v534
        %v543 = vunpack.c.l.b16 %v535
        %v544 = vunpack.c.l.b16 %v536
        %v545 = vpack.c.b16 %v542, %v541
        %v546 = vpack.c.b16 %v544, %v543
        %v550 = vsel %vm488, %v532, 0
        %552 = vmatprep.subr.bf16.mxu0 0
        %553 = vmatpush1.bf16.msra.mxu0 %v545
        %554 = vmatprep.subr.bf16.mxu0 0
        %555 = vmatpush1.bf16.msra.mxu0 %v546
        %556 = vmatprep.subr.bf16.mxu0 0
        %557 = vmatpush1.bf16.msra.mxu0 0
        %558 = vmatprep.subr.bf16.mxu0 0
        %559 = vmatpush1.bf16.msra.mxu0 0
        %560 = vmatprep.subr.bf16.mxu0 0
        %561 = vmatpush1.bf16.msra.mxu0 0
        %562 = vmatprep.subr.bf16.mxu0 0
        %563 = vmatpush1.bf16.msra.mxu0 0
        %564 = vmatprep.subr.bf16.mxu0 0
        %565 = vmatpush1.bf16.msra.mxu0 0
        %566 = vmatprep.subr.bf16.mxu0 0
        %567 = vmatpush1.bf16.msra.mxu0 0
        %568 = vmatprep.subr.bf16.mxu0 0
        %569 = vmatpush1.bf16.msra.mxu0 0
        %570 = vmatprep.subr.bf16.mxu0 0
        %571 = vmatpush1.bf16.msra.mxu0 0
        %572 = vmatprep.subr.bf16.mxu0 0
        %573 = vmatpush1.bf16.msra.mxu0 0
        %574 = vmatprep.subr.bf16.mxu0 0
        %575 = vmatpush1.bf16.msra.mxu0 0
        %576 = vmatprep.subr.bf16.mxu0 0
        %577 = vmatpush1.bf16.msra.mxu0 0
        %578 = vmatprep.subr.bf16.mxu0 0
        %579 = vmatpush1.bf16.msra.mxu0 0
        %580 = vmatprep.subr.bf16.mxu0 0
        %581 = vmatpush1.bf16.msra.mxu0 0
        %582 = vmatprep.subr.bf16.mxu0 0
        %583 = vmatpush1.bf16.msra.mxu0 0
        %584 = vmatprep.mubr.bf16.mxu0 0
        %585 = vmatmul.mubr.bf16.gmra.mrb[0].mxu0 %v550
        %v586 = vpop.f32.mrb[0].mxu0
        %v587 = vadd.f32 0.0, %v586
        %v588 = vpop.f32.mrb[0].mxu0
        %v589 = vpop.f32.mrb[0].mxu0
        %v590 = vadd.f32 0.0, %v589
        %v591 = vpop.f32.mrb[0].mxu0
        %592 = vdwg.mxu0
        %v593 = vld [vmem:[%s5] sm:$0x1]
        %v595 = vlaneseq
        %v596 = vshrl.u32 %v595, 7
        %v597 = vsub.s32 0, %v596
        %v598 = vrot.slane %v593, %v597
        %v600 = vadd.f32 %v587, %v598
        %v601 = vadd.f32 %v590, %v598
        %v602 = vpack.c.bf16 %v601, %v600
        %v604 = vlaneseq
        %v605 = vshrl.u32 %v604, 7
        %v606 = vsub.s32 0, %v605
        %v607 = vrot.slane %v485, %v606
        %610 = vrot.lane.b32.xlu0 %v602, 96
        %v611 = vpop.permute.xlu0 %610
        %vm612 = vcmask 64512
        %v614 = vsel %vm612, %v602, 0
        %v617 = vsel %vm612, %v611, 0
        %619 = vmatprep.subr.bf16.mxu0 0
        %620 = vmatpush1.bf16.xpose.msra.mxu0 %v617
        %621 = vmatprep.subr.bf16.mxu0 0
        %622 = vmatpush1.bf16.xpose.msra.mxu0 0
        %623 = vmatprep.subr.bf16.mxu0 0
        %624 = vmatpush1.bf16.xpose.msra.mxu0 0
        %625 = vmatprep.subr.bf16.mxu0 0
        %626 = vmatpush1.bf16.xpose.msra.mxu0 0
        %627 = vmatprep.subr.bf16.mxu0 0
        %628 = vmatpush1.bf16.xpose.msra.mxu0 0
        %629 = vmatprep.subr.bf16.mxu0 0
        %630 = vmatpush1.bf16.xpose.msra.mxu0 0
        %631 = vmatprep.subr.bf16.mxu0 0
        %632 = vmatpush1.bf16.xpose.msra.mxu0 0
        %633 = vmatprep.subr.bf16.mxu0 0
        %634 = vmatpush1.bf16.xpose.msra.mxu0 0
        %635 = vmatprep.subr.bf16.mxu0 0
        %636 = vmatpush1.bf16.xpose.msra.mxu0 0
        %637 = vmatprep.subr.bf16.mxu0 0
        %638 = vmatpush1.bf16.xpose.msra.mxu0 0
        %639 = vmatprep.subr.bf16.mxu0 0
        %640 = vmatpush1.bf16.xpose.msra.mxu0 0
        %641 = vmatprep.subr.bf16.mxu0 0
        %642 = vmatpush1.bf16.xpose.msra.mxu0 0
        %643 = vmatprep.subr.bf16.mxu0 0
        %644 = vmatpush1.bf16.xpose.msra.mxu0 0
        %645 = vmatprep.subr.bf16.mxu0 0
        %646 = vmatpush1.bf16.xpose.msra.mxu0 0
        %647 = vmatprep.subr.bf16.mxu0 0
        %648 = vmatpush1.bf16.xpose.msra.mxu0 0
        %649 = vmatprep.subr.bf16.mxu0 0
        %650 = vmatpush1.bf16.xpose.msra.mxu0 0
        %651 = vmatprep.mubr.bf16.mxu0 0
        %652 = vmatmul.mubr.bf16.gmra.mrb[0].mxu0 %v614
        %v653 = vpop.f32.mrb[0].mxu0
        %v654 = vadd.f32 %v607, %v653
        %v655 = vpop.f32.mrb[0].mxu0
        %v656 = vpop.f32.mrb[0].mxu0
        %v657 = vadd.f32 %v607, %v656
        %v658 = vpop.f32.mrb[0].mxu0
        %659 = vdwg.mxu0
        %vm660 = vcmask 130048
        %v661 = vsel %vm660, %v654, -inf
        %662 = vmax.xlane.f32.xlu0 %v661
        %v663 = vpop.xlane.xlu0 %662
        %v664 = vsel %vm660, %v657, -inf
        %665 = vmax.xlane.f32.xlu0 %v664
        %v666 = vpop.xlane.xlu0 %665
        %v667 = vsub.f32 %v654, %v663
        %v668 = vsub.f32 %v657, %v666
        %v669 = vmul.f32 %v667, 1.442695
        %v670 = vpow.pop %v669
        %v671 = vmul.f32 %v668, 1.442695
        %v672 = vpow.pop %v671
        %v673 = vsel %vm660, %v670, 0.0
        %674 = vadd.xlane.f32.xlu0 %v673
        %v675 = vpop.xlane.xlu0 %674
        %v676 = vsel %vm660, %v672, 0.0
        %677 = vadd.xlane.f32.xlu0 %v676
        %v678 = vpop.xlane.xlu0 %677
        %v679 = vrcp.pop %v675
        %v680 = vrcp.pop %v678
        %v681 = vmul.f32 %v670, %v679
        %v682 = vmul.f32 %v672, %v680
        %v683 = vpack.c.bf16 %v682, %v681
        %684 = vrot.lane.b32.xlu0 %v602, 64
        %v685 = vpop.permute.xlu0 %684
        %v688 = vsel %vm660, %v683, 0
        %690 = vmatprep.subr.bf16.mxu0 0
        %691 = vmatpush1.bf16.msra.mxu0 %v685
        %692 = vmatprep.subr.bf16.mxu0 0
        %693 = vmatpush1.bf16.msra.mxu0 0
        %694 = vmatprep.subr.bf16.mxu0 0
        %695 = vmatpush1.bf16.msra.mxu0 0
        %696 = vmatprep.subr.bf16.mxu0 0
        %697 = vmatpush1.bf16.msra.mxu0 0
        %698 = vmatprep.subr.bf16.mxu0 0
        %699 = vmatpush1.bf16.msra.mxu0 0
        %700 = vmatprep.subr.bf16.mxu0 0
        %701 = vmatpush1.bf16.msra.mxu0 0
        %702 = vmatprep.subr.bf16.mxu0 0
        %703 = vmatpush1.bf16.msra.mxu0 0
        %704 = vmatprep.subr.bf16.mxu0 0
        %705 = vmatpush1.bf16.msra.mxu0 0
        %706 = vmatprep.subr.bf16.mxu0 0
        %707 = vmatpush1.bf16.msra.mxu0 0
        %708 = vmatprep.subr.bf16.mxu0 0
        %709 = vmatpush1.bf16.msra.mxu0 0
        %710 = vmatprep.subr.bf16.mxu0 0
        %711 = vmatpush1.bf16.msra.mxu0 0
        %712 = vmatprep.subr.bf16.mxu0 0
        %713 = vmatpush1.bf16.msra.mxu0 0
        %714 = vmatprep.subr.bf16.mxu0 0
        %715 = vmatpush1.bf16.msra.mxu0 0
        %716 = vmatprep.subr.bf16.mxu0 0
        %717 = vmatpush1.bf16.msra.mxu0 0
        %718 = vmatprep.subr.bf16.mxu0 0
        %719 = vmatpush1.bf16.msra.mxu0 0
        %720 = vmatprep.subr.bf16.mxu0 0
        %721 = vmatpush1.bf16.msra.mxu0 0
        %722 = vmatprep.mubr.bf16.mxu0 0
        %723 = vmatmul.mubr.bf16.gmra.mrb[0].mxu0 %v688
        %v724 = vpop.f32.mrb[0].mxu0
        %v725 = vadd.f32 0.0, %v724
        %v726 = vpop.f32.mrb[0].mxu0
        %v727 = vpop.f32.mrb[0].mxu0
        %v728 = vadd.f32 0.0, %v727
        %v729 = vpop.f32.mrb[0].mxu0
        %730 = vdwg.mxu0
        %v731 = vpack.c.bf16 %v728, %v725
        %732 = vst.msk [vmem:[#allocation2] sm:$0xff] %vm612, %v731
        %733 = vrot.lane.b32.xlu0 %v602, 120
        %v734 = vpop.permute.xlu0 %733
        %735 = vrot.lane.b32.xlu0 %v602, 88
        %v736 = vpop.permute.xlu0 %735
        %v738 = vsel %vm612, %v734, 0
        %v741 = vsel %vm612, %v736, 0
        %743 = vmatprep.subr.bf16.mxu0 0
        %744 = vmatpush1.bf16.xpose.msra.mxu0 %v741
        %745 = vmatprep.subr.bf16.mxu0 0
        %746 = vmatpush1.bf16.xpose.msra.mxu0 0
        %747 = vmatprep.subr.bf16.mxu0 0
        %748 = vmatpush1.bf16.xpose.msra.mxu0 0
        %749 = vmatprep.subr.bf16.mxu0 0
        %750 = vmatpush1.bf16.xpose.msra.mxu0 0
        %751 = vmatprep.subr.bf16.mxu0 0
        %752 = vmatpush1.bf16.xpose.msra.mxu0 0
        %753 = vmatprep.subr.bf16.mxu0 0
        %754 = vmatpush1.bf16.xpose.msra.mxu0 0
        %755 = vmatprep.subr.bf16.mxu0 0
        %756 = vmatpush1.bf16.xpose.msra.mxu0 0
        %757 = vmatprep.subr.bf16.mxu0 0
        %758 = vmatpush1.bf16.xpose.msra.mxu0 0
        %759 = vmatprep.subr.bf16.mxu0 0
        %760 = vmatpush1.bf16.xpose.msra.mxu0 0
        %761 = vmatprep.subr.bf16.mxu0 0
        %762 = vmatpush1.bf16.xpose.msra.mxu0 0
        %763 = vmatprep.subr.bf16.mxu0 0
        %764 = vmatpush1.bf16.xpose.msra.mxu0 0
        %765 = vmatprep.subr.bf16.mxu0 0
        %766 = vmatpush1.bf16.xpose.msra.mxu0 0
        %767 = vmatprep.subr.bf16.mxu0 0
        %768 = vmatpush1.bf16.xpose.msra.mxu0 0
        %769 = vmatprep.subr.bf16.mxu0 0
        %770 = vmatpush1.bf16.xpose.msra.mxu0 0
        %771 = vmatprep.subr.bf16.mxu0 0
        %772 = vmatpush1.bf16.xpose.msra.mxu0 0
        %773 = vmatprep.subr.bf16.mxu0 0
        %774 = vmatpush1.bf16.xpose.msra.mxu0 0
        %775 = vmatprep.mubr.bf16.mxu0 0
        %776 = vmatmul.mubr.bf16.gmra.mrb[0].mxu0 %v738
        %v777 = vpop.f32.mrb[0].mxu0
        %v778 = vadd.f32 %v607, %v777
        %v779 = vpop.f32.mrb[0].mxu0
        %v780 = vpop.f32.mrb[0].mxu0
        %v781 = vadd.f32 %v607, %v780
        %v782 = vpop.f32.mrb[0].mxu0
        %783 = vdwg.mxu0
        %v784 = vsel %vm660, %v778, -inf
        %785 = vmax.xlane.f32.xlu0 %v784
        %v786 = vpop.xlane.xlu0 %785
        %v787 = vsel %vm660, %v781, -inf
        %788 = vmax.xlane.f32.xlu0 %v787
        %v789 = vpop.xlane.xlu0 %788
        %v790 = vsub.f32 %v778, %v786
        %v791 = vsub.f32 %v781, %v789
        %v792 = vmul.f32 %v790, 1.442695
        %v793 = vpow.pop %v792
        %v794 = vmul.f32 %v791, 1.442695
        %v795 = vpow.pop %v794
        %v796 = vsel %vm660, %v793, 0.0
        %797 = vadd.xlane.f32.xlu0 %v796
        %v798 = vpop.xlane.xlu0 %797
        %v799 = vsel %vm660, %v795, 0.0
        %800 = vadd.xlane.f32.xlu0 %v799
        %v801 = vpop.xlane.xlu0 %800
        %v802 = vrcp.pop %v798
        %v803 = vrcp.pop %v801
        %v804 = vmul.f32 %v793, %v802
        %v805 = vmul.f32 %v795, %v803
        %v806 = vpack.c.bf16 %v805, %v804
        %807 = vrot.lane.b32.xlu0 %v602, 56
        %v808 = vpop.permute.xlu0 %807
        %v811 = vsel %vm660, %v806, 0
        %813 = vmatprep.subr.bf16.mxu0 0
        %814 = vmatpush1.bf16.msra.mxu0 %v808
        %815 = vmatprep.subr.bf16.mxu0 0
        %816 = vmatpush1.bf16.msra.mxu0 0
        %817 = vmatprep.subr.bf16.mxu0 0
        %818 = vmatpush1.bf16.msra.mxu0 0
        %819 = vmatprep.subr.bf16.mxu0 0
        %820 = vmatpush1.bf16.msra.mxu0 0
        %821 = vmatprep.subr.bf16.mxu0 0
        %822 = vmatpush1.bf16.msra.mxu0 0
        %823 = vmatprep.subr.bf16.mxu0 0
        %824 = vmatpush1.bf16.msra.mxu0 0
        %825 = vmatprep.subr.bf16.mxu0 0
        %826 = vmatpush1.bf16.msra.mxu0 0
        %827 = vmatprep.subr.bf16.mxu0 0
        %828 = vmatpush1.bf16.msra.mxu0 0
        %829 = vmatprep.subr.bf16.mxu0 0
        %830 = vmatpush1.bf16.msra.mxu0 0
        %831 = vmatprep.subr.bf16.mxu0 0
        %832 = vmatpush1.bf16.msra.mxu0 0
        %833 = vmatprep.subr.bf16.mxu0 0
        %834 = vmatpush1.bf16.msra.mxu0 0
        %835 = vmatprep.subr.bf16.mxu0 0
        %836 = vmatpush1.bf16.msra.mxu0 0
        %837 = vmatprep.subr.bf16.mxu0 0
        %838 = vmatpush1.bf16.msra.mxu0 0
        %839 = vmatprep.subr.bf16.mxu0 0
        %840 = vmatpush1.bf16.msra.mxu0 0
        %841 = vmatprep.subr.bf16.mxu0 0
        %842 = vmatpush1.bf16.msra.mxu0 0
        %843 = vmatprep.subr.bf16.mxu0 0
        %844 = vmatpush1.bf16.msra.mxu0 0
        %845 = vmatprep.mubr.bf16.mxu0 0
        %846 = vmatmul.mubr.bf16.gmra.mrb[0].mxu0 %v811
        %v847 = vpop.f32.mrb[0].mxu0
        %v848 = vadd.f32 0.0, %v847
        %v849 = vpop.f32.mrb[0].mxu0
        %v850 = vpop.f32.mrb[0].mxu0
        %v851 = vadd.f32 0.0, %v850
        %v852 = vpop.f32.mrb[0].mxu0
        %853 = vdwg.mxu0
        %v854 = vpack.c.bf16 %v851, %v848
        %856 = vrot.lane.b32.xlu0 %v854, 8
        %v857 = vpop.permute.xlu0 %856
        %vm859 = vcmask 130112
        %860 = vst.msk [vmem:[#allocation2] sm:$0xff] %vm859, %v857
        %861 = vrot.lane.b32.xlu0 %v602, 112
        %v862 = vpop.permute.xlu0 %861
        %863 = vrot.lane.b32.xlu0 %v602, 80
        %v864 = vpop.permute.xlu0 %863
        %v866 = vsel %vm612, %v862, 0
        %v869 = vsel %vm612, %v864, 0
        %871 = vmatprep.subr.bf16.mxu0 0
        %872 = vmatpush1.bf16.xpose.msra.mxu0 %v869
        %873 = vmatprep.subr.bf16.mxu0 0
        %874 = vmatpush1.bf16.xpose.msra.mxu0 0
        %875 = vmatprep.subr.bf16.mxu0 0
        %876 = vmatpush1.bf16.xpose.msra.mxu0 0
        %877 = vmatprep.subr.bf16.mxu0 0
        %878 = vmatpush1.bf16.xpose.msra.mxu0 0
        %879 = vmatprep.subr.bf16.mxu0 0
        %880 = vmatpush1.bf16.xpose.msra.mxu0 0
        %881 = vmatprep.subr.bf16.mxu0 0
        %882 = vmatpush1.bf16.xpose.msra.mxu0 0
        %883 = vmatprep.subr.bf16.mxu0 0
        %884 = vmatpush1.bf16.xpose.msra.mxu0 0
        %885 = vmatprep.subr.bf16.mxu0 0
        %886 = vmatpush1.bf16.xpose.msra.mxu0 0
        %887 = vmatprep.subr.bf16.mxu0 0
        %888 = vmatpush1.bf16.xpose.msra.mxu0 0
        %889 = vmatprep.subr.bf16.mxu0 0
        %890 = vmatpush1.bf16.xpose.msra.mxu0 0
        %891 = vmatprep.subr.bf16.mxu0 0
        %892 = vmatpush1.bf16.xpose.msra.mxu0 0
        %893 = vmatprep.subr.bf16.mxu0 0
        %894 = vmatpush1.bf16.xpose.msra.mxu0 0
        %895 = vmatprep.subr.bf16.mxu0 0
        %896 = vmatpush1.bf16.xpose.msra.mxu0 0
        %897 = vmatprep.subr.bf16.mxu0 0
        %898 = vmatpush1.bf16.xpose.msra.mxu0 0
        %899 = vmatprep.subr.bf16.mxu0 0
        %900 = vmatpush1.bf16.xpose.msra.mxu0 0
        %901 = vmatprep.subr.bf16.mxu0 0
        %902 = vmatpush1.bf16.xpose.msra.mxu0 0
        %903 = vmatprep.mubr.bf16.mxu0 0
        %904 = vmatmul.mubr.bf16.gmra.mrb[0].mxu0 %v866
        %v905 = vpop.f32.mrb[0].mxu0
        %v906 = vadd.f32 %v607, %v905
        %v907 = vpop.f32.mrb[0].mxu0
        %v908 = vpop.f32.mrb[0].mxu0
        %v909 = vadd.f32 %v607, %v908
        %v910 = vpop.f32.mrb[0].mxu0
        %911 = vdwg.mxu0
        %v912 = vsel %vm660, %v906, -inf
        %913 = vmax.xlane.f32.xlu0 %v912
        %v914 = vpop.xlane.xlu0 %913
        %v915 = vsel %vm660, %v909, -inf
        %916 = vmax.xlane.f32.xlu0 %v915
        %v917 = vpop.xlane.xlu0 %916
        %v918 = vsub.f32 %v906, %v914
        %v919 = vsub.f32 %v909, %v917
        %v920 = vmul.f32 %v918, 1.442695
        %v921 = vpow.pop %v920
        %v922 = vmul.f32 %v919, 1.442695
        %v923 = vpow.pop %v922
        %v924 = vsel %vm660, %v921, 0.0
        %925 = vadd.xlane.f32.xlu0 %v924
        %v926 = vpop.xlane.xlu0 %925
        %v927 = vsel %vm660, %v923, 0.0
        %928 = vadd.xlane.f32.xlu0 %v927
        %v929 = vpop.xlane.xlu0 %928
        %v930 = vrcp.pop %v926
        %v931 = vrcp.pop %v929
        %v932 = vmul.f32 %v921, %v930
        %v933 = vmul.f32 %v923, %v931
        %v934 = vpack.c.bf16 %v933, %v932
        %935 = vrot.lane.b32.xlu0 %v602, 48
        %v936 = vpop.permute.xlu0 %935
        %v939 = vsel %vm660, %v934, 0
        %941 = vmatprep.subr.bf16.mxu0 0
        %942 = vmatpush1.bf16.msra.mxu0 %v936
        %943 = vmatprep.subr.bf16.mxu0 0
        %944 = vmatpush1.bf16.msra.mxu0 0
        %945 = vmatprep.subr.bf16.mxu0 0
        %946 = vmatpush1.bf16.msra.mxu0 0
        %947 = vmatprep.subr.bf16.mxu0 0
        %948 = vmatpush1.bf16.msra.mxu0 0
        %949 = vmatprep.subr.bf16.mxu0 0
        %950 = vmatpush1.bf16.msra.mxu0 0
        %951 = vmatprep.subr.bf16.mxu0 0
        %952 = vmatpush1.bf16.msra.mxu0 0
        %953 = vmatprep.subr.bf16.mxu0 0
        %954 = vmatpush1.bf16.msra.mxu0 0
        %955 = vmatprep.subr.bf16.mxu0 0
        %956 = vmatpush1.bf16.msra.mxu0 0
        %957 = vmatprep.subr.bf16.mxu0 0
        %958 = vmatpush1.bf16.msra.mxu0 0
        %959 = vmatprep.subr.bf16.mxu0 0
        %960 = vmatpush1.bf16.msra.mxu0 0
        %961 = vmatprep.subr.bf16.mxu0 0
        %962 = vmatpush1.bf16.msra.mxu0 0
        %963 = vmatprep.subr.bf16.mxu0 0
        %964 = vmatpush1.bf16.msra.mxu0 0
        %965 = vmatprep.subr.bf16.mxu0 0
        %966 = vmatpush1.bf16.msra.mxu0 0
        %967 = vmatprep.subr.bf16.mxu0 0
        %968 = vmatpush1.bf16.msra.mxu0 0
        %969 = vmatprep.subr.bf16.mxu0 0
        %970 = vmatpush1.bf16.msra.mxu0 0
        %971 = vmatprep.subr.bf16.mxu0 0
        %972 = vmatpush1.bf16.msra.mxu0 0
        %973 = vmatprep.mubr.bf16.mxu0 0
        %974 = vmatmul.mubr.bf16.gmra.mrb[0].mxu0 %v939
        %v975 = vpop.f32.mrb[0].mxu0
        %v976 = vadd.f32 0.0, %v975
        %v977 = vpop.f32.mrb[0].mxu0
        %v978 = vpop.f32.mrb[0].mxu0
        %v979 = vadd.f32 0.0, %v978
        %v980 = vpop.f32.mrb[0].mxu0
        %981 = vdwg.mxu0
        %v982 = vpack.c.bf16 %v979, %v976
        %984 = vrot.lane.b32.xlu0 %v982, 16
        %v985 = vpop.permute.xlu0 %984
        %vm987 = vcmask 195712
        %988 = vst.msk [vmem:[#allocation2] sm:$0xff] %vm987, %v985
        %989 = vrot.lane.b32.xlu0 %v602, 104
        %v990 = vpop.permute.xlu0 %989
        %991 = vrot.lane.b32.xlu0 %v602, 72
        %v992 = vpop.permute.xlu0 %991
        %v994 = vsel %vm612, %v990, 0
        %v997 = vsel %vm612, %v992, 0
        %999 = vmatprep.subr.bf16.mxu0 0
        %1000 = vmatpush1.bf16.xpose.msra.mxu0 %v997
        %1001 = vmatprep.subr.bf16.mxu0 0
        %1002 = vmatpush1.bf16.xpose.msra.mxu0 0
        %1003 = vmatprep.subr.bf16.mxu0 0
        %1004 = vmatpush1.bf16.xpose.msra.mxu0 0
        %1005 = vmatprep.subr.bf16.mxu0 0
        %1006 = vmatpush1.bf16.xpose.msra.mxu0 0
        %1007 = vmatprep.subr.bf16.mxu0 0
        %1008 = vmatpush1.bf16.xpose.msra.mxu0 0
        %1009 = vmatprep.subr.bf16.mxu0 0
        %1010 = vmatpush1.bf16.xpose.msra.mxu0 0
        %1011 = vmatprep.subr.bf16.mxu0 0
        %1012 = vmatpush1.bf16.xpose.msra.mxu0 0
        %1013 = vmatprep.subr.bf16.mxu0 0
        %1014 = vmatpush1.bf16.xpose.msra.mxu0 0
        %1015 = vmatprep.subr.bf16.mxu0 0
        %1016 = vmatpush1.bf16.xpose.msra.mxu0 0
        %1017 = vmatprep.subr.bf16.mxu0 0
        %1018 = vmatpush1.bf16.xpose.msra.mxu0 0
        %1019 = vmatprep.subr.bf16.mxu0 0
        %1020 = vmatpush1.bf16.xpose.msra.mxu0 0
        %1021 = vmatprep.subr.bf16.mxu0 0
        %1022 = vmatpush1.bf16.xpose.msra.mxu0 0
        %1023 = vmatprep.subr.bf16.mxu0 0
        %1024 = vmatpush1.bf16.xpose.msra.mxu0 0
        %1025 = vmatprep.subr.bf16.mxu0 0
        %1026 = vmatpush1.bf16.xpose.msra.mxu0 0
        %1027 = vmatprep.subr.bf16.mxu0 0
        %1028 = vmatpush1.bf16.xpose.msra.mxu0 0
        %1029 = vmatprep.subr.bf16.mxu0 0
        %1030 = vmatpush1.bf16.xpose.msra.mxu0 0
        %1031 = vmatprep.mubr.bf16.mxu0 0
        %1032 = vmatmul.mubr.bf16.gmra.mrb[0].mxu0 %v994
        %v1033 = vpop.f32.mrb[0].mxu0
        %v1034 = vadd.f32 %v607, %v1033
        %v1035 = vpop.f32.mrb[0].mxu0
        %v1036 = vpop.f32.mrb[0].mxu0
        %v1037 = vadd.f32 %v607, %v1036
        %v1038 = vpop.f32.mrb[0].mxu0
        %1039 = vdwg.mxu0
        %v1040 = vsel %vm660, %v1034, -inf
        %1041 = vmax.xlane.f32.xlu0 %v1040
        %v1042 = vpop.xlane.xlu0 %1041
        %v1043 = vsel %vm660, %v1037, -inf
        %1044 = vmax.xlane.f32.xlu0 %v1043
        %v1045 = vpop.xlane.xlu0 %1044
        %v1046 = vsub.f32 %v1034, %v1042
        %v1047 = vsub.f32 %v1037, %v1045
        %v1048 = vmul.f32 %v1046, 1.442695
        %v1049 = vpow.pop %v1048
        %v1050 = vmul.f32 %v1047, 1.442695
        %v1051 = vpow.pop %v1050
        %v1052 = vsel %vm660, %v1049, 0.0
        %1053 = vadd.xlane.f32.xlu0 %v1052
        %v1054 = vpop.xlane.xlu0 %1053
        %v1055 = vsel %vm660, %v1051, 0.0
        %1056 = vadd.xlane.f32.xlu0 %v1055
        %v1057 = vpop.xlane.xlu0 %1056
        %v1058 = vrcp.pop %v1054
        %v1059 = vrcp.pop %v1057
        %v1060 = vmul.f32 %v1049, %v1058
        %v1061 = vmul.f32 %v1051, %v1059
        %v1062 = vpack.c.bf16 %v1061, %v1060
        %1063 = vrot.lane.b32.xlu0 %v602, 40
        %v1064 = vpop.permute.xlu0 %1063
        %v1067 = vsel %vm660, %v1062, 0
        %1069 = vmatprep.subr.bf16.mxu0 0
        %1070 = vmatpush1.bf16.msra.mxu0 %v1064
        %1071 = vmatprep.subr.bf16.mxu0 0
        %1072 = vmatpush1.bf16.msra.mxu0 0
        %1073 = vmatprep.subr.bf16.mxu0 0
        %1074 = vmatpush1.bf16.msra.mxu0 0
        %1075 = vmatprep.subr.bf16.mxu0 0
        %1076 = vmatpush1.bf16.msra.mxu0 0
        %1077 = vmatprep.subr.bf16.mxu0 0
        %1078 = vmatpush1.bf16.msra.mxu0 0
        %1079 = vmatprep.subr.bf16.mxu0 0
        %1080 = vmatpush1.bf16.msra.mxu0 0
        %1081 = vmatprep.subr.bf16.mxu0 0
        %1082 = vmatpush1.bf16.msra.mxu0 0
        %1083 = vmatprep.subr.bf16.mxu0 0
        %1084 = vmatpush1.bf16.msra.mxu0 0
        %1085 = vmatprep.subr.bf16.mxu0 0
        %1086 = vmatpush1.bf16.msra.mxu0 0
        %1087 = vmatprep.subr.bf16.mxu0 0
        %1088 = vmatpush1.bf16.msra.mxu0 0
        %1089 = vmatprep.subr.bf16.mxu0 0
        %1090 = vmatpush1.bf16.msra.mxu0 0
        %1091 = vmatprep.subr.bf16.mxu0 0
        %1092 = vmatpush1.bf16.msra.mxu0 0
        %1093 = vmatprep.subr.bf16.mxu0 0
        %1094 = vmatpush1.bf16.msra.mxu0 0
        %1095 = vmatprep.subr.bf16.mxu0 0
        %1096 = vmatpush1.bf16.msra.mxu0 0
        %1097 = vmatprep.subr.bf16.mxu0 0
        %1098 = vmatpush1.bf16.msra.mxu0 0
        %1099 = vmatprep.subr.bf16.mxu0 0
        %1100 = vmatpush1.bf16.msra.mxu0 0
        %1101 = vmatprep.mubr.bf16.mxu0 0
        %1102 = vmatmul.mubr.bf16.gmra.mrb[0].mxu0 %v1067
        %v1103 = vpop.f32.mrb[0].mxu0
        %v1104 = vadd.f32 0.0, %v1103
        %v1105 = vpop.f32.mrb[0].mxu0
        %v1106 = vpop.f32.mrb[0].mxu0
        %v1107 = vadd.f32 0.0, %v1106
        %v1108 = vpop.f32.mrb[0].mxu0
        %1109 = vdwg.mxu0
        %v1110 = vpack.c.bf16 %v1107, %v1104
        %1112 = vrot.lane.b32.xlu0 %v1110, 24
        %v1113 = vpop.permute.xlu0 %1112
        %vm1115 = vcmask 261312
        %1116 = vst.msk [vmem:[#allocation2] sm:$0xff] %vm1115, %v1113
        %v1117 = vld [vmem:[#allocation2] sm:$0xff]
        %v1118 = vld [vmem:[%s6] sm:$0xf]
        %v1119 = vld [vmem:[%s6 + $0x4] sm:$0xf]
        %v1120 = vld [vmem:[%s6 + $0x8] sm:$0xf]
        %v1121 = vld [vmem:[%s6 + $0xc] sm:$0xf]
        %v1126 = vunpack.c.l.b16 %v1118
        %v1127 = vunpack.c.l.b16 %v1119
        %v1128 = vunpack.c.l.b16 %v1120
        %v1129 = vunpack.c.l.b16 %v1121
        %v1130 = vpack.c.b16 %v1127, %v1126
        %v1131 = vpack.c.b16 %v1129, %v1128
        %v1135 = vsel %vm488, %v1117, 0
        %1137 = vmatprep.subr.bf16.mxu0 0
        %1138 = vmatpush1.bf16.msra.mxu0 %v1130
        %1139 = vmatprep.subr.bf16.mxu0 0
        %1140 = vmatpush1.bf16.msra.mxu0 %v1131
        %1141 = vmatprep.subr.bf16.mxu0 0
        %1142 = vmatpush1.bf16.msra.mxu0 0
        %1143 = vmatprep.subr.bf16.mxu0 0
        %1144 = vmatpush1.bf16.msra.mxu0 0
        %1145 = vmatprep.subr.bf16.mxu0 0
        %1146 = vmatpush1.bf16.msra.mxu0 0
        %1147 = vmatprep.subr.bf16.mxu0 0
        %1148 = vmatpush1.bf16.msra.mxu0 0
        %1149 = vmatprep.subr.bf16.mxu0 0
        %1150 = vmatpush1.bf16.msra.mxu0 0
        %1151 = vmatprep.subr.bf16.mxu0 0
        %1152 = vmatpush1.bf16.msra.mxu0 0
        %1153 = vmatprep.subr.bf16.mxu0 0
        %1154 = vmatpush1.bf16.msra.mxu0 0
        %1155 = vmatprep.subr.bf16.mxu0 0
        %1156 = vmatpush1.bf16.msra.mxu0 0
        %1157 = vmatprep.subr.bf16.mxu0 0
        %1158 = vmatpush1.bf16.msra.mxu0 0
        %1159 = vmatprep.subr.bf16.mxu0 0
        %1160 = vmatpush1.bf16.msra.mxu0 0
        %1161 = vmatprep.subr.bf16.mxu0 0
        %1162 = vmatpush1.bf16.msra.mxu0 0
        %1163 = vmatprep.subr.bf16.mxu0 0
        %1164 = vmatpush1.bf16.msra.mxu0 0
        %1165 = vmatprep.subr.bf16.mxu0 0
        %1166 = vmatpush1.bf16.msra.mxu0 0
        %1167 = vmatprep.subr.bf16.mxu0 0
        %1168 = vmatpush1.bf16.msra.mxu0 0
        %1169 = vmatprep.mubr.bf16.mxu0 0
        %1170 = vmatmul.mubr.bf16.gmra.mrb[0].mxu0 %v1135
        %v1171 = vpop.f32.mrb[0].mxu0
        %v1172 = vadd.f32 0.0, %v1171
        %v1173 = vpop.f32.mrb[0].mxu0
        %v1174 = vpop.f32.mrb[0].mxu0
        %v1175 = vadd.f32 0.0, %v1174
        %v1176 = vpop.f32.mrb[0].mxu0
        %1177 = vdwg.mxu0
        %v1178 = vadd.f32 %v481, %v1172
        %v1179 = vadd.f32 %v482, %v1175
        %v1180 = vld [vmem:[%s7] sm:$0x1]
        %v1182 = vlaneseq
        %v1183 = vshrl.u32 %v1182, 7
        %v1184 = vsub.s32 0, %v1183
        %v1185 = vrot.slane %v1180, %v1184
        %v1187 = vadd.f32 %v1178, %v1185
        %v1188 = vadd.f32 %v1179, %v1185
        %v1189 = vld [vmem:[%s8] sm:$0x1]
        %v1190 = vld [vmem:[%s9] sm:$0x1]
        %v1191 = vsel %vm488, %v1187, 0.0
        %1192 = vadd.xlane.f32.xlu0 %v1191
        %v1193 = vpop.xlane.xlu0 %1192
        %v1194 = vsel %vm488, %v1188, 0.0
        %1195 = vadd.xlane.f32.xlu0 %v1194
        %v1196 = vpop.xlane.xlu0 %1195
        %v1197 = vmul.f32 %v1193, %v495
        %v1198 = vmul.f32 %v1196, %v495
        %v1199 = vsub.f32 %v1187, %v1197
        %v1200 = vsub.f32 %v1188, %v1198
        %v1201 = vmul.f32 %v1199, %v1199
        %v1202 = vmul.f32 %v1200, %v1200
        %v1203 = vsel %vm488, %v1201, 0.0
        %1204 = vadd.xlane.f32.xlu0 %v1203
        %v1205 = vpop.xlane.xlu0 %1204
        %v1206 = vsel %vm488, %v1202, 0.0
        %1207 = vadd.xlane.f32.xlu0 %v1206
        %v1208 = vpop.xlane.xlu0 %1207
        %v1209 = vmul.f32 %v1205, %v495
        %v1210 = vmul.f32 %v1208, %v495
        %v1211 = vadd.f32 %v1209, 1e-05
        %v1212 = vadd.f32 %v1210, 1e-05
        %v1213 = vrsqrt.pop %v1211
        %v1214 = vrsqrt.pop %v1212
        %v1215 = vmul.f32 %v1199, %v1213
        %v1216 = vmul.f32 %v1200, %v1214
        %v1218 = vlaneseq
        %v1219 = vshrl.u32 %v1218, 7
        %v1220 = vsub.s32 0, %v1219
        %v1221 = vrot.slane %v1189, %v1220
        %v1223 = vmul.f32 %v1215, %v1221
        %v1224 = vmul.f32 %v1216, %v1221
        %v1226 = vlaneseq
        %v1227 = vshrl.u32 %v1226, 7
        %v1228 = vsub.s32 0, %v1227
        %v1229 = vrot.slane %v1190, %v1228
        %v1231 = vadd.f32 %v1223, %v1229
        %v1232 = vadd.f32 %v1224, %v1229
        %v1233 = vpack.c.bf16 %v1232, %v1231
        %v1234 = vld [vmem:[%s10] sm:$0xf]
        %v1235 = vld [vmem:[%s10 + $0x4] sm:$0xf]
        %v1236 = vld [vmem:[%s10 + $0x8] sm:$0xf]
        %v1237 = vld [vmem:[%s10 + $0xc] sm:$0xf]
        %v1238 = vld [vmem:[%s11] sm:$0x1]
        %v1240 = vlaneseq
        %v1241 = vshrl.u32 %v1240, 7
        %v1242 = vsub.s32 0, %v1241
        %v1243 = vrot.slane %v1238, %v1242
        %v1249 = vunpack.c.l.b16 %v1234
        %v1250 = vunpack.c.l.b16 %v1235
        %v1251 = vunpack.c.l.b16 %v1236
        %v1252 = vunpack.c.l.b16 %v1237
        %v1253 = vpack.c.b16 %v1250, %v1249
        %v1254 = vpack.c.b16 %v1252, %v1251
        %v1258 = vsel %vm488, %v1233, 0
        %1260 = vmatprep.subr.bf16.mxu0 0
        %1261 = vmatpush1.bf16.msra.mxu0 %v1253
        %1262 = vmatprep.subr.bf16.mxu0 0
        %1263 = vmatpush1.bf16.msra.mxu0 %v1254
        %1264 = vmatprep.subr.bf16.mxu0 0
        %1265 = vmatpush1.bf16.msra.mxu0 0
        %1266 = vmatprep.subr.bf16.mxu0 0
        %1267 = vmatpush1.bf16.msra.mxu0 0
        %1268 = vmatprep.subr.bf16.mxu0 0
        %1269 = vmatpush1.bf16.msra.mxu0 0
        %1270 = vmatprep.subr.bf16.mxu0 0
        %1271 = vmatpush1.bf16.msra.mxu0 0
        %1272 = vmatprep.subr.bf16.mxu0 0
        %1273 = vmatpush1.bf16.msra.mxu0 0
        %1274 = vmatprep.subr.bf16.mxu0 0
        %1275 = vmatpush1.bf16.msra.mxu0 0
        %1276 = vmatprep.subr.bf16.mxu0 0
        %1277 = vmatpush1.bf16.msra.mxu0 0
        %1278 = vmatprep.subr.bf16.mxu0 0
        %1279 = vmatpush1.bf16.msra.mxu0 0
        %1280 = vmatprep.subr.bf16.mxu0 0
        %1281 = vmatpush1.bf16.msra.mxu0 0
        %1282 = vmatprep.subr.bf16.mxu0 0
        %1283 = vmatpush1.bf16.msra.mxu0 0
        %1284 = vmatprep.subr.bf16.mxu0 0
        %1285 = vmatpush1.bf16.msra.mxu0 0
        %1286 = vmatprep.subr.bf16.mxu0 0
        %1287 = vmatpush1.bf16.msra.mxu0 0
        %1288 = vmatprep.subr.bf16.mxu0 0
        %1289 = vmatpush1.bf16.msra.mxu0 0
        %1290 = vmatprep.subr.bf16.mxu0 0
        %1291 = vmatpush1.bf16.msra.mxu0 0
        %1292 = vmatprep.mubr.bf16.mxu0 0
        %1293 = vmatmul.mubr.bf16.gmra.mrb[0].mxu0 %v1258
        %v1294 = vpop.f32.mrb[0].mxu0
        %v1295 = vadd.f32 %v1243, %v1294
        %v1296 = vpop.f32.mrb[0].mxu0
        %v1297 = vpop.f32.mrb[0].mxu0
        %v1298 = vadd.f32 %v1243, %v1297
        %v1299 = vpop.f32.mrb[0].mxu0
        %1300 = vdwg.mxu0
        %v1301 = vmul.f32 %v1295, 1.702
        %v1302 = vmul.f32 %v1298, 1.702
        %v1303 = vxor.u32 %v1301, 2147483648
        %v1304 = vxor.u32 %v1302, 2147483648
        %v1305 = vmul.f32 %v1303, 1.442695
        %v1306 = vpow.pop %v1305
        %v1307 = vmul.f32 %v1304, 1.442695
        %v1308 = vpow.pop %v1307
        %v1309 = vadd.f32 %v1306, 1.0
        %v1310 = vadd.f32 %v1308, 1.0
        %v1311 = vrcp.pop %v1309
        %v1312 = vmul.f32 1.0, %v1311
        %v1313 = vrcp.pop %v1310
        %v1314 = vmul.f32 1.0, %v1313
        %v1315 = vmul.f32 %v1295, %v1312
        %v1316 = vmul.f32 %v1298, %v1314
        %v1317 = vpack.c.bf16 %v1316, %v1315
        %v1318 = vld [vmem:[%s12] sm:$0xf]
        %v1319 = vld [vmem:[%s12 + $0x4] sm:$0xf]
        %v1320 = vld [vmem:[%s12 + $0x8] sm:$0xf]
        %v1321 = vld [vmem:[%s12 + $0xc] sm:$0xf]
        %v1322 = vld [vmem:[%s12 + $0x10] sm:$0xf]
        %v1323 = vld [vmem:[%s12 + $0x14] sm:$0xf]
        %v1324 = vld [vmem:[%s12 + $0x18] sm:$0xf]
        %v1325 = vld [vmem:[%s12 + $0x1c] sm:$0xf]
        %v1326 = vld [vmem:[%s12 + $0x20] sm:$0xf]
        %v1327 = vld [vmem:[%s12 + $0x24] sm:$0xf]
        %v1328 = vld [vmem:[%s12 + $0x28] sm:$0xf]
        %v1329 = vld [vmem:[%s12 + $0x2c] sm:$0xf]
        %v1330 = vld [vmem:[%s12 + $0x30] sm:$0xf]
        %v1331 = vld [vmem:[%s12 + $0x34] sm:$0xf]
        %v1332 = vld [vmem:[%s12 + $0x38] sm:$0xf]
        %v1333 = vld [vmem:[%s12 + $0x3c] sm:$0xf]
        %v1350 = vunpack.c.l.b16 %v1318
        %v1351 = vunpack.c.l.b16 %v1319
        %v1352 = vunpack.c.l.b16 %v1320
        %v1353 = vunpack.c.l.b16 %v1321
        %v1354 = vunpack.c.l.b16 %v1322
        %v1355 = vunpack.c.l.b16 %v1323
        %v1356 = vunpack.c.l.b16 %v1324
        %v1357 = vunpack.c.l.b16 %v1325
        %v1358 = vunpack.c.l.b16 %v1326
        %v1359 = vunpack.c.l.b16 %v1327
        %v1360 = vunpack.c.l.b16 %v1328
        %v1361 = vunpack.c.l.b16 %v1329
        %v1362 = vunpack.c.l.b16 %v1330
        %v1363 = vunpack.c.l.b16 %v1331
        %v1364 = vunpack.c.l.b16 %v1332
        %v1365 = vunpack.c.l.b16 %v1333
        %v1366 = vpack.c.b16 %v1351, %v1350
        %v1367 = vpack.c.b16 %v1353, %v1352
        %v1368 = vpack.c.b16 %v1355, %v1354
        %v1369 = vpack.c.b16 %v1357, %v1356
        %v1370 = vpack.c.b16 %v1359, %v1358
        %v1371 = vpack.c.b16 %v1361, %v1360
        %v1372 = vpack.c.b16 %v1363, %v1362
        %v1373 = vpack.c.b16 %v1365, %v1364
        %1382 = vmatprep.subr.bf16.mxu0 0
        %1383 = vmatpush1.bf16.msra.mxu0 %v1366
        %1384 = vmatprep.subr.bf16.mxu0 0
        %1385 = vmatpush1.bf16.msra.mxu0 %v1367
        %1386 = vmatprep.subr.bf16.mxu0 0
        %1387 = vmatpush1.bf16.msra.mxu0 %v1368
        %1388 = vmatprep.subr.bf16.mxu0 0
        %1389 = vmatpush1.bf16.msra.mxu0 %v1369
        %1390 = vmatprep.subr.bf16.mxu0 0
        %1391 = vmatpush1.bf16.msra.mxu0 %v1370
        %1392 = vmatprep.subr.bf16.mxu0 0
        %1393 = vmatpush1.bf16.msra.mxu0 %v1371
        %1394 = vmatprep.subr.bf16.mxu0 0
        %1395 = vmatpush1.bf16.msra.mxu0 %v1372
        %1396 = vmatprep.subr.bf16.mxu0 0
        %1397 = vmatpush1.bf16.msra.mxu0 %v1373
        %1398 = vmatprep.subr.bf16.mxu0 0
        %1399 = vmatpush1.bf16.msra.mxu0 0
        %1400 = vmatprep.subr.bf16.mxu0 0
        %1401 = vmatpush1.bf16.msra.mxu0 0
        %1402 = vmatprep.subr.bf16.mxu0 0
        %1403 = vmatpush1.bf16.msra.mxu0 0
        %1404 = vmatprep.subr.bf16.mxu0 0
        %1405 = vmatpush1.bf16.msra.mxu0 0
        %1406 = vmatprep.subr.bf16.mxu0 0
        %1407 = vmatpush1.bf16.msra.mxu0 0
        %1408 = vmatprep.subr.bf16.mxu0 0
        %1409 = vmatpush1.bf16.msra.mxu0 0
        %1410 = vmatprep.subr.bf16.mxu0 0
        %1411 = vmatpush1.bf16.msra.mxu0 0
        %1412 = vmatprep.subr.bf16.mxu0 0
        %1413 = vmatpush1.bf16.msra.mxu0 0
        %1414 = vmatprep.mubr.bf16.mxu0 0
        %1415 = vmatmul.mubr.bf16.gmra.mrb[0].mxu0 %v1317
        %v1416 = vpop.f32.mrb[0].mxu0
        %v1417 = vadd.f32 0.0, %v1416
        %v1418 = vpop.f32.mrb[0].mxu0
        %v1419 = vpop.f32.mrb[0].mxu0
        %v1420 = vadd.f32 0.0, %v1419
        %v1421 = vpop.f32.mrb[0].mxu0
        %1422 = vdwg.mxu0
        %v1423 = vadd.f32 %v1187, %v1417
        %v1424 = vadd.f32 %v1188, %v1420
        %v1425 = vld [vmem:[%s13] sm:$0x1]
        %v1427 = vlaneseq
        %v1428 = vshrl.u32 %v1427, 7
        %v1429 = vsub.s32 0, %v1428
        %v1430 = vrot.slane %v1425, %v1429
        %v1432 = vadd.f32 %v1423, %v1430
        %v1433 = vadd.f32 %v1424, %v1430
        %1434 = vst.msk [vmem:[%s471] sm:$0xff] %vm488, %v1432
        %1435 = vst.msk [vmem:[%s471 + $0x8] sm:$0xff] %vm488, %v1433
        %s1436 = sand.u32 %s340, 1
        %s1437 = scalar_lea.sflag [#allocation4], %s1436
        %s1438 = sand.u32 %s340, 1
        %s1439 = smul.addr %s1438, 16
        %s1440 = scalar_lea.vmem [#allocation3], %s1439
        // Predicated region
        $region77: #{tpu_custom_call.1} parent=75 // pred_check
          %p1441 = pneg %p350
        $region78: #{tpu_custom_call.1} parent=75 // pred_check_branch
          %1443 = sbr.rel (%p1441) target = $region80
        $region79: #{tpu_custom_call.1} parent=75 // pred_region
          %s1445 = ssub.s32 256, 256
          %1446 = vsyncadd %s1437, %s1445
          %s1447 = smul.addr %s28, 2
          %s1448 = smul.addr %s1447, 128
          %s1449 = scalar_lea.hbm %s14, %s1448
          %s1450 = sshll.u32 %s1440, 4
          %s1451 = int_to_ptr.vmem [resolvable:$true] %s1450
          %1456 = dma.vmem_to_hbm [thread:$0]  %s1451, 256, %s1449, %s1437, 128, 128, 8
        $region80: #{tpu_custom_call.1} parent=75 // pred_fallthru
          _
      $region76: #{tpu_custom_call.1} parent=5 // pred_fallthru
        _
      %p1457 = scmp.le.s32.totalorder 2, %s23
      // Predicated region
      $region81: #{tpu_custom_call.1} parent=5 // pred_check
        %p1458 = pneg %p1457
      $region82: #{tpu_custom_call.1} parent=5 // pred_check_branch
        %1460 = sbr.rel (%p1458) target = $region84
      $region83: #{tpu_custom_call.1} parent=5 // pred_region
        %s1461 = ssub.s32 %s23, 2
        // Predicated region
        $region85: #{tpu_custom_call.1} parent=83 // pred_check
          %p1462 = pneg %p356
        $region86: #{tpu_custom_call.1} parent=83 // pred_check_branch
          %1464 = sbr.rel (%p1462) target = $region88
        $region87: #{tpu_custom_call.1} parent=83 // pred_region
          %s1465 = sand.u32 %s341, 1
          %s1466 = scalar_lea.sflag [#allocation4], %s1465
          %s1467 = sand.u32 %s341, 1
          %s1468 = smul.addr %s1467, 16
          %s1469 = scalar_lea.vmem [#allocation3], %s1468
          %1470 = dma.done %s1466, 256
        $region88: #{tpu_custom_call.1} parent=83 // pred_fallthru
          _
      $region84: #{tpu_custom_call.1} parent=5 // pred_fallthru
        _
    $region6: #{tpu_custom_call.1} parent=1 // loop_footer
      %s27 = sadd.s32 1, %s23
    $region7: #{tpu_custom_call.1} parent=1 // loop_footer_branch
      %22 = sbr.rel target = $region3
    $region8: #{tpu_custom_call.1} parent=1 // loop_exit
      _
    %1471 = vsyncpa [#allocation4], 1
    %s1472 = scalar_lea.sflag [#allocation4], 1
    %1473 = vsyncpa %s1472, 1

</llo_original>
